<compile_context>
chip_gen: v5e
topology: v5e:2x2
jax: 0.10.0
libtpu: 0.0.40
codegen_flags: <defaults>
</compile_context>

<pallas_src>
import functools

import numpy as np
import jax
import jax.numpy as jnp
from jax import lax
from jax.experimental import pallas as pl
from jax.experimental.pallas import tpu as pltpu


def _roi_pool_kernel(batch_idx_ref, rois_ref, feat_ref, out_ref, col_ref, *,
                     pooled_h, pooled_w, spatial_scale):
    """One grid step == one (channel tile, ROI) pair.

    feat_ref: (1, H, W, Ct) channels-last feature slab of this ROI's batch
              image (selected via the scalar-prefetched batch index inside the
              BlockSpec index_map).  C is on the 128-lane axis.
    out_ref : (1, PH, PW, Ct) output block (last dim lane-dense).
    col_ref : (W, Ct) VMEM scratch holding the running row-max of one h-bin.

    NOTE: when C is not a multiple of the channel tile, the last tile's extra
    lanes hold padding; their outputs are clipped on writeback, but nothing in
    this kernel may reduce across the Ct axis or it would pick up garbage.
    """
    del batch_idx_ref                     # only consumed by the index_maps
    r = pl.program_id(1)                  # ROI index (inner grid axis)
    f32 = jnp.float32

    base = 5 * r                          # flat 1D ROI table in SMEM
    x1 = rois_ref[base + 1]
    y1 = rois_ref[base + 2]
    x2 = rois_ref[base + 3]
    y2 = rois_ref[base + 4]

    # C-style round() for non-negative scaled coordinates: floor(x + 0.5).
    # (Negative ROI coords would diverge from the CUDA reference.)
    roi_start_w = jnp.floor(x1 * spatial_scale + 0.5).astype(jnp.int32)
    roi_start_h = jnp.floor(y1 * spatial_scale + 0.5).astype(jnp.int32)
    roi_end_w = jnp.floor(x2 * spatial_scale + 0.5).astype(jnp.int32)
    roi_end_h = jnp.floor(y2 * spatial_scale + 0.5).astype(jnp.int32)

    roi_w = jnp.maximum(roi_end_w - roi_start_w + 1, 1)
    roi_h = jnp.maximum(roi_end_h - roi_start_h + 1, 1)
    bin_h = roi_h.astype(f32) / f32(pooled_h)
    bin_w = roi_w.astype(f32) / f32(pooled_w)

    _, H, W, Ct = feat_ref.shape
    fdt = feat_ref.dtype
    neg_inf = jnp.asarray(-jnp.inf, dtype=fdt)

    # (W, 1) sublane iota; per-bin W masks broadcast across the C lanes (VPU).
    w_iota = lax.broadcasted_iota(jnp.int32, (W, 1), 0)

    for ph in range(pooled_h):
        hstart = jnp.clip(
            jnp.floor(f32(ph) * bin_h).astype(jnp.int32) + roi_start_h, 0, H)
        hend = jnp.clip(
            jnp.ceil(f32(ph + 1) * bin_h).astype(jnp.int32) + roi_start_h, 0, H)
        h_valid = hend > hstart

        # Running max over only the rows inside this h-bin (dynamic loop over
        # [hstart, hend)) -- each feature row is touched ~once per ROI instead
        # of pooled_h times with a full-H mask.  Empty bin -> col stays -inf.
        col_ref[...] = jnp.full((W, Ct), -jnp.inf, dtype=fdt)

        def h_body(h, carry):
            col_ref[...] = jnp.maximum(col_ref[...], feat_ref[0, h])
            return carry

        lax.fori_loop(hstart, hend, h_body, 0)
        col = col_ref[...]                                   # (W, Ct)

        for pw in range(pooled_w):
            wstart = jnp.clip(
                jnp.floor(f32(pw) * bin_w).astype(jnp.int32) + roi_start_w, 0, W)
            wend = jnp.clip(
                jnp.ceil(f32(pw + 1) * bin_w).astype(jnp.int32) + roi_start_w, 0, W)
            m = (w_iota >= wstart) & (w_iota < wend)         # (W, 1) sublane mask
            vals = jnp.max(jnp.where(m, col, neg_inf),
                           axis=0, keepdims=True)            # (1, Ct)
            valid = h_valid & (wend > wstart)
            vals = jnp.where(valid, vals, jnp.zeros_like(vals))   # empty bin -> 0
            # Direct sub-slice store (no concat / lane-shift packing): one
            # lane-dense (1, Ct) row into this bin's slot of the output tile.
            out_ref[0, ph, pl.ds(pw, 1), :] = vals.astype(out_ref.dtype)


def _round_up(x, m):
    return (x + m - 1) // m * m


def _sublane_multiple(itemsize):
    # f32 -> 8, bf16 -> 16, int8/fp8 -> 32 (sub-32-bit dtypes pack on sublanes).
    return max(8, 32 // int(itemsize))


def _vmem_capacity_bytes():
    """Per-TensorCore VMEM; conservative (v7x-sized) fallback if unavailable."""
    try:
        return int(pltpu.get_tpu_info().vmem_capacity_bytes)
    except Exception:
        return 64 << 20


def _padded_slab_bytes(H, W, ct, itemsize, sublane):
    """VMEM footprint of one (1, H, W, ct) channels-last buffer including the
    sublane (W) and lane (ct -> 128) layout padding."""
    return H * _round_up(W, sublane) * _round_up(max(ct, 1), 128) * itemsize


def _pick_c_tile(C, H, W, itemsize, sublane, budget_bytes, num_buffers):
    """Largest channel tile (full C, else a multiple of 128 lanes) whose
    num_buffers-deep pipelined, layout-padded slab fits the VMEM budget."""
    def cost(ct):
        return num_buffers * _padded_slab_bytes(H, W, ct, itemsize, sublane)

    if cost(C) <= budget_bytes:
        return int(C)
    ct = 128
    while ct + 128 < C and cost(ct + 128) <= budget_bytes:
        ct += 128
    # TODO(synk): if even ct=128 exceeds the budget (very large H*W), H/W
    # tiling would be needed as well; not implemented here.
    return int(min(ct, C))


def roi_pool(features, rois, pooled_height, pooled_width, spatial_scale):
    N, C, H, W = features.shape
    R = rois.shape[0]
    ph, pw = int(pooled_height), int(pooled_width)

    rois = rois.astype(jnp.float32)
    # Clamp batch indices so a malformed ROI row cannot drive the feature DMA
    # out of range.
    batch_idx = jnp.clip(rois[:, 0].astype(jnp.int32), 0, N - 1)

    # Sort ROIs by batch index: consecutive grid steps then hit the same
    # feature block index, so Pallas skips the redundant HBM->VMEM slab DMA.
    order = jnp.argsort(batch_idx)
    inv_order = jnp.argsort(order)
    batch_sorted = jnp.take(batch_idx, order, axis=0)
    rois_sorted_flat = jnp.take(rois, order, axis=0).reshape(-1)  # 1D SMEM table

    # Channels-last internal layout: one HBM transpose puts C on the 128-lane
    # axis; the in-kernel W reduce becomes sublane-side and the slab shrinks
    # (no W->128 padding), which is what keeps v7x inside its 64 MiB VMEM.
    feats_nhwc = jnp.transpose(features, (0, 2, 3, 1))            # (N, H, W, C)

    itemsize = jnp.dtype(features.dtype).itemsize
    sublane = _sublane_multiple(itemsize)

    # Padded-footprint VMEM budgeting against the queried per-core capacity:
    # <= ~56 MiB on v7x, up to ~120 MiB on v5e/v6e (so num_ct == 1 for typical
    # C=256..1024, H,W~50 backbones).
    vmem_usable = _vmem_capacity_bytes() - (8 << 20)
    misc_reserve = 4 << 20                # output blocks, col scratch, slack
    feat_buffers = 3                      # deeper pipeline hides boundary DMAs
    ct = _pick_c_tile(C, H, W, itemsize, sublane,
                      max(vmem_usable - misc_reserve, 8 << 20), feat_buffers)
    num_ct = pl.cdiv(C, ct)

    feat_bytes = feat_buffers * _padded_slab_bytes(H, W, ct, itemsize, sublane)
    out_bytes = 2 * ph * _round_up(pw, sublane) * _round_up(ct, 128) * itemsize
    vmem_limit = int(min(vmem_usable,
                         max(32 << 20, feat_bytes + out_bytes + misc_reserve)))

    kernel = functools.partial(
        _roi_pool_kernel,
        pooled_h=ph, pooled_w=pw, spatial_scale=float(spatial_scale))

    def _build(n_feat_buffers):
        feat_index_map = lambda c, r, bidx: (bidx[r], 0, 0, c)
        if n_feat_buffers > 2:
            feat_spec = pl.BlockSpec((1, H, W, ct), feat_index_map,
                                     pipeline_mode=pl.Buffered(n_feat_buffers))
        else:
            feat_spec = pl.BlockSpec((1, H, W, ct), feat_index_map)
        grid_spec = pltpu.PrefetchScalarGridSpec(
            num_scalar_prefetch=1,
            grid=(num_ct, R),             # ROIs innermost -> feature-slab reuse
            in_specs=[
                # Flat ROI table in SMEM (avoids (R,5) -> (8k,128) padding).
                pl.BlockSpec(memory_space=pltpu.MemorySpace.SMEM),
                feat_spec,
            ],
            out_specs=pl.BlockSpec((1, ph, pw, ct),
                                   lambda c, r, bidx: (r, 0, 0, c)),
            scratch_shapes=[pltpu.VMEM((W, ct), features.dtype)],
        )
        return pl.pallas_call(
            kernel,
            out_shape=jax.ShapeDtypeStruct((R, ph, pw, C), features.dtype),
            grid_spec=grid_spec,
            compiler_params=pltpu.CompilerParams(
                # Both axes are independent; "parallel" lets v7x's second
                # TensorCore take half the (sorted, contiguous) ROI range even
                # when num_ct == 1, while slab-DMA reuse survives within each
                # chunk.  No-op on single-core v5e/v6e.
                dimension_semantics=("parallel", "parallel"),
                vmem_limit_bytes=vmem_limit),
        )

    try:
        out_sorted = _build(feat_buffers)(batch_sorted, rois_sorted_flat,
                                          feats_nhwc)
    except Exception:
        # Fallback for JAX builds without BlockSpec.pipeline_mode/pl.Buffered:
        # default double-buffered pipeline (kernel semantics unchanged).
        out_sorted = _build(2)(batch_sorted, rois_sorted_flat, feats_nhwc)

    out = jnp.take(out_sorted, inv_order, axis=0)        # undo the ROI sort
    return jnp.transpose(out, (0, 3, 1, 2))              # (R, C, PH, PW)


class RoIPool:
    """Mirror of the PyTorch module (forward only — no learned parameters)."""

    def __init__(self, pooled_height, pooled_width, spatial_scale):
        self.pooled_width = int(pooled_width)
        self.pooled_height = int(pooled_height)
        self.spatial_scale = float(spatial_scale)

    def __call__(self, features, rois):
        return roi_pool(features, rois, self.pooled_height,
                        self.pooled_width, self.spatial_scale)


def roi_pool_reference(features, rois, pooled_h, pooled_w, spatial_scale):
    """Pure numpy reference mirroring the original C/CUDA RoIPool forward,
    using float32 arithmetic to match the kernel bit-for-bit on bin edges."""
    features = np.asarray(features, dtype=np.float32)
    rois = np.asarray(rois, dtype=np.float32)
    _, C, H, W = features.shape
    R = rois.shape[0]
    out = np.zeros((R, C, pooled_h, pooled_w), dtype=np.float32)
    scale = np.float32(spatial_scale)
    for r in range(R):
        b = int(rois[r, 0])
        rsw = int(np.floor(rois[r, 1] * scale + np.float32(0.5)))
        rsh = int(np.floor(rois[r, 2] * scale + np.float32(0.5)))
        rew = int(np.floor(rois[r, 3] * scale + np.float32(0.5)))
        reh = int(np.floor(rois[r, 4] * scale + np.float32(0.5)))
        rw = max(rew - rsw + 1, 1)
        rh = max(reh - rsh + 1, 1)
        bin_h = np.float32(rh) / np.float32(pooled_h)
        bin_w = np.float32(rw) / np.float32(pooled_w)
        for ph in range(pooled_h):
            hs = min(max(int(np.floor(np.float32(ph) * bin_h)) + rsh, 0), H)
            he = min(max(int(np.ceil(np.float32(ph + 1) * bin_h)) + rsh, 0), H)
            for pw in range(pooled_w):
                ws = min(max(int(np.floor(np.float32(pw) * bin_w)) + rsw, 0), W)
                we = min(max(int(np.ceil(np.float32(pw + 1) * bin_w)) + rsw, 0), W)
                if he <= hs or we <= ws:
                    out[r, :, ph, pw] = 0.0
                else:
                    out[r, :, ph, pw] = features[b, :, hs:he, ws:we].max(axis=(1, 2))
    return out


if __name__ == "__main__":
    # Small deterministic example: N=2, C=4, H=W=16 feature map, 3 ROIs,
    # pooled 7x7, spatial_scale=0.5 (input-image coords are 2x feature coords).
    key = jax.random.PRNGKey(0)
    features = jax.random.normal(key, (2, 4, 16, 16), dtype=jnp.float32)
    rois = jnp.array(
        [[0.0, 2.0, 2.0, 20.0, 24.0],
         [1.0, 0.0, 0.0, 30.0, 30.0],
         [0.0, 6.0, 4.0, 14.0, 26.0]],
        dtype=jnp.float32,
    )

    pool = RoIPool(pooled_height=7, pooled_width=7, spatial_scale=0.5)
    out = pool(features, rois)
    out = jax.block_until_ready(out)

    ref = roi_pool_reference(features, rois, 7, 7, 0.5)
    np.testing.assert_allclose(np.asarray(out), ref, rtol=1e-6, atol=1e-6)
    print("KERNEL_OK")
</pallas_src>

<mosaic_0001>
module attributes {stable_mosaic.version = 11 : i64} {
  func.func @_roi_pool_kernel(%arg0: i32, %arg1: i32, %arg2: memref<3xi32, #tpu.memory_space<smem>>, %arg3: memref<15xf32, #tpu.memory_space<smem>>, %arg4: memref<1x16x16x4xf32, #tpu.memory_space<vmem>>, %arg5: memref<1x7x7x4xf32, #tpu.memory_space<vmem>>, %arg6: memref<16x4xf32, #tpu.memory_space<vmem>>) attributes {dimension_semantics = [#tpu.dimension_semantics<parallel>, #tpu.dimension_semantics<parallel>], iteration_bounds = array<i64: 1, 3>, scalar_prefetch = 1 : i64, scratch_operands = 1 : i64, tpu.core_type = #tpu.core_type<tc>, window_params = [{transform_indices = @transform_0, window_bounds = array<i64: 15>}, {transform_indices = @transform_1, window_bounds = array<i64: 1, 16, 16, 4>}, {transform_indices = @transform_2, window_bounds = array<i64: 1, 7, 7, 4>}]} {
    %c5_i32 = arith.constant 5 : i32
    %0 = arith.muli %c5_i32, %arg1 : i32
    %c1_i32 = arith.constant 1 : i32
    %1 = arith.addi %0, %c1_i32 : i32
    %2 = arith.index_cast %1 : i32 to index
    %3 = memref.load %arg3[%2] : memref<15xf32, #tpu.memory_space<smem>>
    %c2_i32 = arith.constant 2 : i32
    %4 = arith.addi %0, %c2_i32 : i32
    %5 = arith.index_cast %4 : i32 to index
    %6 = memref.load %arg3[%5] : memref<15xf32, #tpu.memory_space<smem>>
    %c3_i32 = arith.constant 3 : i32
    %7 = arith.addi %0, %c3_i32 : i32
    %8 = arith.index_cast %7 : i32 to index
    %9 = memref.load %arg3[%8] : memref<15xf32, #tpu.memory_space<smem>>
    %c4_i32 = arith.constant 4 : i32
    %10 = arith.addi %0, %c4_i32 : i32
    %11 = arith.index_cast %10 : i32 to index
    %12 = memref.load %arg3[%11] : memref<15xf32, #tpu.memory_space<smem>>
    %cst = arith.constant 5.000000e-01 : f32
    %13 = arith.mulf %3, %cst : f32
    %cst_0 = arith.constant 5.000000e-01 : f32
    %14 = arith.addf %13, %cst_0 : f32
    %15 = math.floor %14 : f32
    %16 = arith.fptosi %15 : f32 to i32
    %cst_1 = arith.constant 5.000000e-01 : f32
    %17 = arith.mulf %6, %cst_1 : f32
    %cst_2 = arith.constant 5.000000e-01 : f32
    %18 = arith.addf %17, %cst_2 : f32
    %19 = math.floor %18 : f32
    %20 = arith.fptosi %19 : f32 to i32
    %cst_3 = arith.constant 5.000000e-01 : f32
    %21 = arith.mulf %9, %cst_3 : f32
    %cst_4 = arith.constant 5.000000e-01 : f32
    %22 = arith.addf %21, %cst_4 : f32
    %23 = math.floor %22 : f32
    %24 = arith.fptosi %23 : f32 to i32
    %cst_5 = arith.constant 5.000000e-01 : f32
    %25 = arith.mulf %12, %cst_5 : f32
    %cst_6 = arith.constant 5.000000e-01 : f32
    %26 = arith.addf %25, %cst_6 : f32
    %27 = math.floor %26 : f32
    %28 = arith.fptosi %27 : f32 to i32
    %29 = arith.subi %24, %16 : i32
    %c1_i32_7 = arith.constant 1 : i32
    %30 = arith.addi %29, %c1_i32_7 : i32
    %c1_i32_8 = arith.constant 1 : i32
    %31 = arith.maxsi %30, %c1_i32_8 : i32
    %32 = arith.subi %28, %20 : i32
    %c1_i32_9 = arith.constant 1 : i32
    %33 = arith.addi %32, %c1_i32_9 : i32
    %c1_i32_10 = arith.constant 1 : i32
    %34 = arith.maxsi %33, %c1_i32_10 : i32
    %35 = arith.sitofp %34 : i32 to f32
    %cst_11 = arith.constant 7.000000e+00 : f32
    %36 = arith.divf %35, %cst_11 : f32
    %37 = arith.sitofp %31 : i32 to f32
    %cst_12 = arith.constant 7.000000e+00 : f32
    %38 = arith.divf %37, %cst_12 : f32
    %39 = tpu.iota {dimensions = array<i32: 0>} : vector<16x1xi32>
    %cst_13 = arith.constant 0.000000e+00 : f32
    %40 = arith.mulf %cst_13, %36 : f32
    %41 = math.floor %40 : f32
    %42 = arith.fptosi %41 : f32 to i32
    %43 = arith.addi %42, %20 : i32
    %c0_i32 = arith.constant 0 : i32
    %c16_i32 = arith.constant 16 : i32
    %44 = arith.maxsi %c0_i32, %43 : i32
    %45 = arith.minsi %c16_i32, %44 : i32
    %cst_14 = arith.constant 1.000000e+00 : f32
    %46 = arith.mulf %cst_14, %36 : f32
    %47 = math.ceil %46 : f32
    %48 = arith.fptosi %47 : f32 to i32
    %49 = arith.addi %48, %20 : i32
    %c0_i32_15 = arith.constant 0 : i32
    %c16_i32_16 = arith.constant 16 : i32
    %50 = arith.maxsi %c0_i32_15, %49 : i32
    %51 = arith.minsi %c16_i32_16, %50 : i32
    %52 = arith.cmpi sgt, %51, %45 : i32
    %cst_17 = arith.constant 0xFF800000 : f32
    %53 = vector.broadcast %cst_17 : f32 to vector<16x4xf32>
    %c0 = arith.constant 0 : index
    %c0_18 = arith.constant 0 : index
    %54 = vector.load %arg6[%c0, %c0_18] : memref<16x4xf32, #tpu.memory_space<vmem>>, vector<16x4xf32>
    tpu.vector_store %arg6[%c0, %c0_18], %53 {strides = array<i32>} : memref<16x4xf32, #tpu.memory_space<vmem>>, vector<16x4xf32>,
    %c0_i32_19 = arith.constant 0 : i32
    %55 = arith.subi %51, %45 : i32
    %56 = arith.addi %45, %55 : i32
    %c1_i32_20 = arith.constant 1 : i32
    scf.for %arg7 = %45 to %56 step %c1_i32_20  : i32 {
      %c0_732 = arith.constant 0 : index
      %c0_733 = arith.constant 0 : index
      %1636 = vector.load %arg6[%c0_732, %c0_733] : memref<16x4xf32, #tpu.memory_space<vmem>>, vector<16x4xf32>
      %c0_734 = arith.constant 0 : index
      %1637 = arith.index_cast %arg7 : i32 to index
      %c0_735 = arith.constant 0 : index
      %c0_736 = arith.constant 0 : index
      %1638 = vector.load %arg4[%c0_734, %1637, %c0_735, %c0_736] : memref<1x16x16x4xf32, #tpu.memory_space<vmem>>, vector<1x1x16x4xf32>
      %1639 = vector.shape_cast %1638 : vector<1x1x16x4xf32> to vector<16x4xf32>
      %1640 = arith.maximumf %1636, %1639 : vector<16x4xf32>
      %c0_737 = arith.constant 0 : index
      %c0_738 = arith.constant 0 : index
      %1641 = vector.load %arg6[%c0_737, %c0_738] : memref<16x4xf32, #tpu.memory_space<vmem>>, vector<16x4xf32>
      tpu.vector_store %arg6[%c0_737, %c0_738], %1640 {strides = array<i32>} : memref<16x4xf32, #tpu.memory_space<vmem>>, vector<16x4xf32>,
    }
    %c0_21 = arith.constant 0 : index
    %c0_22 = arith.constant 0 : index
    %57 = vector.load %arg6[%c0_21, %c0_22] : memref<16x4xf32, #tpu.memory_space<vmem>>, vector<16x4xf32>
    %cst_23 = arith.constant 0.000000e+00 : f32
    %58 = arith.mulf %cst_23, %38 : f32
    %59 = math.floor %58 : f32
    %60 = arith.fptosi %59 : f32 to i32
    %61 = arith.addi %60, %16 : i32
    %c0_i32_24 = arith.constant 0 : i32
    %c16_i32_25 = arith.constant 16 : i32
    %62 = arith.maxsi %c0_i32_24, %61 : i32
    %63 = arith.minsi %c16_i32_25, %62 : i32
    %cst_26 = arith.constant 1.000000e+00 : f32
    %64 = arith.mulf %cst_26, %38 : f32
    %65 = math.ceil %64 : f32
    %66 = arith.fptosi %65 : f32 to i32
    %67 = arith.addi %66, %16 : i32
    %c0_i32_27 = arith.constant 0 : i32
    %c16_i32_28 = arith.constant 16 : i32
    %68 = arith.maxsi %c0_i32_27, %67 : i32
    %69 = arith.minsi %c16_i32_28, %68 : i32
    %70 = vector.broadcast %63 : i32 to vector<16x1xi32>
    %71 = arith.cmpi sge, %39, %70 : vector<16x1xi32>
    %72 = vector.broadcast %69 : i32 to vector<16x1xi32>
    %73 = arith.cmpi slt, %39, %72 : vector<16x1xi32>
    %74 = arith.andi %71, %73 : vector<16x1xi1>
    %cst_29 = arith.constant 0xFF800000 : f32
    %75 = vector.shape_cast %74 : vector<16x1xi1> to vector<16x1xi1>
    %76 = vector.broadcast %75 : vector<16x1xi1> to vector<16x4xi1>
    %77 = vector.broadcast %cst_29 : f32 to vector<16x4xf32>
    %78 = arith.select %76, %57, %77 : vector<16x4xi1>, vector<16x4xf32>
    %cst_30 = arith.constant dense<0xFF800000> : vector<4xf32>
    %79 = vector.multi_reduction <maximumf>, %78, %cst_30 [0] : vector<16x4xf32> to vector<4xf32>
    %80 = vector.shape_cast %79 : vector<4xf32> to vector<1x4xf32>
    %81 = arith.cmpi sgt, %69, %63 : i32
    %82 = arith.andi %52, %81 : i1
    %cst_31 = arith.constant 0.000000e+00 : f32
    %83 = vector.broadcast %cst_31 : f32 to vector<1x4xf32>
    %84 = arith.select %82, %80, %83 : vector<1x4xf32>
    %c0_32 = arith.constant 0 : index
    %c0_33 = arith.constant 0 : index
    %c0_34 = arith.constant 0 : index
    %c0_35 = arith.constant 0 : index
    %85 = vector.load %arg5[%c0_32, %c0_33, %c0_34, %c0_35] : memref<1x7x7x4xf32, #tpu.memory_space<vmem>>, vector<1x1x1x4xf32>
    %86 = vector.shape_cast %85 : vector<1x1x1x4xf32> to vector<1x4xf32>
    %87 = vector.shape_cast %84 : vector<1x4xf32> to vector<1x1x1x4xf32>
    tpu.vector_store %arg5[%c0_32, %c0_33, %c0_34, %c0_35], %87 {strides = array<i32>} : memref<1x7x7x4xf32, #tpu.memory_space<vmem>>, vector<1x1x1x4xf32>,
    %cst_36 = arith.constant 1.000000e+00 : f32
    %88 = arith.mulf %cst_36, %38 : f32
    %89 = math.floor %88 : f32
    %90 = arith.fptosi %89 : f32 to i32
    %91 = arith.addi %90, %16 : i32
    %c0_i32_37 = arith.constant 0 : i32
    %c16_i32_38 = arith.constant 16 : i32
    %92 = arith.maxsi %c0_i32_37, %91 : i32
    %93 = arith.minsi %c16_i32_38, %92 : i32
    %cst_39 = arith.constant 2.000000e+00 : f32
    %94 = arith.mulf %cst_39, %38 : f32
    %95 = math.ceil %94 : f32
    %96 = arith.fptosi %95 : f32 to i32
    %97 = arith.addi %96, %16 : i32
    %c0_i32_40 = arith.constant 0 : i32
    %c16_i32_41 = arith.constant 16 : i32
    %98 = arith.maxsi %c0_i32_40, %97 : i32
    %99 = arith.minsi %c16_i32_41, %98 : i32
    %100 = vector.broadcast %93 : i32 to vector<16x1xi32>
    %101 = arith.cmpi sge, %39, %100 : vector<16x1xi32>
    %102 = vector.broadcast %99 : i32 to vector<16x1xi32>
    %103 = arith.cmpi slt, %39, %102 : vector<16x1xi32>
    %104 = arith.andi %101, %103 : vector<16x1xi1>
    %cst_42 = arith.constant 0xFF800000 : f32
    %105 = vector.shape_cast %104 : vector<16x1xi1> to vector<16x1xi1>
    %106 = vector.broadcast %105 : vector<16x1xi1> to vector<16x4xi1>
    %107 = vector.broadcast %cst_42 : f32 to vector<16x4xf32>
    %108 = arith.select %106, %57, %107 : vector<16x4xi1>, vector<16x4xf32>
    %cst_43 = arith.constant dense<0xFF800000> : vector<4xf32>
    %109 = vector.multi_reduction <maximumf>, %108, %cst_43 [0] : vector<16x4xf32> to vector<4xf32>
    %110 = vector.shape_cast %109 : vector<4xf32> to vector<1x4xf32>
    %111 = arith.cmpi sgt, %99, %93 : i32
    %112 = arith.andi %52, %111 : i1
    %cst_44 = arith.constant 0.000000e+00 : f32
    %113 = vector.broadcast %cst_44 : f32 to vector<1x4xf32>
    %114 = arith.select %112, %110, %113 : vector<1x4xf32>
    %c0_45 = arith.constant 0 : index
    %c0_46 = arith.constant 0 : index
    %c1 = arith.constant 1 : index
    %c0_47 = arith.constant 0 : index
    %115 = vector.load %arg5[%c0_45, %c0_46, %c1, %c0_47] : memref<1x7x7x4xf32, #tpu.memory_space<vmem>>, vector<1x1x1x4xf32>
    %116 = vector.shape_cast %115 : vector<1x1x1x4xf32> to vector<1x4xf32>
    %117 = vector.shape_cast %114 : vector<1x4xf32> to vector<1x1x1x4xf32>
    tpu.vector_store %arg5[%c0_45, %c0_46, %c1, %c0_47], %117 {strides = array<i32>} : memref<1x7x7x4xf32, #tpu.memory_space<vmem>>, vector<1x1x1x4xf32>,
    %cst_48 = arith.constant 2.000000e+00 : f32
    %118 = arith.mulf %cst_48, %38 : f32
    %119 = math.floor %118 : f32
    %120 = arith.fptosi %119 : f32 to i32
    %121 = arith.addi %120, %16 : i32
    %c0_i32_49 = arith.constant 0 : i32
    %c16_i32_50 = arith.constant 16 : i32
    %122 = arith.maxsi %c0_i32_49, %121 : i32
    %123 = arith.minsi %c16_i32_50, %122 : i32
    %cst_51 = arith.constant 3.000000e+00 : f32
    %124 = arith.mulf %cst_51, %38 : f32
    %125 = math.ceil %124 : f32
    %126 = arith.fptosi %125 : f32 to i32
    %127 = arith.addi %126, %16 : i32
    %c0_i32_52 = arith.constant 0 : i32
    %c16_i32_53 = arith.constant 16 : i32
    %128 = arith.maxsi %c0_i32_52, %127 : i32
    %129 = arith.minsi %c16_i32_53, %128 : i32
    %130 = vector.broadcast %123 : i32 to vector<16x1xi32>
    %131 = arith.cmpi sge, %39, %130 : vector<16x1xi32>
    %132 = vector.broadcast %129 : i32 to vector<16x1xi32>
    %133 = arith.cmpi slt, %39, %132 : vector<16x1xi32>
    %134 = arith.andi %131, %133 : vector<16x1xi1>
    %cst_54 = arith.constant 0xFF800000 : f32
    %135 = vector.shape_cast %134 : vector<16x1xi1> to vector<16x1xi1>
    %136 = vector.broadcast %135 : vector<16x1xi1> to vector<16x4xi1>
    %137 = vector.broadcast %cst_54 : f32 to vector<16x4xf32>
    %138 = arith.select %136, %57, %137 : vector<16x4xi1>, vector<16x4xf32>
    %cst_55 = arith.constant dense<0xFF800000> : vector<4xf32>
    %139 = vector.multi_reduction <maximumf>, %138, %cst_55 [0] : vector<16x4xf32> to vector<4xf32>
    %140 = vector.shape_cast %139 : vector<4xf32> to vector<1x4xf32>
    %141 = arith.cmpi sgt, %129, %123 : i32
    %142 = arith.andi %52, %141 : i1
    %cst_56 = arith.constant 0.000000e+00 : f32
    %143 = vector.broadcast %cst_56 : f32 to vector<1x4xf32>
    %144 = arith.select %142, %140, %143 : vector<1x4xf32>
    %c0_57 = arith.constant 0 : index
    %c0_58 = arith.constant 0 : index
    %c2 = arith.constant 2 : index
    %c0_59 = arith.constant 0 : index
    %145 = vector.load %arg5[%c0_57, %c0_58, %c2, %c0_59] : memref<1x7x7x4xf32, #tpu.memory_space<vmem>>, vector<1x1x1x4xf32>
    %146 = vector.shape_cast %145 : vector<1x1x1x4xf32> to vector<1x4xf32>
    %147 = vector.shape_cast %144 : vector<1x4xf32> to vector<1x1x1x4xf32>
    tpu.vector_store %arg5[%c0_57, %c0_58, %c2, %c0_59], %147 {strides = array<i32>} : memref<1x7x7x4xf32, #tpu.memory_space<vmem>>, vector<1x1x1x4xf32>,
    %cst_60 = arith.constant 3.000000e+00 : f32
    %148 = arith.mulf %cst_60, %38 : f32
    %149 = math.floor %148 : f32
    %150 = arith.fptosi %149 : f32 to i32
    %151 = arith.addi %150, %16 : i32
    %c0_i32_61 = arith.constant 0 : i32
    %c16_i32_62 = arith.constant 16 : i32
    %152 = arith.maxsi %c0_i32_61, %151 : i32
    %153 = arith.minsi %c16_i32_62, %152 : i32
    %cst_63 = arith.constant 4.000000e+00 : f32
    %154 = arith.mulf %cst_63, %38 : f32
    %155 = math.ceil %154 : f32
    %156 = arith.fptosi %155 : f32 to i32
    %157 = arith.addi %156, %16 : i32
    %c0_i32_64 = arith.constant 0 : i32
    %c16_i32_65 = arith.constant 16 : i32
    %158 = arith.maxsi %c0_i32_64, %157 : i32
    %159 = arith.minsi %c16_i32_65, %158 : i32
    %160 = vector.broadcast %153 : i32 to vector<16x1xi32>
    %161 = arith.cmpi sge, %39, %160 : vector<16x1xi32>
    %162 = vector.broadcast %159 : i32 to vector<16x1xi32>
    %163 = arith.cmpi slt, %39, %162 : vector<16x1xi32>
    %164 = arith.andi %161, %163 : vector<16x1xi1>
    %cst_66 = arith.constant 0xFF800000 : f32
    %165 = vector.shape_cast %164 : vector<16x1xi1> to vector<16x1xi1>
    %166 = vector.broadcast %165 : vector<16x1xi1> to vector<16x4xi1>
    %167 = vector.broadcast %cst_66 : f32 to vector<16x4xf32>
    %168 = arith.select %166, %57, %167 : vector<16x4xi1>, vector<16x4xf32>
    %cst_67 = arith.constant dense<0xFF800000> : vector<4xf32>
    %169 = vector.multi_reduction <maximumf>, %168, %cst_67 [0] : vector<16x4xf32> to vector<4xf32>
    %170 = vector.shape_cast %169 : vector<4xf32> to vector<1x4xf32>
    %171 = arith.cmpi sgt, %159, %153 : i32
    %172 = arith.andi %52, %171 : i1
    %cst_68 = arith.constant 0.000000e+00 : f32
    %173 = vector.broadcast %cst_68 : f32 to vector<1x4xf32>
    %174 = arith.select %172, %170, %173 : vector<1x4xf32>
    %c0_69 = arith.constant 0 : index
    %c0_70 = arith.constant 0 : index
    %c3 = arith.constant 3 : index
    %c0_71 = arith.constant 0 : index
    %175 = vector.load %arg5[%c0_69, %c0_70, %c3, %c0_71] : memref<1x7x7x4xf32, #tpu.memory_space<vmem>>, vector<1x1x1x4xf32>
    %176 = vector.shape_cast %175 : vector<1x1x1x4xf32> to vector<1x4xf32>
    %177 = vector.shape_cast %174 : vector<1x4xf32> to vector<1x1x1x4xf32>
    tpu.vector_store %arg5[%c0_69, %c0_70, %c3, %c0_71], %177 {strides = array<i32>} : memref<1x7x7x4xf32, #tpu.memory_space<vmem>>, vector<1x1x1x4xf32>,
    %cst_72 = arith.constant 4.000000e+00 : f32
    %178 = arith.mulf %cst_72, %38 : f32
    %179 = math.floor %178 : f32
    %180 = arith.fptosi %179 : f32 to i32
    %181 = arith.addi %180, %16 : i32
    %c0_i32_73 = arith.constant 0 : i32
    %c16_i32_74 = arith.constant 16 : i32
    %182 = arith.maxsi %c0_i32_73, %181 : i32
    %183 = arith.minsi %c16_i32_74, %182 : i32
    %cst_75 = arith.constant 5.000000e+00 : f32
    %184 = arith.mulf %cst_75, %38 : f32
    %185 = math.ceil %184 : f32
    %186 = arith.fptosi %185 : f32 to i32
    %187 = arith.addi %186, %16 : i32
    %c0_i32_76 = arith.constant 0 : i32
    %c16_i32_77 = arith.constant 16 : i32
    %188 = arith.maxsi %c0_i32_76, %187 : i32
    %189 = arith.minsi %c16_i32_77, %188 : i32
    %190 = vector.broadcast %183 : i32 to vector<16x1xi32>
    %191 = arith.cmpi sge, %39, %190 : vector<16x1xi32>
    %192 = vector.broadcast %189 : i32 to vector<16x1xi32>
    %193 = arith.cmpi slt, %39, %192 : vector<16x1xi32>
    %194 = arith.andi %191, %193 : vector<16x1xi1>
    %cst_78 = arith.constant 0xFF800000 : f32
    %195 = vector.shape_cast %194 : vector<16x1xi1> to vector<16x1xi1>
    %196 = vector.broadcast %195 : vector<16x1xi1> to vector<16x4xi1>
    %197 = vector.broadcast %cst_78 : f32 to vector<16x4xf32>
    %198 = arith.select %196, %57, %197 : vector<16x4xi1>, vector<16x4xf32>
    %cst_79 = arith.constant dense<0xFF800000> : vector<4xf32>
    %199 = vector.multi_reduction <maximumf>, %198, %cst_79 [0] : vector<16x4xf32> to vector<4xf32>
    %200 = vector.shape_cast %199 : vector<4xf32> to vector<1x4xf32>
    %201 = arith.cmpi sgt, %189, %183 : i32
    %202 = arith.andi %52, %201 : i1
    %cst_80 = arith.constant 0.000000e+00 : f32
    %203 = vector.broadcast %cst_80 : f32 to vector<1x4xf32>
    %204 = arith.select %202, %200, %203 : vector<1x4xf32>
    %c0_81 = arith.constant 0 : index
    %c0_82 = arith.constant 0 : index
    %c4 = arith.constant 4 : index
    %c0_83 = arith.constant 0 : index
    %205 = vector.load %arg5[%c0_81, %c0_82, %c4, %c0_83] : memref<1x7x7x4xf32, #tpu.memory_space<vmem>>, vector<1x1x1x4xf32>
    %206 = vector.shape_cast %205 : vector<1x1x1x4xf32> to vector<1x4xf32>
    %207 = vector.shape_cast %204 : vector<1x4xf32> to vector<1x1x1x4xf32>
    tpu.vector_store %arg5[%c0_81, %c0_82, %c4, %c0_83], %207 {strides = array<i32>} : memref<1x7x7x4xf32, #tpu.memory_space<vmem>>, vector<1x1x1x4xf32>,
    %cst_84 = arith.constant 5.000000e+00 : f32
    %208 = arith.mulf %cst_84, %38 : f32
    %209 = math.floor %208 : f32
    %210 = arith.fptosi %209 : f32 to i32
    %211 = arith.addi %210, %16 : i32
    %c0_i32_85 = arith.constant 0 : i32
    %c16_i32_86 = arith.constant 16 : i32
    %212 = arith.maxsi %c0_i32_85, %211 : i32
    %213 = arith.minsi %c16_i32_86, %212 : i32
    %cst_87 = arith.constant 6.000000e+00 : f32
    %214 = arith.mulf %cst_87, %38 : f32
    %215 = math.ceil %214 : f32
    %216 = arith.fptosi %215 : f32 to i32
    %217 = arith.addi %216, %16 : i32
    %c0_i32_88 = arith.constant 0 : i32
    %c16_i32_89 = arith.constant 16 : i32
    %218 = arith.maxsi %c0_i32_88, %217 : i32
    %219 = arith.minsi %c16_i32_89, %218 : i32
    %220 = vector.broadcast %213 : i32 to vector<16x1xi32>
    %221 = arith.cmpi sge, %39, %220 : vector<16x1xi32>
    %222 = vector.broadcast %219 : i32 to vector<16x1xi32>
    %223 = arith.cmpi slt, %39, %222 : vector<16x1xi32>
    %224 = arith.andi %221, %223 : vector<16x1xi1>
    %cst_90 = arith.constant 0xFF800000 : f32
    %225 = vector.shape_cast %224 : vector<16x1xi1> to vector<16x1xi1>
    %226 = vector.broadcast %225 : vector<16x1xi1> to vector<16x4xi1>
    %227 = vector.broadcast %cst_90 : f32 to vector<16x4xf32>
    %228 = arith.select %226, %57, %227 : vector<16x4xi1>, vector<16x4xf32>
    %cst_91 = arith.constant dense<0xFF800000> : vector<4xf32>
    %229 = vector.multi_reduction <maximumf>, %228, %cst_91 [0] : vector<16x4xf32> to vector<4xf32>
    %230 = vector.shape_cast %229 : vector<4xf32> to vector<1x4xf32>
    %231 = arith.cmpi sgt, %219, %213 : i32
    %232 = arith.andi %52, %231 : i1
    %cst_92 = arith.constant 0.000000e+00 : f32
    %233 = vector.broadcast %cst_92 : f32 to vector<1x4xf32>
    %234 = arith.select %232, %230, %233 : vector<1x4xf32>
    %c0_93 = arith.constant 0 : index
    %c0_94 = arith.constant 0 : index
    %c5 = arith.constant 5 : index
    %c0_95 = arith.constant 0 : index
    %235 = vector.load %arg5[%c0_93, %c0_94, %c5, %c0_95] : memref<1x7x7x4xf32, #tpu.memory_space<vmem>>, vector<1x1x1x4xf32>
    %236 = vector.shape_cast %235 : vector<1x1x1x4xf32> to vector<1x4xf32>
    %237 = vector.shape_cast %234 : vector<1x4xf32> to vector<1x1x1x4xf32>
    tpu.vector_store %arg5[%c0_93, %c0_94, %c5, %c0_95], %237 {strides = array<i32>} : memref<1x7x7x4xf32, #tpu.memory_space<vmem>>, vector<1x1x1x4xf32>,
    %cst_96 = arith.constant 6.000000e+00 : f32
    %238 = arith.mulf %cst_96, %38 : f32
    %239 = math.floor %238 : f32
    %240 = arith.fptosi %239 : f32 to i32
    %241 = arith.addi %240, %16 : i32
    %c0_i32_97 = arith.constant 0 : i32
    %c16_i32_98 = arith.constant 16 : i32
    %242 = arith.maxsi %c0_i32_97, %241 : i32
    %243 = arith.minsi %c16_i32_98, %242 : i32
    %cst_99 = arith.constant 7.000000e+00 : f32
    %244 = arith.mulf %cst_99, %38 : f32
    %245 = math.ceil %244 : f32
    %246 = arith.fptosi %245 : f32 to i32
    %247 = arith.addi %246, %16 : i32
    %c0_i32_100 = arith.constant 0 : i32
    %c16_i32_101 = arith.constant 16 : i32
    %248 = arith.maxsi %c0_i32_100, %247 : i32
    %249 = arith.minsi %c16_i32_101, %248 : i32
    %250 = vector.broadcast %243 : i32 to vector<16x1xi32>
    %251 = arith.cmpi sge, %39, %250 : vector<16x1xi32>
    %252 = vector.broadcast %249 : i32 to vector<16x1xi32>
    %253 = arith.cmpi slt, %39, %252 : vector<16x1xi32>
    %254 = arith.andi %251, %253 : vector<16x1xi1>
    %cst_102 = arith.constant 0xFF800000 : f32
    %255 = vector.shape_cast %254 : vector<16x1xi1> to vector<16x1xi1>
    %256 = vector.broadcast %255 : vector<16x1xi1> to vector<16x4xi1>
    %257 = vector.broadcast %cst_102 : f32 to vector<16x4xf32>
    %258 = arith.select %256, %57, %257 : vector<16x4xi1>, vector<16x4xf32>
    %cst_103 = arith.constant dense<0xFF800000> : vector<4xf32>
    %259 = vector.multi_reduction <maximumf>, %258, %cst_103 [0] : vector<16x4xf32> to vector<4xf32>
    %260 = vector.shape_cast %259 : vector<4xf32> to vector<1x4xf32>
    %261 = arith.cmpi sgt, %249, %243 : i32
    %262 = arith.andi %52, %261 : i1
    %cst_104 = arith.constant 0.000000e+00 : f32
    %263 = vector.broadcast %cst_104 : f32 to vector<1x4xf32>
    %264 = arith.select %262, %260, %263 : vector<1x4xf32>
    %c0_105 = arith.constant 0 : index
    %c0_106 = arith.constant 0 : index
    %c6 = arith.constant 6 : index
    %c0_107 = arith.constant 0 : index
    %265 = vector.load %arg5[%c0_105, %c0_106, %c6, %c0_107] : memref<1x7x7x4xf32, #tpu.memory_space<vmem>>, vector<1x1x1x4xf32>
    %266 = vector.shape_cast %265 : vector<1x1x1x4xf32> to vector<1x4xf32>
    %267 = vector.shape_cast %264 : vector<1x4xf32> to vector<1x1x1x4xf32>
    tpu.vector_store %arg5[%c0_105, %c0_106, %c6, %c0_107], %267 {strides = array<i32>} : memref<1x7x7x4xf32, #tpu.memory_space<vmem>>, vector<1x1x1x4xf32>,
    %cst_108 = arith.constant 1.000000e+00 : f32
    %268 = arith.mulf %cst_108, %36 : f32
    %269 = math.floor %268 : f32
    %270 = arith.fptosi %269 : f32 to i32
    %271 = arith.addi %270, %20 : i32
    %c0_i32_109 = arith.constant 0 : i32
    %c16_i32_110 = arith.constant 16 : i32
    %272 = arith.maxsi %c0_i32_109, %271 : i32
    %273 = arith.minsi %c16_i32_110, %272 : i32
    %cst_111 = arith.constant 2.000000e+00 : f32
    %274 = arith.mulf %cst_111, %36 : f32
    %275 = math.ceil %274 : f32
    %276 = arith.fptosi %275 : f32 to i32
    %277 = arith.addi %276, %20 : i32
    %c0_i32_112 = arith.constant 0 : i32
    %c16_i32_113 = arith.constant 16 : i32
    %278 = arith.maxsi %c0_i32_112, %277 : i32
    %279 = arith.minsi %c16_i32_113, %278 : i32
    %280 = arith.cmpi sgt, %279, %273 : i32
    %cst_114 = arith.constant 0xFF800000 : f32
    %281 = vector.broadcast %cst_114 : f32 to vector<16x4xf32>
    %c0_115 = arith.constant 0 : index
    %c0_116 = arith.constant 0 : index
    %282 = vector.load %arg6[%c0_115, %c0_116] : memref<16x4xf32, #tpu.memory_space<vmem>>, vector<16x4xf32>
    tpu.vector_store %arg6[%c0_115, %c0_116], %281 {strides = array<i32>} : memref<16x4xf32, #tpu.memory_space<vmem>>, vector<16x4xf32>,
    %c0_i32_117 = arith.constant 0 : i32
    %283 = arith.subi %279, %273 : i32
    %284 = arith.addi %273, %283 : i32
    %c1_i32_118 = arith.constant 1 : i32
    scf.for %arg7 = %273 to %284 step %c1_i32_118  : i32 {
      %c0_732 = arith.constant 0 : index
      %c0_733 = arith.constant 0 : index
      %1636 = vector.load %arg6[%c0_732, %c0_733] : memref<16x4xf32, #tpu.memory_space<vmem>>, vector<16x4xf32>
      %c0_734 = arith.constant 0 : index
      %1637 = arith.index_cast %arg7 : i32 to index
      %c0_735 = arith.constant 0 : index
      %c0_736 = arith.constant 0 : index
      %1638 = vector.load %arg4[%c0_734, %1637, %c0_735, %c0_736] : memref<1x16x16x4xf32, #tpu.memory_space<vmem>>, vector<1x1x16x4xf32>
      %1639 = vector.shape_cast %1638 : vector<1x1x16x4xf32> to vector<16x4xf32>
      %1640 = arith.maximumf %1636, %1639 : vector<16x4xf32>
      %c0_737 = arith.constant 0 : index
      %c0_738 = arith.constant 0 : index
      %1641 = vector.load %arg6[%c0_737, %c0_738] : memref<16x4xf32, #tpu.memory_space<vmem>>, vector<16x4xf32>
      tpu.vector_store %arg6[%c0_737, %c0_738], %1640 {strides = array<i32>} : memref<16x4xf32, #tpu.memory_space<vmem>>, vector<16x4xf32>,
    }
    %c0_119 = arith.constant 0 : index
    %c0_120 = arith.constant 0 : index
    %285 = vector.load %arg6[%c0_119, %c0_120] : memref<16x4xf32, #tpu.memory_space<vmem>>, vector<16x4xf32>
    %cst_121 = arith.constant 0.000000e+00 : f32
    %286 = arith.mulf %cst_121, %38 : f32
    %287 = math.floor %286 : f32
    %288 = arith.fptosi %287 : f32 to i32
    %289 = arith.addi %288, %16 : i32
    %c0_i32_122 = arith.constant 0 : i32
    %c16_i32_123 = arith.constant 16 : i32
    %290 = arith.maxsi %c0_i32_122, %289 : i32
    %291 = arith.minsi %c16_i32_123, %290 : i32
    %cst_124 = arith.constant 1.000000e+00 : f32
    %292 = arith.mulf %cst_124, %38 : f32
    %293 = math.ceil %292 : f32
    %294 = arith.fptosi %293 : f32 to i32
    %295 = arith.addi %294, %16 : i32
    %c0_i32_125 = arith.constant 0 : i32
    %c16_i32_126 = arith.constant 16 : i32
    %296 = arith.maxsi %c0_i32_125, %295 : i32
    %297 = arith.minsi %c16_i32_126, %296 : i32
    %298 = vector.broadcast %291 : i32 to vector<16x1xi32>
    %299 = arith.cmpi sge, %39, %298 : vector<16x1xi32>
    %300 = vector.broadcast %297 : i32 to vector<16x1xi32>
    %301 = arith.cmpi slt, %39, %300 : vector<16x1xi32>
    %302 = arith.andi %299, %301 : vector<16x1xi1>
    %cst_127 = arith.constant 0xFF800000 : f32
    %303 = vector.shape_cast %302 : vector<16x1xi1> to vector<16x1xi1>
    %304 = vector.broadcast %303 : vector<16x1xi1> to vector<16x4xi1>
    %305 = vector.broadcast %cst_127 : f32 to vector<16x4xf32>
    %306 = arith.select %304, %285, %305 : vector<16x4xi1>, vector<16x4xf32>
    %cst_128 = arith.constant dense<0xFF800000> : vector<4xf32>
    %307 = vector.multi_reduction <maximumf>, %306, %cst_128 [0] : vector<16x4xf32> to vector<4xf32>
    %308 = vector.shape_cast %307 : vector<4xf32> to vector<1x4xf32>
    %309 = arith.cmpi sgt, %297, %291 : i32
    %310 = arith.andi %280, %309 : i1
    %cst_129 = arith.constant 0.000000e+00 : f32
    %311 = vector.broadcast %cst_129 : f32 to vector<1x4xf32>
    %312 = arith.select %310, %308, %311 : vector<1x4xf32>
    %c0_130 = arith.constant 0 : index
    %c1_131 = arith.constant 1 : index
    %c0_132 = arith.constant 0 : index
    %c0_133 = arith.constant 0 : index
    %313 = vector.load %arg5[%c0_130, %c1_131, %c0_132, %c0_133] : memref<1x7x7x4xf32, #tpu.memory_space<vmem>>, vector<1x1x1x4xf32>
    %314 = vector.shape_cast %313 : vector<1x1x1x4xf32> to vector<1x4xf32>
    %315 = vector.shape_cast %312 : vector<1x4xf32> to vector<1x1x1x4xf32>
    tpu.vector_store %arg5[%c0_130, %c1_131, %c0_132, %c0_133], %315 {strides = array<i32>} : memref<1x7x7x4xf32, #tpu.memory_space<vmem>>, vector<1x1x1x4xf32>,
    %cst_134 = arith.constant 1.000000e+00 : f32
    %316 = arith.mulf %cst_134, %38 : f32
    %317 = math.floor %316 : f32
    %318 = arith.fptosi %317 : f32 to i32
    %319 = arith.addi %318, %16 : i32
    %c0_i32_135 = arith.constant 0 : i32
    %c16_i32_136 = arith.constant 16 : i32
    %320 = arith.maxsi %c0_i32_135, %319 : i32
    %321 = arith.minsi %c16_i32_136, %320 : i32
    %cst_137 = arith.constant 2.000000e+00 : f32
    %322 = arith.mulf %cst_137, %38 : f32
    %323 = math.ceil %322 : f32
    %324 = arith.fptosi %323 : f32 to i32
    %325 = arith.addi %324, %16 : i32
    %c0_i32_138 = arith.constant 0 : i32
    %c16_i32_139 = arith.constant 16 : i32
    %326 = arith.maxsi %c0_i32_138, %325 : i32
    %327 = arith.minsi %c16_i32_139, %326 : i32
    %328 = vector.broadcast %321 : i32 to vector<16x1xi32>
    %329 = arith.cmpi sge, %39, %328 : vector<16x1xi32>
    %330 = vector.broadcast %327 : i32 to vector<16x1xi32>
    %331 = arith.cmpi slt, %39, %330 : vector<16x1xi32>
    %332 = arith.andi %329, %331 : vector<16x1xi1>
    %cst_140 = arith.constant 0xFF800000 : f32
    %333 = vector.shape_cast %332 : vector<16x1xi1> to vector<16x1xi1>
    %334 = vector.broadcast %333 : vector<16x1xi1> to vector<16x4xi1>
    %335 = vector.broadcast %cst_140 : f32 to vector<16x4xf32>
    %336 = arith.select %334, %285, %335 : vector<16x4xi1>, vector<16x4xf32>
    %cst_141 = arith.constant dense<0xFF800000> : vector<4xf32>
    %337 = vector.multi_reduction <maximumf>, %336, %cst_141 [0] : vector<16x4xf32> to vector<4xf32>
    %338 = vector.shape_cast %337 : vector<4xf32> to vector<1x4xf32>
    %339 = arith.cmpi sgt, %327, %321 : i32
    %340 = arith.andi %280, %339 : i1
    %cst_142 = arith.constant 0.000000e+00 : f32
    %341 = vector.broadcast %cst_142 : f32 to vector<1x4xf32>
    %342 = arith.select %340, %338, %341 : vector<1x4xf32>
    %c0_143 = arith.constant 0 : index
    %c1_144 = arith.constant 1 : index
    %c1_145 = arith.constant 1 : index
    %c0_146 = arith.constant 0 : index
    %343 = vector.load %arg5[%c0_143, %c1_144, %c1_145, %c0_146] : memref<1x7x7x4xf32, #tpu.memory_space<vmem>>, vector<1x1x1x4xf32>
    %344 = vector.shape_cast %343 : vector<1x1x1x4xf32> to vector<1x4xf32>
    %345 = vector.shape_cast %342 : vector<1x4xf32> to vector<1x1x1x4xf32>
    tpu.vector_store %arg5[%c0_143, %c1_144, %c1_145, %c0_146], %345 {strides = array<i32>} : memref<1x7x7x4xf32, #tpu.memory_space<vmem>>, vector<1x1x1x4xf32>,
    %cst_147 = arith.constant 2.000000e+00 : f32
    %346 = arith.mulf %cst_147, %38 : f32
    %347 = math.floor %346 : f32
    %348 = arith.fptosi %347 : f32 to i32
    %349 = arith.addi %348, %16 : i32
    %c0_i32_148 = arith.constant 0 : i32
    %c16_i32_149 = arith.constant 16 : i32
    %350 = arith.maxsi %c0_i32_148, %349 : i32
    %351 = arith.minsi %c16_i32_149, %350 : i32
    %cst_150 = arith.constant 3.000000e+00 : f32
    %352 = arith.mulf %cst_150, %38 : f32
    %353 = math.ceil %352 : f32
    %354 = arith.fptosi %353 : f32 to i32
    %355 = arith.addi %354, %16 : i32
    %c0_i32_151 = arith.constant 0 : i32
    %c16_i32_152 = arith.constant 16 : i32
    %356 = arith.maxsi %c0_i32_151, %355 : i32
    %357 = arith.minsi %c16_i32_152, %356 : i32
    %358 = vector.broadcast %351 : i32 to vector<16x1xi32>
    %359 = arith.cmpi sge, %39, %358 : vector<16x1xi32>
    %360 = vector.broadcast %357 : i32 to vector<16x1xi32>
    %361 = arith.cmpi slt, %39, %360 : vector<16x1xi32>
    %362 = arith.andi %359, %361 : vector<16x1xi1>
    %cst_153 = arith.constant 0xFF800000 : f32
    %363 = vector.shape_cast %362 : vector<16x1xi1> to vector<16x1xi1>
    %364 = vector.broadcast %363 : vector<16x1xi1> to vector<16x4xi1>
    %365 = vector.broadcast %cst_153 : f32 to vector<16x4xf32>
    %366 = arith.select %364, %285, %365 : vector<16x4xi1>, vector<16x4xf32>
    %cst_154 = arith.constant dense<0xFF800000> : vector<4xf32>
    %367 = vector.multi_reduction <maximumf>, %366, %cst_154 [0] : vector<16x4xf32> to vector<4xf32>
    %368 = vector.shape_cast %367 : vector<4xf32> to vector<1x4xf32>
    %369 = arith.cmpi sgt, %357, %351 : i32
    %370 = arith.andi %280, %369 : i1
    %cst_155 = arith.constant 0.000000e+00 : f32
    %371 = vector.broadcast %cst_155 : f32 to vector<1x4xf32>
    %372 = arith.select %370, %368, %371 : vector<1x4xf32>
    %c0_156 = arith.constant 0 : index
    %c1_157 = arith.constant 1 : index
    %c2_158 = arith.constant 2 : index
    %c0_159 = arith.constant 0 : index
    %373 = vector.load %arg5[%c0_156, %c1_157, %c2_158, %c0_159] : memref<1x7x7x4xf32, #tpu.memory_space<vmem>>, vector<1x1x1x4xf32>
    %374 = vector.shape_cast %373 : vector<1x1x1x4xf32> to vector<1x4xf32>
    %375 = vector.shape_cast %372 : vector<1x4xf32> to vector<1x1x1x4xf32>
    tpu.vector_store %arg5[%c0_156, %c1_157, %c2_158, %c0_159], %375 {strides = array<i32>} : memref<1x7x7x4xf32, #tpu.memory_space<vmem>>, vector<1x1x1x4xf32>,
    %cst_160 = arith.constant 3.000000e+00 : f32
    %376 = arith.mulf %cst_160, %38 : f32
    %377 = math.floor %376 : f32
    %378 = arith.fptosi %377 : f32 to i32
    %379 = arith.addi %378, %16 : i32
    %c0_i32_161 = arith.constant 0 : i32
    %c16_i32_162 = arith.constant 16 : i32
    %380 = arith.maxsi %c0_i32_161, %379 : i32
    %381 = arith.minsi %c16_i32_162, %380 : i32
    %cst_163 = arith.constant 4.000000e+00 : f32
    %382 = arith.mulf %cst_163, %38 : f32
    %383 = math.ceil %382 : f32
    %384 = arith.fptosi %383 : f32 to i32
    %385 = arith.addi %384, %16 : i32
    %c0_i32_164 = arith.constant 0 : i32
    %c16_i32_165 = arith.constant 16 : i32
    %386 = arith.maxsi %c0_i32_164, %385 : i32
    %387 = arith.minsi %c16_i32_165, %386 : i32
    %388 = vector.broadcast %381 : i32 to vector<16x1xi32>
    %389 = arith.cmpi sge, %39, %388 : vector<16x1xi32>
    %390 = vector.broadcast %387 : i32 to vector<16x1xi32>
    %391 = arith.cmpi slt, %39, %390 : vector<16x1xi32>
    %392 = arith.andi %389, %391 : vector<16x1xi1>
    %cst_166 = arith.constant 0xFF800000 : f32
    %393 = vector.shape_cast %392 : vector<16x1xi1> to vector<16x1xi1>
    %394 = vector.broadcast %393 : vector<16x1xi1> to vector<16x4xi1>
    %395 = vector.broadcast %cst_166 : f32 to vector<16x4xf32>
    %396 = arith.select %394, %285, %395 : vector<16x4xi1>, vector<16x4xf32>
    %cst_167 = arith.constant dense<0xFF800000> : vector<4xf32>
    %397 = vector.multi_reduction <maximumf>, %396, %cst_167 [0] : vector<16x4xf32> to vector<4xf32>
    %398 = vector.shape_cast %397 : vector<4xf32> to vector<1x4xf32>
    %399 = arith.cmpi sgt, %387, %381 : i32
    %400 = arith.andi %280, %399 : i1
    %cst_168 = arith.constant 0.000000e+00 : f32
    %401 = vector.broadcast %cst_168 : f32 to vector<1x4xf32>
    %402 = arith.select %400, %398, %401 : vector<1x4xf32>
    %c0_169 = arith.constant 0 : index
    %c1_170 = arith.constant 1 : index
    %c3_171 = arith.constant 3 : index
    %c0_172 = arith.constant 0 : index
    %403 = vector.load %arg5[%c0_169, %c1_170, %c3_171, %c0_172] : memref<1x7x7x4xf32, #tpu.memory_space<vmem>>, vector<1x1x1x4xf32>
    %404 = vector.shape_cast %403 : vector<1x1x1x4xf32> to vector<1x4xf32>
    %405 = vector.shape_cast %402 : vector<1x4xf32> to vector<1x1x1x4xf32>
    tpu.vector_store %arg5[%c0_169, %c1_170, %c3_171, %c0_172], %405 {strides = array<i32>} : memref<1x7x7x4xf32, #tpu.memory_space<vmem>>, vector<1x1x1x4xf32>,
    %cst_173 = arith.constant 4.000000e+00 : f32
    %406 = arith.mulf %cst_173, %38 : f32
    %407 = math.floor %406 : f32
    %408 = arith.fptosi %407 : f32 to i32
    %409 = arith.addi %408, %16 : i32
    %c0_i32_174 = arith.constant 0 : i32
    %c16_i32_175 = arith.constant 16 : i32
    %410 = arith.maxsi %c0_i32_174, %409 : i32
    %411 = arith.minsi %c16_i32_175, %410 : i32
    %cst_176 = arith.constant 5.000000e+00 : f32
    %412 = arith.mulf %cst_176, %38 : f32
    %413 = math.ceil %412 : f32
    %414 = arith.fptosi %413 : f32 to i32
    %415 = arith.addi %414, %16 : i32
    %c0_i32_177 = arith.constant 0 : i32
    %c16_i32_178 = arith.constant 16 : i32
    %416 = arith.maxsi %c0_i32_177, %415 : i32
    %417 = arith.minsi %c16_i32_178, %416 : i32
    %418 = vector.broadcast %411 : i32 to vector<16x1xi32>
    %419 = arith.cmpi sge, %39, %418 : vector<16x1xi32>
    %420 = vector.broadcast %417 : i32 to vector<16x1xi32>
    %421 = arith.cmpi slt, %39, %420 : vector<16x1xi32>
    %422 = arith.andi %419, %421 : vector<16x1xi1>
    %cst_179 = arith.constant 0xFF800000 : f32
    %423 = vector.shape_cast %422 : vector<16x1xi1> to vector<16x1xi1>
    %424 = vector.broadcast %423 : vector<16x1xi1> to vector<16x4xi1>
    %425 = vector.broadcast %cst_179 : f32 to vector<16x4xf32>
    %426 = arith.select %424, %285, %425 : vector<16x4xi1>, vector<16x4xf32>
    %cst_180 = arith.constant dense<0xFF800000> : vector<4xf32>
    %427 = vector.multi_reduction <maximumf>, %426, %cst_180 [0] : vector<16x4xf32> to vector<4xf32>
    %428 = vector.shape_cast %427 : vector<4xf32> to vector<1x4xf32>
    %429 = arith.cmpi sgt, %417, %411 : i32
    %430 = arith.andi %280, %429 : i1
    %cst_181 = arith.constant 0.000000e+00 : f32
    %431 = vector.broadcast %cst_181 : f32 to vector<1x4xf32>
    %432 = arith.select %430, %428, %431 : vector<1x4xf32>
    %c0_182 = arith.constant 0 : index
    %c1_183 = arith.constant 1 : index
    %c4_184 = arith.constant 4 : index
    %c0_185 = arith.constant 0 : index
    %433 = vector.load %arg5[%c0_182, %c1_183, %c4_184, %c0_185] : memref<1x7x7x4xf32, #tpu.memory_space<vmem>>, vector<1x1x1x4xf32>
    %434 = vector.shape_cast %433 : vector<1x1x1x4xf32> to vector<1x4xf32>
    %435 = vector.shape_cast %432 : vector<1x4xf32> to vector<1x1x1x4xf32>
    tpu.vector_store %arg5[%c0_182, %c1_183, %c4_184, %c0_185], %435 {strides = array<i32>} : memref<1x7x7x4xf32, #tpu.memory_space<vmem>>, vector<1x1x1x4xf32>,
    %cst_186 = arith.constant 5.000000e+00 : f32
    %436 = arith.mulf %cst_186, %38 : f32
    %437 = math.floor %436 : f32
    %438 = arith.fptosi %437 : f32 to i32
    %439 = arith.addi %438, %16 : i32
    %c0_i32_187 = arith.constant 0 : i32
    %c16_i32_188 = arith.constant 16 : i32
    %440 = arith.maxsi %c0_i32_187, %439 : i32
    %441 = arith.minsi %c16_i32_188, %440 : i32
    %cst_189 = arith.constant 6.000000e+00 : f32
    %442 = arith.mulf %cst_189, %38 : f32
    %443 = math.ceil %442 : f32
    %444 = arith.fptosi %443 : f32 to i32
    %445 = arith.addi %444, %16 : i32
    %c0_i32_190 = arith.constant 0 : i32
    %c16_i32_191 = arith.constant 16 : i32
    %446 = arith.maxsi %c0_i32_190, %445 : i32
    %447 = arith.minsi %c16_i32_191, %446 : i32
    %448 = vector.broadcast %441 : i32 to vector<16x1xi32>
    %449 = arith.cmpi sge, %39, %448 : vector<16x1xi32>
    %450 = vector.broadcast %447 : i32 to vector<16x1xi32>
    %451 = arith.cmpi slt, %39, %450 : vector<16x1xi32>
    %452 = arith.andi %449, %451 : vector<16x1xi1>
    %cst_192 = arith.constant 0xFF800000 : f32
    %453 = vector.shape_cast %452 : vector<16x1xi1> to vector<16x1xi1>
    %454 = vector.broadcast %453 : vector<16x1xi1> to vector<16x4xi1>
    %455 = vector.broadcast %cst_192 : f32 to vector<16x4xf32>
    %456 = arith.select %454, %285, %455 : vector<16x4xi1>, vector<16x4xf32>
    %cst_193 = arith.constant dense<0xFF800000> : vector<4xf32>
    %457 = vector.multi_reduction <maximumf>, %456, %cst_193 [0] : vector<16x4xf32> to vector<4xf32>
    %458 = vector.shape_cast %457 : vector<4xf32> to vector<1x4xf32>
    %459 = arith.cmpi sgt, %447, %441 : i32
    %460 = arith.andi %280, %459 : i1
    %cst_194 = arith.constant 0.000000e+00 : f32
    %461 = vector.broadcast %cst_194 : f32 to vector<1x4xf32>
    %462 = arith.select %460, %458, %461 : vector<1x4xf32>
    %c0_195 = arith.constant 0 : index
    %c1_196 = arith.constant 1 : index
    %c5_197 = arith.constant 5 : index
    %c0_198 = arith.constant 0 : index
    %463 = vector.load %arg5[%c0_195, %c1_196, %c5_197, %c0_198] : memref<1x7x7x4xf32, #tpu.memory_space<vmem>>, vector<1x1x1x4xf32>
    %464 = vector.shape_cast %463 : vector<1x1x1x4xf32> to vector<1x4xf32>
    %465 = vector.shape_cast %462 : vector<1x4xf32> to vector<1x1x1x4xf32>
    tpu.vector_store %arg5[%c0_195, %c1_196, %c5_197, %c0_198], %465 {strides = array<i32>} : memref<1x7x7x4xf32, #tpu.memory_space<vmem>>, vector<1x1x1x4xf32>,
    %cst_199 = arith.constant 6.000000e+00 : f32
    %466 = arith.mulf %cst_199, %38 : f32
    %467 = math.floor %466 : f32
    %468 = arith.fptosi %467 : f32 to i32
    %469 = arith.addi %468, %16 : i32
    %c0_i32_200 = arith.constant 0 : i32
    %c16_i32_201 = arith.constant 16 : i32
    %470 = arith.maxsi %c0_i32_200, %469 : i32
    %471 = arith.minsi %c16_i32_201, %470 : i32
    %cst_202 = arith.constant 7.000000e+00 : f32
    %472 = arith.mulf %cst_202, %38 : f32
    %473 = math.ceil %472 : f32
    %474 = arith.fptosi %473 : f32 to i32
    %475 = arith.addi %474, %16 : i32
    %c0_i32_203 = arith.constant 0 : i32
    %c16_i32_204 = arith.constant 16 : i32
    %476 = arith.maxsi %c0_i32_203, %475 : i32
    %477 = arith.minsi %c16_i32_204, %476 : i32
    %478 = vector.broadcast %471 : i32 to vector<16x1xi32>
    %479 = arith.cmpi sge, %39, %478 : vector<16x1xi32>
    %480 = vector.broadcast %477 : i32 to vector<16x1xi32>
    %481 = arith.cmpi slt, %39, %480 : vector<16x1xi32>
    %482 = arith.andi %479, %481 : vector<16x1xi1>
    %cst_205 = arith.constant 0xFF800000 : f32
    %483 = vector.shape_cast %482 : vector<16x1xi1> to vector<16x1xi1>
    %484 = vector.broadcast %483 : vector<16x1xi1> to vector<16x4xi1>
    %485 = vector.broadcast %cst_205 : f32 to vector<16x4xf32>
    %486 = arith.select %484, %285, %485 : vector<16x4xi1>, vector<16x4xf32>
    %cst_206 = arith.constant dense<0xFF800000> : vector<4xf32>
    %487 = vector.multi_reduction <maximumf>, %486, %cst_206 [0] : vector<16x4xf32> to vector<4xf32>
    %488 = vector.shape_cast %487 : vector<4xf32> to vector<1x4xf32>
    %489 = arith.cmpi sgt, %477, %471 : i32
    %490 = arith.andi %280, %489 : i1
    %cst_207 = arith.constant 0.000000e+00 : f32
    %491 = vector.broadcast %cst_207 : f32 to vector<1x4xf32>
    %492 = arith.select %490, %488, %491 : vector<1x4xf32>
    %c0_208 = arith.constant 0 : index
    %c1_209 = arith.constant 1 : index
    %c6_210 = arith.constant 6 : index
    %c0_211 = arith.constant 0 : index
    %493 = vector.load %arg5[%c0_208, %c1_209, %c6_210, %c0_211] : memref<1x7x7x4xf32, #tpu.memory_space<vmem>>, vector<1x1x1x4xf32>
    %494 = vector.shape_cast %493 : vector<1x1x1x4xf32> to vector<1x4xf32>
    %495 = vector.shape_cast %492 : vector<1x4xf32> to vector<1x1x1x4xf32>
    tpu.vector_store %arg5[%c0_208, %c1_209, %c6_210, %c0_211], %495 {strides = array<i32>} : memref<1x7x7x4xf32, #tpu.memory_space<vmem>>, vector<1x1x1x4xf32>,
    %cst_212 = arith.constant 2.000000e+00 : f32
    %496 = arith.mulf %cst_212, %36 : f32
    %497 = math.floor %496 : f32
    %498 = arith.fptosi %497 : f32 to i32
    %499 = arith.addi %498, %20 : i32
    %c0_i32_213 = arith.constant 0 : i32
    %c16_i32_214 = arith.constant 16 : i32
    %500 = arith.maxsi %c0_i32_213, %499 : i32
    %501 = arith.minsi %c16_i32_214, %500 : i32
    %cst_215 = arith.constant 3.000000e+00 : f32
    %502 = arith.mulf %cst_215, %36 : f32
    %503 = math.ceil %502 : f32
    %504 = arith.fptosi %503 : f32 to i32
    %505 = arith.addi %504, %20 : i32
    %c0_i32_216 = arith.constant 0 : i32
    %c16_i32_217 = arith.constant 16 : i32
    %506 = arith.maxsi %c0_i32_216, %505 : i32
    %507 = arith.minsi %c16_i32_217, %506 : i32
    %508 = arith.cmpi sgt, %507, %501 : i32
    %cst_218 = arith.constant 0xFF800000 : f32
    %509 = vector.broadcast %cst_218 : f32 to vector<16x4xf32>
    %c0_219 = arith.constant 0 : index
    %c0_220 = arith.constant 0 : index
    %510 = vector.load %arg6[%c0_219, %c0_220] : memref<16x4xf32, #tpu.memory_space<vmem>>, vector<16x4xf32>
    tpu.vector_store %arg6[%c0_219, %c0_220], %509 {strides = array<i32>} : memref<16x4xf32, #tpu.memory_space<vmem>>, vector<16x4xf32>,
    %c0_i32_221 = arith.constant 0 : i32
    %511 = arith.subi %507, %501 : i32
    %512 = arith.addi %501, %511 : i32
    %c1_i32_222 = arith.constant 1 : i32
    scf.for %arg7 = %501 to %512 step %c1_i32_222  : i32 {
      %c0_732 = arith.constant 0 : index
      %c0_733 = arith.constant 0 : index
      %1636 = vector.load %arg6[%c0_732, %c0_733] : memref<16x4xf32, #tpu.memory_space<vmem>>, vector<16x4xf32>
      %c0_734 = arith.constant 0 : index
      %1637 = arith.index_cast %arg7 : i32 to index
      %c0_735 = arith.constant 0 : index
      %c0_736 = arith.constant 0 : index
      %1638 = vector.load %arg4[%c0_734, %1637, %c0_735, %c0_736] : memref<1x16x16x4xf32, #tpu.memory_space<vmem>>, vector<1x1x16x4xf32>
      %1639 = vector.shape_cast %1638 : vector<1x1x16x4xf32> to vector<16x4xf32>
      %1640 = arith.maximumf %1636, %1639 : vector<16x4xf32>
      %c0_737 = arith.constant 0 : index
      %c0_738 = arith.constant 0 : index
      %1641 = vector.load %arg6[%c0_737, %c0_738] : memref<16x4xf32, #tpu.memory_space<vmem>>, vector<16x4xf32>
      tpu.vector_store %arg6[%c0_737, %c0_738], %1640 {strides = array<i32>} : memref<16x4xf32, #tpu.memory_space<vmem>>, vector<16x4xf32>,
    }
    %c0_223 = arith.constant 0 : index
    %c0_224 = arith.constant 0 : index
    %513 = vector.load %arg6[%c0_223, %c0_224] : memref<16x4xf32, #tpu.memory_space<vmem>>, vector<16x4xf32>
    %cst_225 = arith.constant 0.000000e+00 : f32
    %514 = arith.mulf %cst_225, %38 : f32
    %515 = math.floor %514 : f32
    %516 = arith.fptosi %515 : f32 to i32
    %517 = arith.addi %516, %16 : i32
    %c0_i32_226 = arith.constant 0 : i32
    %c16_i32_227 = arith.constant 16 : i32
    %518 = arith.maxsi %c0_i32_226, %517 : i32
    %519 = arith.minsi %c16_i32_227, %518 : i32
    %cst_228 = arith.constant 1.000000e+00 : f32
    %520 = arith.mulf %cst_228, %38 : f32
    %521 = math.ceil %520 : f32
    %522 = arith.fptosi %521 : f32 to i32
    %523 = arith.addi %522, %16 : i32
    %c0_i32_229 = arith.constant 0 : i32
    %c16_i32_230 = arith.constant 16 : i32
    %524 = arith.maxsi %c0_i32_229, %523 : i32
    %525 = arith.minsi %c16_i32_230, %524 : i32
    %526 = vector.broadcast %519 : i32 to vector<16x1xi32>
    %527 = arith.cmpi sge, %39, %526 : vector<16x1xi32>
    %528 = vector.broadcast %525 : i32 to vector<16x1xi32>
    %529 = arith.cmpi slt, %39, %528 : vector<16x1xi32>
    %530 = arith.andi %527, %529 : vector<16x1xi1>
    %cst_231 = arith.constant 0xFF800000 : f32
    %531 = vector.shape_cast %530 : vector<16x1xi1> to vector<16x1xi1>
    %532 = vector.broadcast %531 : vector<16x1xi1> to vector<16x4xi1>
    %533 = vector.broadcast %cst_231 : f32 to vector<16x4xf32>
    %534 = arith.select %532, %513, %533 : vector<16x4xi1>, vector<16x4xf32>
    %cst_232 = arith.constant dense<0xFF800000> : vector<4xf32>
    %535 = vector.multi_reduction <maximumf>, %534, %cst_232 [0] : vector<16x4xf32> to vector<4xf32>
    %536 = vector.shape_cast %535 : vector<4xf32> to vector<1x4xf32>
    %537 = arith.cmpi sgt, %525, %519 : i32
    %538 = arith.andi %508, %537 : i1
    %cst_233 = arith.constant 0.000000e+00 : f32
    %539 = vector.broadcast %cst_233 : f32 to vector<1x4xf32>
    %540 = arith.select %538, %536, %539 : vector<1x4xf32>
    %c0_234 = arith.constant 0 : index
    %c2_235 = arith.constant 2 : index
    %c0_236 = arith.constant 0 : index
    %c0_237 = arith.constant 0 : index
    %541 = vector.load %arg5[%c0_234, %c2_235, %c0_236, %c0_237] : memref<1x7x7x4xf32, #tpu.memory_space<vmem>>, vector<1x1x1x4xf32>
    %542 = vector.shape_cast %541 : vector<1x1x1x4xf32> to vector<1x4xf32>
    %543 = vector.shape_cast %540 : vector<1x4xf32> to vector<1x1x1x4xf32>
    tpu.vector_store %arg5[%c0_234, %c2_235, %c0_236, %c0_237], %543 {strides = array<i32>} : memref<1x7x7x4xf32, #tpu.memory_space<vmem>>, vector<1x1x1x4xf32>,
    %cst_238 = arith.constant 1.000000e+00 : f32
    %544 = arith.mulf %cst_238, %38 : f32
    %545 = math.floor %544 : f32
    %546 = arith.fptosi %545 : f32 to i32
    %547 = arith.addi %546, %16 : i32
    %c0_i32_239 = arith.constant 0 : i32
    %c16_i32_240 = arith.constant 16 : i32
    %548 = arith.maxsi %c0_i32_239, %547 : i32
    %549 = arith.minsi %c16_i32_240, %548 : i32
    %cst_241 = arith.constant 2.000000e+00 : f32
    %550 = arith.mulf %cst_241, %38 : f32
    %551 = math.ceil %550 : f32
    %552 = arith.fptosi %551 : f32 to i32
    %553 = arith.addi %552, %16 : i32
    %c0_i32_242 = arith.constant 0 : i32
    %c16_i32_243 = arith.constant 16 : i32
    %554 = arith.maxsi %c0_i32_242, %553 : i32
    %555 = arith.minsi %c16_i32_243, %554 : i32
    %556 = vector.broadcast %549 : i32 to vector<16x1xi32>
    %557 = arith.cmpi sge, %39, %556 : vector<16x1xi32>
    %558 = vector.broadcast %555 : i32 to vector<16x1xi32>
    %559 = arith.cmpi slt, %39, %558 : vector<16x1xi32>
    %560 = arith.andi %557, %559 : vector<16x1xi1>
    %cst_244 = arith.constant 0xFF800000 : f32
    %561 = vector.shape_cast %560 : vector<16x1xi1> to vector<16x1xi1>
    %562 = vector.broadcast %561 : vector<16x1xi1> to vector<16x4xi1>
    %563 = vector.broadcast %cst_244 : f32 to vector<16x4xf32>
    %564 = arith.select %562, %513, %563 : vector<16x4xi1>, vector<16x4xf32>
    %cst_245 = arith.constant dense<0xFF800000> : vector<4xf32>
    %565 = vector.multi_reduction <maximumf>, %564, %cst_245 [0] : vector<16x4xf32> to vector<4xf32>
    %566 = vector.shape_cast %565 : vector<4xf32> to vector<1x4xf32>
    %567 = arith.cmpi sgt, %555, %549 : i32
    %568 = arith.andi %508, %567 : i1
    %cst_246 = arith.constant 0.000000e+00 : f32
    %569 = vector.broadcast %cst_246 : f32 to vector<1x4xf32>
    %570 = arith.select %568, %566, %569 : vector<1x4xf32>
    %c0_247 = arith.constant 0 : index
    %c2_248 = arith.constant 2 : index
    %c1_249 = arith.constant 1 : index
    %c0_250 = arith.constant 0 : index
    %571 = vector.load %arg5[%c0_247, %c2_248, %c1_249, %c0_250] : memref<1x7x7x4xf32, #tpu.memory_space<vmem>>, vector<1x1x1x4xf32>
    %572 = vector.shape_cast %571 : vector<1x1x1x4xf32> to vector<1x4xf32>
    %573 = vector.shape_cast %570 : vector<1x4xf32> to vector<1x1x1x4xf32>
    tpu.vector_store %arg5[%c0_247, %c2_248, %c1_249, %c0_250], %573 {strides = array<i32>} : memref<1x7x7x4xf32, #tpu.memory_space<vmem>>, vector<1x1x1x4xf32>,
    %cst_251 = arith.constant 2.000000e+00 : f32
    %574 = arith.mulf %cst_251, %38 : f32
    %575 = math.floor %574 : f32
    %576 = arith.fptosi %575 : f32 to i32
    %577 = arith.addi %576, %16 : i32
    %c0_i32_252 = arith.constant 0 : i32
    %c16_i32_253 = arith.constant 16 : i32
    %578 = arith.maxsi %c0_i32_252, %577 : i32
    %579 = arith.minsi %c16_i32_253, %578 : i32
    %cst_254 = arith.constant 3.000000e+00 : f32
    %580 = arith.mulf %cst_254, %38 : f32
    %581 = math.ceil %580 : f32
    %582 = arith.fptosi %581 : f32 to i32
    %583 = arith.addi %582, %16 : i32
    %c0_i32_255 = arith.constant 0 : i32
    %c16_i32_256 = arith.constant 16 : i32
    %584 = arith.maxsi %c0_i32_255, %583 : i32
    %585 = arith.minsi %c16_i32_256, %584 : i32
    %586 = vector.broadcast %579 : i32 to vector<16x1xi32>
    %587 = arith.cmpi sge, %39, %586 : vector<16x1xi32>
    %588 = vector.broadcast %585 : i32 to vector<16x1xi32>
    %589 = arith.cmpi slt, %39, %588 : vector<16x1xi32>
    %590 = arith.andi %587, %589 : vector<16x1xi1>
    %cst_257 = arith.constant 0xFF800000 : f32
    %591 = vector.shape_cast %590 : vector<16x1xi1> to vector<16x1xi1>
    %592 = vector.broadcast %591 : vector<16x1xi1> to vector<16x4xi1>
    %593 = vector.broadcast %cst_257 : f32 to vector<16x4xf32>
    %594 = arith.select %592, %513, %593 : vector<16x4xi1>, vector<16x4xf32>
    %cst_258 = arith.constant dense<0xFF800000> : vector<4xf32>
    %595 = vector.multi_reduction <maximumf>, %594, %cst_258 [0] : vector<16x4xf32> to vector<4xf32>
    %596 = vector.shape_cast %595 : vector<4xf32> to vector<1x4xf32>
    %597 = arith.cmpi sgt, %585, %579 : i32
    %598 = arith.andi %508, %597 : i1
    %cst_259 = arith.constant 0.000000e+00 : f32
    %599 = vector.broadcast %cst_259 : f32 to vector<1x4xf32>
    %600 = arith.select %598, %596, %599 : vector<1x4xf32>
    %c0_260 = arith.constant 0 : index
    %c2_261 = arith.constant 2 : index
    %c2_262 = arith.constant 2 : index
    %c0_263 = arith.constant 0 : index
    %601 = vector.load %arg5[%c0_260, %c2_261, %c2_262, %c0_263] : memref<1x7x7x4xf32, #tpu.memory_space<vmem>>, vector<1x1x1x4xf32>
    %602 = vector.shape_cast %601 : vector<1x1x1x4xf32> to vector<1x4xf32>
    %603 = vector.shape_cast %600 : vector<1x4xf32> to vector<1x1x1x4xf32>
    tpu.vector_store %arg5[%c0_260, %c2_261, %c2_262, %c0_263], %603 {strides = array<i32>} : memref<1x7x7x4xf32, #tpu.memory_space<vmem>>, vector<1x1x1x4xf32>,
    %cst_264 = arith.constant 3.000000e+00 : f32
    %604 = arith.mulf %cst_264, %38 : f32
    %605 = math.floor %604 : f32
    %606 = arith.fptosi %605 : f32 to i32
    %607 = arith.addi %606, %16 : i32
    %c0_i32_265 = arith.constant 0 : i32
    %c16_i32_266 = arith.constant 16 : i32
    %608 = arith.maxsi %c0_i32_265, %607 : i32
    %609 = arith.minsi %c16_i32_266, %608 : i32
    %cst_267 = arith.constant 4.000000e+00 : f32
    %610 = arith.mulf %cst_267, %38 : f32
    %611 = math.ceil %610 : f32
    %612 = arith.fptosi %611 : f32 to i32
    %613 = arith.addi %612, %16 : i32
    %c0_i32_268 = arith.constant 0 : i32
    %c16_i32_269 = arith.constant 16 : i32
    %614 = arith.maxsi %c0_i32_268, %613 : i32
    %615 = arith.minsi %c16_i32_269, %614 : i32
    %616 = vector.broadcast %609 : i32 to vector<16x1xi32>
    %617 = arith.cmpi sge, %39, %616 : vector<16x1xi32>
    %618 = vector.broadcast %615 : i32 to vector<16x1xi32>
    %619 = arith.cmpi slt, %39, %618 : vector<16x1xi32>
    %620 = arith.andi %617, %619 : vector<16x1xi1>
    %cst_270 = arith.constant 0xFF800000 : f32
    %621 = vector.shape_cast %620 : vector<16x1xi1> to vector<16x1xi1>
    %622 = vector.broadcast %621 : vector<16x1xi1> to vector<16x4xi1>
    %623 = vector.broadcast %cst_270 : f32 to vector<16x4xf32>
    %624 = arith.select %622, %513, %623 : vector<16x4xi1>, vector<16x4xf32>
    %cst_271 = arith.constant dense<0xFF800000> : vector<4xf32>
    %625 = vector.multi_reduction <maximumf>, %624, %cst_271 [0] : vector<16x4xf32> to vector<4xf32>
    %626 = vector.shape_cast %625 : vector<4xf32> to vector<1x4xf32>
    %627 = arith.cmpi sgt, %615, %609 : i32
    %628 = arith.andi %508, %627 : i1
    %cst_272 = arith.constant 0.000000e+00 : f32
    %629 = vector.broadcast %cst_272 : f32 to vector<1x4xf32>
    %630 = arith.select %628, %626, %629 : vector<1x4xf32>
    %c0_273 = arith.constant 0 : index
    %c2_274 = arith.constant 2 : index
    %c3_275 = arith.constant 3 : index
    %c0_276 = arith.constant 0 : index
    %631 = vector.load %arg5[%c0_273, %c2_274, %c3_275, %c0_276] : memref<1x7x7x4xf32, #tpu.memory_space<vmem>>, vector<1x1x1x4xf32>
    %632 = vector.shape_cast %631 : vector<1x1x1x4xf32> to vector<1x4xf32>
    %633 = vector.shape_cast %630 : vector<1x4xf32> to vector<1x1x1x4xf32>
    tpu.vector_store %arg5[%c0_273, %c2_274, %c3_275, %c0_276], %633 {strides = array<i32>} : memref<1x7x7x4xf32, #tpu.memory_space<vmem>>, vector<1x1x1x4xf32>,
    %cst_277 = arith.constant 4.000000e+00 : f32
    %634 = arith.mulf %cst_277, %38 : f32
    %635 = math.floor %634 : f32
    %636 = arith.fptosi %635 : f32 to i32
    %637 = arith.addi %636, %16 : i32
    %c0_i32_278 = arith.constant 0 : i32
    %c16_i32_279 = arith.constant 16 : i32
    %638 = arith.maxsi %c0_i32_278, %637 : i32
    %639 = arith.minsi %c16_i32_279, %638 : i32
    %cst_280 = arith.constant 5.000000e+00 : f32
    %640 = arith.mulf %cst_280, %38 : f32
    %641 = math.ceil %640 : f32
    %642 = arith.fptosi %641 : f32 to i32
    %643 = arith.addi %642, %16 : i32
    %c0_i32_281 = arith.constant 0 : i32
    %c16_i32_282 = arith.constant 16 : i32
    %644 = arith.maxsi %c0_i32_281, %643 : i32
    %645 = arith.minsi %c16_i32_282, %644 : i32
    %646 = vector.broadcast %639 : i32 to vector<16x1xi32>
    %647 = arith.cmpi sge, %39, %646 : vector<16x1xi32>
    %648 = vector.broadcast %645 : i32 to vector<16x1xi32>
    %649 = arith.cmpi slt, %39, %648 : vector<16x1xi32>
    %650 = arith.andi %647, %649 : vector<16x1xi1>
    %cst_283 = arith.constant 0xFF800000 : f32
    %651 = vector.shape_cast %650 : vector<16x1xi1> to vector<16x1xi1>
    %652 = vector.broadcast %651 : vector<16x1xi1> to vector<16x4xi1>
    %653 = vector.broadcast %cst_283 : f32 to vector<16x4xf32>
    %654 = arith.select %652, %513, %653 : vector<16x4xi1>, vector<16x4xf32>
    %cst_284 = arith.constant dense<0xFF800000> : vector<4xf32>
    %655 = vector.multi_reduction <maximumf>, %654, %cst_284 [0] : vector<16x4xf32> to vector<4xf32>
    %656 = vector.shape_cast %655 : vector<4xf32> to vector<1x4xf32>
    %657 = arith.cmpi sgt, %645, %639 : i32
    %658 = arith.andi %508, %657 : i1
    %cst_285 = arith.constant 0.000000e+00 : f32
    %659 = vector.broadcast %cst_285 : f32 to vector<1x4xf32>
    %660 = arith.select %658, %656, %659 : vector<1x4xf32>
    %c0_286 = arith.constant 0 : index
    %c2_287 = arith.constant 2 : index
    %c4_288 = arith.constant 4 : index
    %c0_289 = arith.constant 0 : index
    %661 = vector.load %arg5[%c0_286, %c2_287, %c4_288, %c0_289] : memref<1x7x7x4xf32, #tpu.memory_space<vmem>>, vector<1x1x1x4xf32>
    %662 = vector.shape_cast %661 : vector<1x1x1x4xf32> to vector<1x4xf32>
    %663 = vector.shape_cast %660 : vector<1x4xf32> to vector<1x1x1x4xf32>
    tpu.vector_store %arg5[%c0_286, %c2_287, %c4_288, %c0_289], %663 {strides = array<i32>} : memref<1x7x7x4xf32, #tpu.memory_space<vmem>>, vector<1x1x1x4xf32>,
    %cst_290 = arith.constant 5.000000e+00 : f32
    %664 = arith.mulf %cst_290, %38 : f32
    %665 = math.floor %664 : f32
    %666 = arith.fptosi %665 : f32 to i32
    %667 = arith.addi %666, %16 : i32
    %c0_i32_291 = arith.constant 0 : i32
    %c16_i32_292 = arith.constant 16 : i32
    %668 = arith.maxsi %c0_i32_291, %667 : i32
    %669 = arith.minsi %c16_i32_292, %668 : i32
    %cst_293 = arith.constant 6.000000e+00 : f32
    %670 = arith.mulf %cst_293, %38 : f32
    %671 = math.ceil %670 : f32
    %672 = arith.fptosi %671 : f32 to i32
    %673 = arith.addi %672, %16 : i32
    %c0_i32_294 = arith.constant 0 : i32
    %c16_i32_295 = arith.constant 16 : i32
    %674 = arith.maxsi %c0_i32_294, %673 : i32
    %675 = arith.minsi %c16_i32_295, %674 : i32
    %676 = vector.broadcast %669 : i32 to vector<16x1xi32>
    %677 = arith.cmpi sge, %39, %676 : vector<16x1xi32>
    %678 = vector.broadcast %675 : i32 to vector<16x1xi32>
    %679 = arith.cmpi slt, %39, %678 : vector<16x1xi32>
    %680 = arith.andi %677, %679 : vector<16x1xi1>
    %cst_296 = arith.constant 0xFF800000 : f32
    %681 = vector.shape_cast %680 : vector<16x1xi1> to vector<16x1xi1>
    %682 = vector.broadcast %681 : vector<16x1xi1> to vector<16x4xi1>
    %683 = vector.broadcast %cst_296 : f32 to vector<16x4xf32>
    %684 = arith.select %682, %513, %683 : vector<16x4xi1>, vector<16x4xf32>
    %cst_297 = arith.constant dense<0xFF800000> : vector<4xf32>
    %685 = vector.multi_reduction <maximumf>, %684, %cst_297 [0] : vector<16x4xf32> to vector<4xf32>
    %686 = vector.shape_cast %685 : vector<4xf32> to vector<1x4xf32>
    %687 = arith.cmpi sgt, %675, %669 : i32
    %688 = arith.andi %508, %687 : i1
    %cst_298 = arith.constant 0.000000e+00 : f32
    %689 = vector.broadcast %cst_298 : f32 to vector<1x4xf32>
    %690 = arith.select %688, %686, %689 : vector<1x4xf32>
    %c0_299 = arith.constant 0 : index
    %c2_300 = arith.constant 2 : index
    %c5_301 = arith.constant 5 : index
    %c0_302 = arith.constant 0 : index
    %691 = vector.load %arg5[%c0_299, %c2_300, %c5_301, %c0_302] : memref<1x7x7x4xf32, #tpu.memory_space<vmem>>, vector<1x1x1x4xf32>
    %692 = vector.shape_cast %691 : vector<1x1x1x4xf32> to vector<1x4xf32>
    %693 = vector.shape_cast %690 : vector<1x4xf32> to vector<1x1x1x4xf32>
    tpu.vector_store %arg5[%c0_299, %c2_300, %c5_301, %c0_302], %693 {strides = array<i32>} : memref<1x7x7x4xf32, #tpu.memory_space<vmem>>, vector<1x1x1x4xf32>,
    %cst_303 = arith.constant 6.000000e+00 : f32
    %694 = arith.mulf %cst_303, %38 : f32
    %695 = math.floor %694 : f32
    %696 = arith.fptosi %695 : f32 to i32
    %697 = arith.addi %696, %16 : i32
    %c0_i32_304 = arith.constant 0 : i32
    %c16_i32_305 = arith.constant 16 : i32
    %698 = arith.maxsi %c0_i32_304, %697 : i32
    %699 = arith.minsi %c16_i32_305, %698 : i32
    %cst_306 = arith.constant 7.000000e+00 : f32
    %700 = arith.mulf %cst_306, %38 : f32
    %701 = math.ceil %700 : f32
    %702 = arith.fptosi %701 : f32 to i32
    %703 = arith.addi %702, %16 : i32
    %c0_i32_307 = arith.constant 0 : i32
    %c16_i32_308 = arith.constant 16 : i32
    %704 = arith.maxsi %c0_i32_307, %703 : i32
    %705 = arith.minsi %c16_i32_308, %704 : i32
    %706 = vector.broadcast %699 : i32 to vector<16x1xi32>
    %707 = arith.cmpi sge, %39, %706 : vector<16x1xi32>
    %708 = vector.broadcast %705 : i32 to vector<16x1xi32>
    %709 = arith.cmpi slt, %39, %708 : vector<16x1xi32>
    %710 = arith.andi %707, %709 : vector<16x1xi1>
    %cst_309 = arith.constant 0xFF800000 : f32
    %711 = vector.shape_cast %710 : vector<16x1xi1> to vector<16x1xi1>
    %712 = vector.broadcast %711 : vector<16x1xi1> to vector<16x4xi1>
    %713 = vector.broadcast %cst_309 : f32 to vector<16x4xf32>
    %714 = arith.select %712, %513, %713 : vector<16x4xi1>, vector<16x4xf32>
    %cst_310 = arith.constant dense<0xFF800000> : vector<4xf32>
    %715 = vector.multi_reduction <maximumf>, %714, %cst_310 [0] : vector<16x4xf32> to vector<4xf32>
    %716 = vector.shape_cast %715 : vector<4xf32> to vector<1x4xf32>
    %717 = arith.cmpi sgt, %705, %699 : i32
    %718 = arith.andi %508, %717 : i1
    %cst_311 = arith.constant 0.000000e+00 : f32
    %719 = vector.broadcast %cst_311 : f32 to vector<1x4xf32>
    %720 = arith.select %718, %716, %719 : vector<1x4xf32>
    %c0_312 = arith.constant 0 : index
    %c2_313 = arith.constant 2 : index
    %c6_314 = arith.constant 6 : index
    %c0_315 = arith.constant 0 : index
    %721 = vector.load %arg5[%c0_312, %c2_313, %c6_314, %c0_315] : memref<1x7x7x4xf32, #tpu.memory_space<vmem>>, vector<1x1x1x4xf32>
    %722 = vector.shape_cast %721 : vector<1x1x1x4xf32> to vector<1x4xf32>
    %723 = vector.shape_cast %720 : vector<1x4xf32> to vector<1x1x1x4xf32>
    tpu.vector_store %arg5[%c0_312, %c2_313, %c6_314, %c0_315], %723 {strides = array<i32>} : memref<1x7x7x4xf32, #tpu.memory_space<vmem>>, vector<1x1x1x4xf32>,
    %cst_316 = arith.constant 3.000000e+00 : f32
    %724 = arith.mulf %cst_316, %36 : f32
    %725 = math.floor %724 : f32
    %726 = arith.fptosi %725 : f32 to i32
    %727 = arith.addi %726, %20 : i32
    %c0_i32_317 = arith.constant 0 : i32
    %c16_i32_318 = arith.constant 16 : i32
    %728 = arith.maxsi %c0_i32_317, %727 : i32
    %729 = arith.minsi %c16_i32_318, %728 : i32
    %cst_319 = arith.constant 4.000000e+00 : f32
    %730 = arith.mulf %cst_319, %36 : f32
    %731 = math.ceil %730 : f32
    %732 = arith.fptosi %731 : f32 to i32
    %733 = arith.addi %732, %20 : i32
    %c0_i32_320 = arith.constant 0 : i32
    %c16_i32_321 = arith.constant 16 : i32
    %734 = arith.maxsi %c0_i32_320, %733 : i32
    %735 = arith.minsi %c16_i32_321, %734 : i32
    %736 = arith.cmpi sgt, %735, %729 : i32
    %cst_322 = arith.constant 0xFF800000 : f32
    %737 = vector.broadcast %cst_322 : f32 to vector<16x4xf32>
    %c0_323 = arith.constant 0 : index
    %c0_324 = arith.constant 0 : index
    %738 = vector.load %arg6[%c0_323, %c0_324] : memref<16x4xf32, #tpu.memory_space<vmem>>, vector<16x4xf32>
    tpu.vector_store %arg6[%c0_323, %c0_324], %737 {strides = array<i32>} : memref<16x4xf32, #tpu.memory_space<vmem>>, vector<16x4xf32>,
    %c0_i32_325 = arith.constant 0 : i32
    %739 = arith.subi %735, %729 : i32
    %740 = arith.addi %729, %739 : i32
    %c1_i32_326 = arith.constant 1 : i32
    scf.for %arg7 = %729 to %740 step %c1_i32_326  : i32 {
      %c0_732 = arith.constant 0 : index
      %c0_733 = arith.constant 0 : index
      %1636 = vector.load %arg6[%c0_732, %c0_733] : memref<16x4xf32, #tpu.memory_space<vmem>>, vector<16x4xf32>
      %c0_734 = arith.constant 0 : index
      %1637 = arith.index_cast %arg7 : i32 to index
      %c0_735 = arith.constant 0 : index
      %c0_736 = arith.constant 0 : index
      %1638 = vector.load %arg4[%c0_734, %1637, %c0_735, %c0_736] : memref<1x16x16x4xf32, #tpu.memory_space<vmem>>, vector<1x1x16x4xf32>
      %1639 = vector.shape_cast %1638 : vector<1x1x16x4xf32> to vector<16x4xf32>
      %1640 = arith.maximumf %1636, %1639 : vector<16x4xf32>
      %c0_737 = arith.constant 0 : index
      %c0_738 = arith.constant 0 : index
      %1641 = vector.load %arg6[%c0_737, %c0_738] : memref<16x4xf32, #tpu.memory_space<vmem>>, vector<16x4xf32>
      tpu.vector_store %arg6[%c0_737, %c0_738], %1640 {strides = array<i32>} : memref<16x4xf32, #tpu.memory_space<vmem>>, vector<16x4xf32>,
    }
    %c0_327 = arith.constant 0 : index
    %c0_328 = arith.constant 0 : index
    %741 = vector.load %arg6[%c0_327, %c0_328] : memref<16x4xf32, #tpu.memory_space<vmem>>, vector<16x4xf32>
    %cst_329 = arith.constant 0.000000e+00 : f32
    %742 = arith.mulf %cst_329, %38 : f32
    %743 = math.floor %742 : f32
    %744 = arith.fptosi %743 : f32 to i32
    %745 = arith.addi %744, %16 : i32
    %c0_i32_330 = arith.constant 0 : i32
    %c16_i32_331 = arith.constant 16 : i32
    %746 = arith.maxsi %c0_i32_330, %745 : i32
    %747 = arith.minsi %c16_i32_331, %746 : i32
    %cst_332 = arith.constant 1.000000e+00 : f32
    %748 = arith.mulf %cst_332, %38 : f32
    %749 = math.ceil %748 : f32
    %750 = arith.fptosi %749 : f32 to i32
    %751 = arith.addi %750, %16 : i32
    %c0_i32_333 = arith.constant 0 : i32
    %c16_i32_334 = arith.constant 16 : i32
    %752 = arith.maxsi %c0_i32_333, %751 : i32
    %753 = arith.minsi %c16_i32_334, %752 : i32
    %754 = vector.broadcast %747 : i32 to vector<16x1xi32>
    %755 = arith.cmpi sge, %39, %754 : vector<16x1xi32>
    %756 = vector.broadcast %753 : i32 to vector<16x1xi32>
    %757 = arith.cmpi slt, %39, %756 : vector<16x1xi32>
    %758 = arith.andi %755, %757 : vector<16x1xi1>
    %cst_335 = arith.constant 0xFF800000 : f32
    %759 = vector.shape_cast %758 : vector<16x1xi1> to vector<16x1xi1>
    %760 = vector.broadcast %759 : vector<16x1xi1> to vector<16x4xi1>
    %761 = vector.broadcast %cst_335 : f32 to vector<16x4xf32>
    %762 = arith.select %760, %741, %761 : vector<16x4xi1>, vector<16x4xf32>
    %cst_336 = arith.constant dense<0xFF800000> : vector<4xf32>
    %763 = vector.multi_reduction <maximumf>, %762, %cst_336 [0] : vector<16x4xf32> to vector<4xf32>
    %764 = vector.shape_cast %763 : vector<4xf32> to vector<1x4xf32>
    %765 = arith.cmpi sgt, %753, %747 : i32
    %766 = arith.andi %736, %765 : i1
    %cst_337 = arith.constant 0.000000e+00 : f32
    %767 = vector.broadcast %cst_337 : f32 to vector<1x4xf32>
    %768 = arith.select %766, %764, %767 : vector<1x4xf32>
    %c0_338 = arith.constant 0 : index
    %c3_339 = arith.constant 3 : index
    %c0_340 = arith.constant 0 : index
    %c0_341 = arith.constant 0 : index
    %769 = vector.load %arg5[%c0_338, %c3_339, %c0_340, %c0_341] : memref<1x7x7x4xf32, #tpu.memory_space<vmem>>, vector<1x1x1x4xf32>
    %770 = vector.shape_cast %769 : vector<1x1x1x4xf32> to vector<1x4xf32>
    %771 = vector.shape_cast %768 : vector<1x4xf32> to vector<1x1x1x4xf32>
    tpu.vector_store %arg5[%c0_338, %c3_339, %c0_340, %c0_341], %771 {strides = array<i32>} : memref<1x7x7x4xf32, #tpu.memory_space<vmem>>, vector<1x1x1x4xf32>,
    %cst_342 = arith.constant 1.000000e+00 : f32
    %772 = arith.mulf %cst_342, %38 : f32
    %773 = math.floor %772 : f32
    %774 = arith.fptosi %773 : f32 to i32
    %775 = arith.addi %774, %16 : i32
    %c0_i32_343 = arith.constant 0 : i32
    %c16_i32_344 = arith.constant 16 : i32
    %776 = arith.maxsi %c0_i32_343, %775 : i32
    %777 = arith.minsi %c16_i32_344, %776 : i32
    %cst_345 = arith.constant 2.000000e+00 : f32
    %778 = arith.mulf %cst_345, %38 : f32
    %779 = math.ceil %778 : f32
    %780 = arith.fptosi %779 : f32 to i32
    %781 = arith.addi %780, %16 : i32
    %c0_i32_346 = arith.constant 0 : i32
    %c16_i32_347 = arith.constant 16 : i32
    %782 = arith.maxsi %c0_i32_346, %781 : i32
    %783 = arith.minsi %c16_i32_347, %782 : i32
    %784 = vector.broadcast %777 : i32 to vector<16x1xi32>
    %785 = arith.cmpi sge, %39, %784 : vector<16x1xi32>
    %786 = vector.broadcast %783 : i32 to vector<16x1xi32>
    %787 = arith.cmpi slt, %39, %786 : vector<16x1xi32>
    %788 = arith.andi %785, %787 : vector<16x1xi1>
    %cst_348 = arith.constant 0xFF800000 : f32
    %789 = vector.shape_cast %788 : vector<16x1xi1> to vector<16x1xi1>
    %790 = vector.broadcast %789 : vector<16x1xi1> to vector<16x4xi1>
    %791 = vector.broadcast %cst_348 : f32 to vector<16x4xf32>
    %792 = arith.select %790, %741, %791 : vector<16x4xi1>, vector<16x4xf32>
    %cst_349 = arith.constant dense<0xFF800000> : vector<4xf32>
    %793 = vector.multi_reduction <maximumf>, %792, %cst_349 [0] : vector<16x4xf32> to vector<4xf32>
    %794 = vector.shape_cast %793 : vector<4xf32> to vector<1x4xf32>
    %795 = arith.cmpi sgt, %783, %777 : i32
    %796 = arith.andi %736, %795 : i1
    %cst_350 = arith.constant 0.000000e+00 : f32
    %797 = vector.broadcast %cst_350 : f32 to vector<1x4xf32>
    %798 = arith.select %796, %794, %797 : vector<1x4xf32>
    %c0_351 = arith.constant 0 : index
    %c3_352 = arith.constant 3 : index
    %c1_353 = arith.constant 1 : index
    %c0_354 = arith.constant 0 : index
    %799 = vector.load %arg5[%c0_351, %c3_352, %c1_353, %c0_354] : memref<1x7x7x4xf32, #tpu.memory_space<vmem>>, vector<1x1x1x4xf32>
    %800 = vector.shape_cast %799 : vector<1x1x1x4xf32> to vector<1x4xf32>
    %801 = vector.shape_cast %798 : vector<1x4xf32> to vector<1x1x1x4xf32>
    tpu.vector_store %arg5[%c0_351, %c3_352, %c1_353, %c0_354], %801 {strides = array<i32>} : memref<1x7x7x4xf32, #tpu.memory_space<vmem>>, vector<1x1x1x4xf32>,
    %cst_355 = arith.constant 2.000000e+00 : f32
    %802 = arith.mulf %cst_355, %38 : f32
    %803 = math.floor %802 : f32
    %804 = arith.fptosi %803 : f32 to i32
    %805 = arith.addi %804, %16 : i32
    %c0_i32_356 = arith.constant 0 : i32
    %c16_i32_357 = arith.constant 16 : i32
    %806 = arith.maxsi %c0_i32_356, %805 : i32
    %807 = arith.minsi %c16_i32_357, %806 : i32
    %cst_358 = arith.constant 3.000000e+00 : f32
    %808 = arith.mulf %cst_358, %38 : f32
    %809 = math.ceil %808 : f32
    %810 = arith.fptosi %809 : f32 to i32
    %811 = arith.addi %810, %16 : i32
    %c0_i32_359 = arith.constant 0 : i32
    %c16_i32_360 = arith.constant 16 : i32
    %812 = arith.maxsi %c0_i32_359, %811 : i32
    %813 = arith.minsi %c16_i32_360, %812 : i32
    %814 = vector.broadcast %807 : i32 to vector<16x1xi32>
    %815 = arith.cmpi sge, %39, %814 : vector<16x1xi32>
    %816 = vector.broadcast %813 : i32 to vector<16x1xi32>
    %817 = arith.cmpi slt, %39, %816 : vector<16x1xi32>
    %818 = arith.andi %815, %817 : vector<16x1xi1>
    %cst_361 = arith.constant 0xFF800000 : f32
    %819 = vector.shape_cast %818 : vector<16x1xi1> to vector<16x1xi1>
    %820 = vector.broadcast %819 : vector<16x1xi1> to vector<16x4xi1>
    %821 = vector.broadcast %cst_361 : f32 to vector<16x4xf32>
    %822 = arith.select %820, %741, %821 : vector<16x4xi1>, vector<16x4xf32>
    %cst_362 = arith.constant dense<0xFF800000> : vector<4xf32>
    %823 = vector.multi_reduction <maximumf>, %822, %cst_362 [0] : vector<16x4xf32> to vector<4xf32>
    %824 = vector.shape_cast %823 : vector<4xf32> to vector<1x4xf32>
    %825 = arith.cmpi sgt, %813, %807 : i32
    %826 = arith.andi %736, %825 : i1
    %cst_363 = arith.constant 0.000000e+00 : f32
    %827 = vector.broadcast %cst_363 : f32 to vector<1x4xf32>
    %828 = arith.select %826, %824, %827 : vector<1x4xf32>
    %c0_364 = arith.constant 0 : index
    %c3_365 = arith.constant 3 : index
    %c2_366 = arith.constant 2 : index
    %c0_367 = arith.constant 0 : index
    %829 = vector.load %arg5[%c0_364, %c3_365, %c2_366, %c0_367] : memref<1x7x7x4xf32, #tpu.memory_space<vmem>>, vector<1x1x1x4xf32>
    %830 = vector.shape_cast %829 : vector<1x1x1x4xf32> to vector<1x4xf32>
    %831 = vector.shape_cast %828 : vector<1x4xf32> to vector<1x1x1x4xf32>
    tpu.vector_store %arg5[%c0_364, %c3_365, %c2_366, %c0_367], %831 {strides = array<i32>} : memref<1x7x7x4xf32, #tpu.memory_space<vmem>>, vector<1x1x1x4xf32>,
    %cst_368 = arith.constant 3.000000e+00 : f32
    %832 = arith.mulf %cst_368, %38 : f32
    %833 = math.floor %832 : f32
    %834 = arith.fptosi %833 : f32 to i32
    %835 = arith.addi %834, %16 : i32
    %c0_i32_369 = arith.constant 0 : i32
    %c16_i32_370 = arith.constant 16 : i32
    %836 = arith.maxsi %c0_i32_369, %835 : i32
    %837 = arith.minsi %c16_i32_370, %836 : i32
    %cst_371 = arith.constant 4.000000e+00 : f32
    %838 = arith.mulf %cst_371, %38 : f32
    %839 = math.ceil %838 : f32
    %840 = arith.fptosi %839 : f32 to i32
    %841 = arith.addi %840, %16 : i32
    %c0_i32_372 = arith.constant 0 : i32
    %c16_i32_373 = arith.constant 16 : i32
    %842 = arith.maxsi %c0_i32_372, %841 : i32
    %843 = arith.minsi %c16_i32_373, %842 : i32
    %844 = vector.broadcast %837 : i32 to vector<16x1xi32>
    %845 = arith.cmpi sge, %39, %844 : vector<16x1xi32>
    %846 = vector.broadcast %843 : i32 to vector<16x1xi32>
    %847 = arith.cmpi slt, %39, %846 : vector<16x1xi32>
    %848 = arith.andi %845, %847 : vector<16x1xi1>
    %cst_374 = arith.constant 0xFF800000 : f32
    %849 = vector.shape_cast %848 : vector<16x1xi1> to vector<16x1xi1>
    %850 = vector.broadcast %849 : vector<16x1xi1> to vector<16x4xi1>
    %851 = vector.broadcast %cst_374 : f32 to vector<16x4xf32>
    %852 = arith.select %850, %741, %851 : vector<16x4xi1>, vector<16x4xf32>
    %cst_375 = arith.constant dense<0xFF800000> : vector<4xf32>
    %853 = vector.multi_reduction <maximumf>, %852, %cst_375 [0] : vector<16x4xf32> to vector<4xf32>
    %854 = vector.shape_cast %853 : vector<4xf32> to vector<1x4xf32>
    %855 = arith.cmpi sgt, %843, %837 : i32
    %856 = arith.andi %736, %855 : i1
    %cst_376 = arith.constant 0.000000e+00 : f32
    %857 = vector.broadcast %cst_376 : f32 to vector<1x4xf32>
    %858 = arith.select %856, %854, %857 : vector<1x4xf32>
    %c0_377 = arith.constant 0 : index
    %c3_378 = arith.constant 3 : index
    %c3_379 = arith.constant 3 : index
    %c0_380 = arith.constant 0 : index
    %859 = vector.load %arg5[%c0_377, %c3_378, %c3_379, %c0_380] : memref<1x7x7x4xf32, #tpu.memory_space<vmem>>, vector<1x1x1x4xf32>
    %860 = vector.shape_cast %859 : vector<1x1x1x4xf32> to vector<1x4xf32>
    %861 = vector.shape_cast %858 : vector<1x4xf32> to vector<1x1x1x4xf32>
    tpu.vector_store %arg5[%c0_377, %c3_378, %c3_379, %c0_380], %861 {strides = array<i32>} : memref<1x7x7x4xf32, #tpu.memory_space<vmem>>, vector<1x1x1x4xf32>,
    %cst_381 = arith.constant 4.000000e+00 : f32
    %862 = arith.mulf %cst_381, %38 : f32
    %863 = math.floor %862 : f32
    %864 = arith.fptosi %863 : f32 to i32
    %865 = arith.addi %864, %16 : i32
    %c0_i32_382 = arith.constant 0 : i32
    %c16_i32_383 = arith.constant 16 : i32
    %866 = arith.maxsi %c0_i32_382, %865 : i32
    %867 = arith.minsi %c16_i32_383, %866 : i32
    %cst_384 = arith.constant 5.000000e+00 : f32
    %868 = arith.mulf %cst_384, %38 : f32
    %869 = math.ceil %868 : f32
    %870 = arith.fptosi %869 : f32 to i32
    %871 = arith.addi %870, %16 : i32
    %c0_i32_385 = arith.constant 0 : i32
    %c16_i32_386 = arith.constant 16 : i32
    %872 = arith.maxsi %c0_i32_385, %871 : i32
    %873 = arith.minsi %c16_i32_386, %872 : i32
    %874 = vector.broadcast %867 : i32 to vector<16x1xi32>
    %875 = arith.cmpi sge, %39, %874 : vector<16x1xi32>
    %876 = vector.broadcast %873 : i32 to vector<16x1xi32>
    %877 = arith.cmpi slt, %39, %876 : vector<16x1xi32>
    %878 = arith.andi %875, %877 : vector<16x1xi1>
    %cst_387 = arith.constant 0xFF800000 : f32
    %879 = vector.shape_cast %878 : vector<16x1xi1> to vector<16x1xi1>
    %880 = vector.broadcast %879 : vector<16x1xi1> to vector<16x4xi1>
    %881 = vector.broadcast %cst_387 : f32 to vector<16x4xf32>
    %882 = arith.select %880, %741, %881 : vector<16x4xi1>, vector<16x4xf32>
    %cst_388 = arith.constant dense<0xFF800000> : vector<4xf32>
    %883 = vector.multi_reduction <maximumf>, %882, %cst_388 [0] : vector<16x4xf32> to vector<4xf32>
    %884 = vector.shape_cast %883 : vector<4xf32> to vector<1x4xf32>
    %885 = arith.cmpi sgt, %873, %867 : i32
    %886 = arith.andi %736, %885 : i1
    %cst_389 = arith.constant 0.000000e+00 : f32
    %887 = vector.broadcast %cst_389 : f32 to vector<1x4xf32>
    %888 = arith.select %886, %884, %887 : vector<1x4xf32>
    %c0_390 = arith.constant 0 : index
    %c3_391 = arith.constant 3 : index
    %c4_392 = arith.constant 4 : index
    %c0_393 = arith.constant 0 : index
    %889 = vector.load %arg5[%c0_390, %c3_391, %c4_392, %c0_393] : memref<1x7x7x4xf32, #tpu.memory_space<vmem>>, vector<1x1x1x4xf32>
    %890 = vector.shape_cast %889 : vector<1x1x1x4xf32> to vector<1x4xf32>
    %891 = vector.shape_cast %888 : vector<1x4xf32> to vector<1x1x1x4xf32>
    tpu.vector_store %arg5[%c0_390, %c3_391, %c4_392, %c0_393], %891 {strides = array<i32>} : memref<1x7x7x4xf32, #tpu.memory_space<vmem>>, vector<1x1x1x4xf32>,
    %cst_394 = arith.constant 5.000000e+00 : f32
    %892 = arith.mulf %cst_394, %38 : f32
    %893 = math.floor %892 : f32
    %894 = arith.fptosi %893 : f32 to i32
    %895 = arith.addi %894, %16 : i32
    %c0_i32_395 = arith.constant 0 : i32
    %c16_i32_396 = arith.constant 16 : i32
    %896 = arith.maxsi %c0_i32_395, %895 : i32
    %897 = arith.minsi %c16_i32_396, %896 : i32
    %cst_397 = arith.constant 6.000000e+00 : f32
    %898 = arith.mulf %cst_397, %38 : f32
    %899 = math.ceil %898 : f32
    %900 = arith.fptosi %899 : f32 to i32
    %901 = arith.addi %900, %16 : i32
    %c0_i32_398 = arith.constant 0 : i32
    %c16_i32_399 = arith.constant 16 : i32
    %902 = arith.maxsi %c0_i32_398, %901 : i32
    %903 = arith.minsi %c16_i32_399, %902 : i32
    %904 = vector.broadcast %897 : i32 to vector<16x1xi32>
    %905 = arith.cmpi sge, %39, %904 : vector<16x1xi32>
    %906 = vector.broadcast %903 : i32 to vector<16x1xi32>
    %907 = arith.cmpi slt, %39, %906 : vector<16x1xi32>
    %908 = arith.andi %905, %907 : vector<16x1xi1>
    %cst_400 = arith.constant 0xFF800000 : f32
    %909 = vector.shape_cast %908 : vector<16x1xi1> to vector<16x1xi1>
    %910 = vector.broadcast %909 : vector<16x1xi1> to vector<16x4xi1>
    %911 = vector.broadcast %cst_400 : f32 to vector<16x4xf32>
    %912 = arith.select %910, %741, %911 : vector<16x4xi1>, vector<16x4xf32>
    %cst_401 = arith.constant dense<0xFF800000> : vector<4xf32>
    %913 = vector.multi_reduction <maximumf>, %912, %cst_401 [0] : vector<16x4xf32> to vector<4xf32>
    %914 = vector.shape_cast %913 : vector<4xf32> to vector<1x4xf32>
    %915 = arith.cmpi sgt, %903, %897 : i32
    %916 = arith.andi %736, %915 : i1
    %cst_402 = arith.constant 0.000000e+00 : f32
    %917 = vector.broadcast %cst_402 : f32 to vector<1x4xf32>
    %918 = arith.select %916, %914, %917 : vector<1x4xf32>
    %c0_403 = arith.constant 0 : index
    %c3_404 = arith.constant 3 : index
    %c5_405 = arith.constant 5 : index
    %c0_406 = arith.constant 0 : index
    %919 = vector.load %arg5[%c0_403, %c3_404, %c5_405, %c0_406] : memref<1x7x7x4xf32, #tpu.memory_space<vmem>>, vector<1x1x1x4xf32>
    %920 = vector.shape_cast %919 : vector<1x1x1x4xf32> to vector<1x4xf32>
    %921 = vector.shape_cast %918 : vector<1x4xf32> to vector<1x1x1x4xf32>
    tpu.vector_store %arg5[%c0_403, %c3_404, %c5_405, %c0_406], %921 {strides = array<i32>} : memref<1x7x7x4xf32, #tpu.memory_space<vmem>>, vector<1x1x1x4xf32>,
    %cst_407 = arith.constant 6.000000e+00 : f32
    %922 = arith.mulf %cst_407, %38 : f32
    %923 = math.floor %922 : f32
    %924 = arith.fptosi %923 : f32 to i32
    %925 = arith.addi %924, %16 : i32
    %c0_i32_408 = arith.constant 0 : i32
    %c16_i32_409 = arith.constant 16 : i32
    %926 = arith.maxsi %c0_i32_408, %925 : i32
    %927 = arith.minsi %c16_i32_409, %926 : i32
    %cst_410 = arith.constant 7.000000e+00 : f32
    %928 = arith.mulf %cst_410, %38 : f32
    %929 = math.ceil %928 : f32
    %930 = arith.fptosi %929 : f32 to i32
    %931 = arith.addi %930, %16 : i32
    %c0_i32_411 = arith.constant 0 : i32
    %c16_i32_412 = arith.constant 16 : i32
    %932 = arith.maxsi %c0_i32_411, %931 : i32
    %933 = arith.minsi %c16_i32_412, %932 : i32
    %934 = vector.broadcast %927 : i32 to vector<16x1xi32>
    %935 = arith.cmpi sge, %39, %934 : vector<16x1xi32>
    %936 = vector.broadcast %933 : i32 to vector<16x1xi32>
    %937 = arith.cmpi slt, %39, %936 : vector<16x1xi32>
    %938 = arith.andi %935, %937 : vector<16x1xi1>
    %cst_413 = arith.constant 0xFF800000 : f32
    %939 = vector.shape_cast %938 : vector<16x1xi1> to vector<16x1xi1>
    %940 = vector.broadcast %939 : vector<16x1xi1> to vector<16x4xi1>
    %941 = vector.broadcast %cst_413 : f32 to vector<16x4xf32>
    %942 = arith.select %940, %741, %941 : vector<16x4xi1>, vector<16x4xf32>
    %cst_414 = arith.constant dense<0xFF800000> : vector<4xf32>
    %943 = vector.multi_reduction <maximumf>, %942, %cst_414 [0] : vector<16x4xf32> to vector<4xf32>
    %944 = vector.shape_cast %943 : vector<4xf32> to vector<1x4xf32>
    %945 = arith.cmpi sgt, %933, %927 : i32
    %946 = arith.andi %736, %945 : i1
    %cst_415 = arith.constant 0.000000e+00 : f32
    %947 = vector.broadcast %cst_415 : f32 to vector<1x4xf32>
    %948 = arith.select %946, %944, %947 : vector<1x4xf32>
    %c0_416 = arith.constant 0 : index
    %c3_417 = arith.constant 3 : index
    %c6_418 = arith.constant 6 : index
    %c0_419 = arith.constant 0 : index
    %949 = vector.load %arg5[%c0_416, %c3_417, %c6_418, %c0_419] : memref<1x7x7x4xf32, #tpu.memory_space<vmem>>, vector<1x1x1x4xf32>
    %950 = vector.shape_cast %949 : vector<1x1x1x4xf32> to vector<1x4xf32>
    %951 = vector.shape_cast %948 : vector<1x4xf32> to vector<1x1x1x4xf32>
    tpu.vector_store %arg5[%c0_416, %c3_417, %c6_418, %c0_419], %951 {strides = array<i32>} : memref<1x7x7x4xf32, #tpu.memory_space<vmem>>, vector<1x1x1x4xf32>,
    %cst_420 = arith.constant 4.000000e+00 : f32
    %952 = arith.mulf %cst_420, %36 : f32
    %953 = math.floor %952 : f32
    %954 = arith.fptosi %953 : f32 to i32
    %955 = arith.addi %954, %20 : i32
    %c0_i32_421 = arith.constant 0 : i32
    %c16_i32_422 = arith.constant 16 : i32
    %956 = arith.maxsi %c0_i32_421, %955 : i32
    %957 = arith.minsi %c16_i32_422, %956 : i32
    %cst_423 = arith.constant 5.000000e+00 : f32
    %958 = arith.mulf %cst_423, %36 : f32
    %959 = math.ceil %958 : f32
    %960 = arith.fptosi %959 : f32 to i32
    %961 = arith.addi %960, %20 : i32
    %c0_i32_424 = arith.constant 0 : i32
    %c16_i32_425 = arith.constant 16 : i32
    %962 = arith.maxsi %c0_i32_424, %961 : i32
    %963 = arith.minsi %c16_i32_425, %962 : i32
    %964 = arith.cmpi sgt, %963, %957 : i32
    %cst_426 = arith.constant 0xFF800000 : f32
    %965 = vector.broadcast %cst_426 : f32 to vector<16x4xf32>
    %c0_427 = arith.constant 0 : index
    %c0_428 = arith.constant 0 : index
    %966 = vector.load %arg6[%c0_427, %c0_428] : memref<16x4xf32, #tpu.memory_space<vmem>>, vector<16x4xf32>
    tpu.vector_store %arg6[%c0_427, %c0_428], %965 {strides = array<i32>} : memref<16x4xf32, #tpu.memory_space<vmem>>, vector<16x4xf32>,
    %c0_i32_429 = arith.constant 0 : i32
    %967 = arith.subi %963, %957 : i32
    %968 = arith.addi %957, %967 : i32
    %c1_i32_430 = arith.constant 1 : i32
    scf.for %arg7 = %957 to %968 step %c1_i32_430  : i32 {
      %c0_732 = arith.constant 0 : index
      %c0_733 = arith.constant 0 : index
      %1636 = vector.load %arg6[%c0_732, %c0_733] : memref<16x4xf32, #tpu.memory_space<vmem>>, vector<16x4xf32>
      %c0_734 = arith.constant 0 : index
      %1637 = arith.index_cast %arg7 : i32 to index
      %c0_735 = arith.constant 0 : index
      %c0_736 = arith.constant 0 : index
      %1638 = vector.load %arg4[%c0_734, %1637, %c0_735, %c0_736] : memref<1x16x16x4xf32, #tpu.memory_space<vmem>>, vector<1x1x16x4xf32>
      %1639 = vector.shape_cast %1638 : vector<1x1x16x4xf32> to vector<16x4xf32>
      %1640 = arith.maximumf %1636, %1639 : vector<16x4xf32>
      %c0_737 = arith.constant 0 : index
      %c0_738 = arith.constant 0 : index
      %1641 = vector.load %arg6[%c0_737, %c0_738] : memref<16x4xf32, #tpu.memory_space<vmem>>, vector<16x4xf32>
      tpu.vector_store %arg6[%c0_737, %c0_738], %1640 {strides = array<i32>} : memref<16x4xf32, #tpu.memory_space<vmem>>, vector<16x4xf32>,
    }
    %c0_431 = arith.constant 0 : index
    %c0_432 = arith.constant 0 : index
    %969 = vector.load %arg6[%c0_431, %c0_432] : memref<16x4xf32, #tpu.memory_space<vmem>>, vector<16x4xf32>
    %cst_433 = arith.constant 0.000000e+00 : f32
    %970 = arith.mulf %cst_433, %38 : f32
    %971 = math.floor %970 : f32
    %972 = arith.fptosi %971 : f32 to i32
    %973 = arith.addi %972, %16 : i32
    %c0_i32_434 = arith.constant 0 : i32
    %c16_i32_435 = arith.constant 16 : i32
    %974 = arith.maxsi %c0_i32_434, %973 : i32
    %975 = arith.minsi %c16_i32_435, %974 : i32
    %cst_436 = arith.constant 1.000000e+00 : f32
    %976 = arith.mulf %cst_436, %38 : f32
    %977 = math.ceil %976 : f32
    %978 = arith.fptosi %977 : f32 to i32
    %979 = arith.addi %978, %16 : i32
    %c0_i32_437 = arith.constant 0 : i32
    %c16_i32_438 = arith.constant 16 : i32
    %980 = arith.maxsi %c0_i32_437, %979 : i32
    %981 = arith.minsi %c16_i32_438, %980 : i32
    %982 = vector.broadcast %975 : i32 to vector<16x1xi32>
    %983 = arith.cmpi sge, %39, %982 : vector<16x1xi32>
    %984 = vector.broadcast %981 : i32 to vector<16x1xi32>
    %985 = arith.cmpi slt, %39, %984 : vector<16x1xi32>
    %986 = arith.andi %983, %985 : vector<16x1xi1>
    %cst_439 = arith.constant 0xFF800000 : f32
    %987 = vector.shape_cast %986 : vector<16x1xi1> to vector<16x1xi1>
    %988 = vector.broadcast %987 : vector<16x1xi1> to vector<16x4xi1>
    %989 = vector.broadcast %cst_439 : f32 to vector<16x4xf32>
    %990 = arith.select %988, %969, %989 : vector<16x4xi1>, vector<16x4xf32>
    %cst_440 = arith.constant dense<0xFF800000> : vector<4xf32>
    %991 = vector.multi_reduction <maximumf>, %990, %cst_440 [0] : vector<16x4xf32> to vector<4xf32>
    %992 = vector.shape_cast %991 : vector<4xf32> to vector<1x4xf32>
    %993 = arith.cmpi sgt, %981, %975 : i32
    %994 = arith.andi %964, %993 : i1
    %cst_441 = arith.constant 0.000000e+00 : f32
    %995 = vector.broadcast %cst_441 : f32 to vector<1x4xf32>
    %996 = arith.select %994, %992, %995 : vector<1x4xf32>
    %c0_442 = arith.constant 0 : index
    %c4_443 = arith.constant 4 : index
    %c0_444 = arith.constant 0 : index
    %c0_445 = arith.constant 0 : index
    %997 = vector.load %arg5[%c0_442, %c4_443, %c0_444, %c0_445] : memref<1x7x7x4xf32, #tpu.memory_space<vmem>>, vector<1x1x1x4xf32>
    %998 = vector.shape_cast %997 : vector<1x1x1x4xf32> to vector<1x4xf32>
    %999 = vector.shape_cast %996 : vector<1x4xf32> to vector<1x1x1x4xf32>
    tpu.vector_store %arg5[%c0_442, %c4_443, %c0_444, %c0_445], %999 {strides = array<i32>} : memref<1x7x7x4xf32, #tpu.memory_space<vmem>>, vector<1x1x1x4xf32>,
    %cst_446 = arith.constant 1.000000e+00 : f32
    %1000 = arith.mulf %cst_446, %38 : f32
    %1001 = math.floor %1000 : f32
    %1002 = arith.fptosi %1001 : f32 to i32
    %1003 = arith.addi %1002, %16 : i32
    %c0_i32_447 = arith.constant 0 : i32
    %c16_i32_448 = arith.constant 16 : i32
    %1004 = arith.maxsi %c0_i32_447, %1003 : i32
    %1005 = arith.minsi %c16_i32_448, %1004 : i32
    %cst_449 = arith.constant 2.000000e+00 : f32
    %1006 = arith.mulf %cst_449, %38 : f32
    %1007 = math.ceil %1006 : f32
    %1008 = arith.fptosi %1007 : f32 to i32
    %1009 = arith.addi %1008, %16 : i32
    %c0_i32_450 = arith.constant 0 : i32
    %c16_i32_451 = arith.constant 16 : i32
    %1010 = arith.maxsi %c0_i32_450, %1009 : i32
    %1011 = arith.minsi %c16_i32_451, %1010 : i32
    %1012 = vector.broadcast %1005 : i32 to vector<16x1xi32>
    %1013 = arith.cmpi sge, %39, %1012 : vector<16x1xi32>
    %1014 = vector.broadcast %1011 : i32 to vector<16x1xi32>
    %1015 = arith.cmpi slt, %39, %1014 : vector<16x1xi32>
    %1016 = arith.andi %1013, %1015 : vector<16x1xi1>
    %cst_452 = arith.constant 0xFF800000 : f32
    %1017 = vector.shape_cast %1016 : vector<16x1xi1> to vector<16x1xi1>
    %1018 = vector.broadcast %1017 : vector<16x1xi1> to vector<16x4xi1>
    %1019 = vector.broadcast %cst_452 : f32 to vector<16x4xf32>
    %1020 = arith.select %1018, %969, %1019 : vector<16x4xi1>, vector<16x4xf32>
    %cst_453 = arith.constant dense<0xFF800000> : vector<4xf32>
    %1021 = vector.multi_reduction <maximumf>, %1020, %cst_453 [0] : vector<16x4xf32> to vector<4xf32>
    %1022 = vector.shape_cast %1021 : vector<4xf32> to vector<1x4xf32>
    %1023 = arith.cmpi sgt, %1011, %1005 : i32
    %1024 = arith.andi %964, %1023 : i1
    %cst_454 = arith.constant 0.000000e+00 : f32
    %1025 = vector.broadcast %cst_454 : f32 to vector<1x4xf32>
    %1026 = arith.select %1024, %1022, %1025 : vector<1x4xf32>
    %c0_455 = arith.constant 0 : index
    %c4_456 = arith.constant 4 : index
    %c1_457 = arith.constant 1 : index
    %c0_458 = arith.constant 0 : index
    %1027 = vector.load %arg5[%c0_455, %c4_456, %c1_457, %c0_458] : memref<1x7x7x4xf32, #tpu.memory_space<vmem>>, vector<1x1x1x4xf32>
    %1028 = vector.shape_cast %1027 : vector<1x1x1x4xf32> to vector<1x4xf32>
    %1029 = vector.shape_cast %1026 : vector<1x4xf32> to vector<1x1x1x4xf32>
    tpu.vector_store %arg5[%c0_455, %c4_456, %c1_457, %c0_458], %1029 {strides = array<i32>} : memref<1x7x7x4xf32, #tpu.memory_space<vmem>>, vector<1x1x1x4xf32>,
    %cst_459 = arith.constant 2.000000e+00 : f32
    %1030 = arith.mulf %cst_459, %38 : f32
    %1031 = math.floor %1030 : f32
    %1032 = arith.fptosi %1031 : f32 to i32
    %1033 = arith.addi %1032, %16 : i32
    %c0_i32_460 = arith.constant 0 : i32
    %c16_i32_461 = arith.constant 16 : i32
    %1034 = arith.maxsi %c0_i32_460, %1033 : i32
    %1035 = arith.minsi %c16_i32_461, %1034 : i32
    %cst_462 = arith.constant 3.000000e+00 : f32
    %1036 = arith.mulf %cst_462, %38 : f32
    %1037 = math.ceil %1036 : f32
    %1038 = arith.fptosi %1037 : f32 to i32
    %1039 = arith.addi %1038, %16 : i32
    %c0_i32_463 = arith.constant 0 : i32
    %c16_i32_464 = arith.constant 16 : i32
    %1040 = arith.maxsi %c0_i32_463, %1039 : i32
    %1041 = arith.minsi %c16_i32_464, %1040 : i32
    %1042 = vector.broadcast %1035 : i32 to vector<16x1xi32>
    %1043 = arith.cmpi sge, %39, %1042 : vector<16x1xi32>
    %1044 = vector.broadcast %1041 : i32 to vector<16x1xi32>
    %1045 = arith.cmpi slt, %39, %1044 : vector<16x1xi32>
    %1046 = arith.andi %1043, %1045 : vector<16x1xi1>
    %cst_465 = arith.constant 0xFF800000 : f32
    %1047 = vector.shape_cast %1046 : vector<16x1xi1> to vector<16x1xi1>
    %1048 = vector.broadcast %1047 : vector<16x1xi1> to vector<16x4xi1>
    %1049 = vector.broadcast %cst_465 : f32 to vector<16x4xf32>
    %1050 = arith.select %1048, %969, %1049 : vector<16x4xi1>, vector<16x4xf32>
    %cst_466 = arith.constant dense<0xFF800000> : vector<4xf32>
    %1051 = vector.multi_reduction <maximumf>, %1050, %cst_466 [0] : vector<16x4xf32> to vector<4xf32>
    %1052 = vector.shape_cast %1051 : vector<4xf32> to vector<1x4xf32>
    %1053 = arith.cmpi sgt, %1041, %1035 : i32
    %1054 = arith.andi %964, %1053 : i1
    %cst_467 = arith.constant 0.000000e+00 : f32
    %1055 = vector.broadcast %cst_467 : f32 to vector<1x4xf32>
    %1056 = arith.select %1054, %1052, %1055 : vector<1x4xf32>
    %c0_468 = arith.constant 0 : index
    %c4_469 = arith.constant 4 : index
    %c2_470 = arith.constant 2 : index
    %c0_471 = arith.constant 0 : index
    %1057 = vector.load %arg5[%c0_468, %c4_469, %c2_470, %c0_471] : memref<1x7x7x4xf32, #tpu.memory_space<vmem>>, vector<1x1x1x4xf32>
    %1058 = vector.shape_cast %1057 : vector<1x1x1x4xf32> to vector<1x4xf32>
    %1059 = vector.shape_cast %1056 : vector<1x4xf32> to vector<1x1x1x4xf32>
    tpu.vector_store %arg5[%c0_468, %c4_469, %c2_470, %c0_471], %1059 {strides = array<i32>} : memref<1x7x7x4xf32, #tpu.memory_space<vmem>>, vector<1x1x1x4xf32>,
    %cst_472 = arith.constant 3.000000e+00 : f32
    %1060 = arith.mulf %cst_472, %38 : f32
    %1061 = math.floor %1060 : f32
    %1062 = arith.fptosi %1061 : f32 to i32
    %1063 = arith.addi %1062, %16 : i32
    %c0_i32_473 = arith.constant 0 : i32
    %c16_i32_474 = arith.constant 16 : i32
    %1064 = arith.maxsi %c0_i32_473, %1063 : i32
    %1065 = arith.minsi %c16_i32_474, %1064 : i32
    %cst_475 = arith.constant 4.000000e+00 : f32
    %1066 = arith.mulf %cst_475, %38 : f32
    %1067 = math.ceil %1066 : f32
    %1068 = arith.fptosi %1067 : f32 to i32
    %1069 = arith.addi %1068, %16 : i32
    %c0_i32_476 = arith.constant 0 : i32
    %c16_i32_477 = arith.constant 16 : i32
    %1070 = arith.maxsi %c0_i32_476, %1069 : i32
    %1071 = arith.minsi %c16_i32_477, %1070 : i32
    %1072 = vector.broadcast %1065 : i32 to vector<16x1xi32>
    %1073 = arith.cmpi sge, %39, %1072 : vector<16x1xi32>
    %1074 = vector.broadcast %1071 : i32 to vector<16x1xi32>
    %1075 = arith.cmpi slt, %39, %1074 : vector<16x1xi32>
    %1076 = arith.andi %1073, %1075 : vector<16x1xi1>
    %cst_478 = arith.constant 0xFF800000 : f32
    %1077 = vector.shape_cast %1076 : vector<16x1xi1> to vector<16x1xi1>
    %1078 = vector.broadcast %1077 : vector<16x1xi1> to vector<16x4xi1>
    %1079 = vector.broadcast %cst_478 : f32 to vector<16x4xf32>
    %1080 = arith.select %1078, %969, %1079 : vector<16x4xi1>, vector<16x4xf32>
    %cst_479 = arith.constant dense<0xFF800000> : vector<4xf32>
    %1081 = vector.multi_reduction <maximumf>, %1080, %cst_479 [0] : vector<16x4xf32> to vector<4xf32>
    %1082 = vector.shape_cast %1081 : vector<4xf32> to vector<1x4xf32>
    %1083 = arith.cmpi sgt, %1071, %1065 : i32
    %1084 = arith.andi %964, %1083 : i1
    %cst_480 = arith.constant 0.000000e+00 : f32
    %1085 = vector.broadcast %cst_480 : f32 to vector<1x4xf32>
    %1086 = arith.select %1084, %1082, %1085 : vector<1x4xf32>
    %c0_481 = arith.constant 0 : index
    %c4_482 = arith.constant 4 : index
    %c3_483 = arith.constant 3 : index
    %c0_484 = arith.constant 0 : index
    %1087 = vector.load %arg5[%c0_481, %c4_482, %c3_483, %c0_484] : memref<1x7x7x4xf32, #tpu.memory_space<vmem>>, vector<1x1x1x4xf32>
    %1088 = vector.shape_cast %1087 : vector<1x1x1x4xf32> to vector<1x4xf32>
    %1089 = vector.shape_cast %1086 : vector<1x4xf32> to vector<1x1x1x4xf32>
    tpu.vector_store %arg5[%c0_481, %c4_482, %c3_483, %c0_484], %1089 {strides = array<i32>} : memref<1x7x7x4xf32, #tpu.memory_space<vmem>>, vector<1x1x1x4xf32>,
    %cst_485 = arith.constant 4.000000e+00 : f32
    %1090 = arith.mulf %cst_485, %38 : f32
    %1091 = math.floor %1090 : f32
    %1092 = arith.fptosi %1091 : f32 to i32
    %1093 = arith.addi %1092, %16 : i32
    %c0_i32_486 = arith.constant 0 : i32
    %c16_i32_487 = arith.constant 16 : i32
    %1094 = arith.maxsi %c0_i32_486, %1093 : i32
    %1095 = arith.minsi %c16_i32_487, %1094 : i32
    %cst_488 = arith.constant 5.000000e+00 : f32
    %1096 = arith.mulf %cst_488, %38 : f32
    %1097 = math.ceil %1096 : f32
    %1098 = arith.fptosi %1097 : f32 to i32
    %1099 = arith.addi %1098, %16 : i32
    %c0_i32_489 = arith.constant 0 : i32
    %c16_i32_490 = arith.constant 16 : i32
    %1100 = arith.maxsi %c0_i32_489, %1099 : i32
    %1101 = arith.minsi %c16_i32_490, %1100 : i32
    %1102 = vector.broadcast %1095 : i32 to vector<16x1xi32>
    %1103 = arith.cmpi sge, %39, %1102 : vector<16x1xi32>
    %1104 = vector.broadcast %1101 : i32 to vector<16x1xi32>
    %1105 = arith.cmpi slt, %39, %1104 : vector<16x1xi32>
    %1106 = arith.andi %1103, %1105 : vector<16x1xi1>
    %cst_491 = arith.constant 0xFF800000 : f32
    %1107 = vector.shape_cast %1106 : vector<16x1xi1> to vector<16x1xi1>
    %1108 = vector.broadcast %1107 : vector<16x1xi1> to vector<16x4xi1>
    %1109 = vector.broadcast %cst_491 : f32 to vector<16x4xf32>
    %1110 = arith.select %1108, %969, %1109 : vector<16x4xi1>, vector<16x4xf32>
    %cst_492 = arith.constant dense<0xFF800000> : vector<4xf32>
    %1111 = vector.multi_reduction <maximumf>, %1110, %cst_492 [0] : vector<16x4xf32> to vector<4xf32>
    %1112 = vector.shape_cast %1111 : vector<4xf32> to vector<1x4xf32>
    %1113 = arith.cmpi sgt, %1101, %1095 : i32
    %1114 = arith.andi %964, %1113 : i1
    %cst_493 = arith.constant 0.000000e+00 : f32
    %1115 = vector.broadcast %cst_493 : f32 to vector<1x4xf32>
    %1116 = arith.select %1114, %1112, %1115 : vector<1x4xf32>
    %c0_494 = arith.constant 0 : index
    %c4_495 = arith.constant 4 : index
    %c4_496 = arith.constant 4 : index
    %c0_497 = arith.constant 0 : index
    %1117 = vector.load %arg5[%c0_494, %c4_495, %c4_496, %c0_497] : memref<1x7x7x4xf32, #tpu.memory_space<vmem>>, vector<1x1x1x4xf32>
    %1118 = vector.shape_cast %1117 : vector<1x1x1x4xf32> to vector<1x4xf32>
    %1119 = vector.shape_cast %1116 : vector<1x4xf32> to vector<1x1x1x4xf32>
    tpu.vector_store %arg5[%c0_494, %c4_495, %c4_496, %c0_497], %1119 {strides = array<i32>} : memref<1x7x7x4xf32, #tpu.memory_space<vmem>>, vector<1x1x1x4xf32>,
    %cst_498 = arith.constant 5.000000e+00 : f32
    %1120 = arith.mulf %cst_498, %38 : f32
    %1121 = math.floor %1120 : f32
    %1122 = arith.fptosi %1121 : f32 to i32
    %1123 = arith.addi %1122, %16 : i32
    %c0_i32_499 = arith.constant 0 : i32
    %c16_i32_500 = arith.constant 16 : i32
    %1124 = arith.maxsi %c0_i32_499, %1123 : i32
    %1125 = arith.minsi %c16_i32_500, %1124 : i32
    %cst_501 = arith.constant 6.000000e+00 : f32
    %1126 = arith.mulf %cst_501, %38 : f32
    %1127 = math.ceil %1126 : f32
    %1128 = arith.fptosi %1127 : f32 to i32
    %1129 = arith.addi %1128, %16 : i32
    %c0_i32_502 = arith.constant 0 : i32
    %c16_i32_503 = arith.constant 16 : i32
    %1130 = arith.maxsi %c0_i32_502, %1129 : i32
    %1131 = arith.minsi %c16_i32_503, %1130 : i32
    %1132 = vector.broadcast %1125 : i32 to vector<16x1xi32>
    %1133 = arith.cmpi sge, %39, %1132 : vector<16x1xi32>
    %1134 = vector.broadcast %1131 : i32 to vector<16x1xi32>
    %1135 = arith.cmpi slt, %39, %1134 : vector<16x1xi32>
    %1136 = arith.andi %1133, %1135 : vector<16x1xi1>
    %cst_504 = arith.constant 0xFF800000 : f32
    %1137 = vector.shape_cast %1136 : vector<16x1xi1> to vector<16x1xi1>
    %1138 = vector.broadcast %1137 : vector<16x1xi1> to vector<16x4xi1>
    %1139 = vector.broadcast %cst_504 : f32 to vector<16x4xf32>
    %1140 = arith.select %1138, %969, %1139 : vector<16x4xi1>, vector<16x4xf32>
    %cst_505 = arith.constant dense<0xFF800000> : vector<4xf32>
    %1141 = vector.multi_reduction <maximumf>, %1140, %cst_505 [0] : vector<16x4xf32> to vector<4xf32>
    %1142 = vector.shape_cast %1141 : vector<4xf32> to vector<1x4xf32>
    %1143 = arith.cmpi sgt, %1131, %1125 : i32
    %1144 = arith.andi %964, %1143 : i1
    %cst_506 = arith.constant 0.000000e+00 : f32
    %1145 = vector.broadcast %cst_506 : f32 to vector<1x4xf32>
    %1146 = arith.select %1144, %1142, %1145 : vector<1x4xf32>
    %c0_507 = arith.constant 0 : index
    %c4_508 = arith.constant 4 : index
    %c5_509 = arith.constant 5 : index
    %c0_510 = arith.constant 0 : index
    %1147 = vector.load %arg5[%c0_507, %c4_508, %c5_509, %c0_510] : memref<1x7x7x4xf32, #tpu.memory_space<vmem>>, vector<1x1x1x4xf32>
    %1148 = vector.shape_cast %1147 : vector<1x1x1x4xf32> to vector<1x4xf32>
    %1149 = vector.shape_cast %1146 : vector<1x4xf32> to vector<1x1x1x4xf32>
    tpu.vector_store %arg5[%c0_507, %c4_508, %c5_509, %c0_510], %1149 {strides = array<i32>} : memref<1x7x7x4xf32, #tpu.memory_space<vmem>>, vector<1x1x1x4xf32>,
    %cst_511 = arith.constant 6.000000e+00 : f32
    %1150 = arith.mulf %cst_511, %38 : f32
    %1151 = math.floor %1150 : f32
    %1152 = arith.fptosi %1151 : f32 to i32
    %1153 = arith.addi %1152, %16 : i32
    %c0_i32_512 = arith.constant 0 : i32
    %c16_i32_513 = arith.constant 16 : i32
    %1154 = arith.maxsi %c0_i32_512, %1153 : i32
    %1155 = arith.minsi %c16_i32_513, %1154 : i32
    %cst_514 = arith.constant 7.000000e+00 : f32
    %1156 = arith.mulf %cst_514, %38 : f32
    %1157 = math.ceil %1156 : f32
    %1158 = arith.fptosi %1157 : f32 to i32
    %1159 = arith.addi %1158, %16 : i32
    %c0_i32_515 = arith.constant 0 : i32
    %c16_i32_516 = arith.constant 16 : i32
    %1160 = arith.maxsi %c0_i32_515, %1159 : i32
    %1161 = arith.minsi %c16_i32_516, %1160 : i32
    %1162 = vector.broadcast %1155 : i32 to vector<16x1xi32>
    %1163 = arith.cmpi sge, %39, %1162 : vector<16x1xi32>
    %1164 = vector.broadcast %1161 : i32 to vector<16x1xi32>
    %1165 = arith.cmpi slt, %39, %1164 : vector<16x1xi32>
    %1166 = arith.andi %1163, %1165 : vector<16x1xi1>
    %cst_517 = arith.constant 0xFF800000 : f32
    %1167 = vector.shape_cast %1166 : vector<16x1xi1> to vector<16x1xi1>
    %1168 = vector.broadcast %1167 : vector<16x1xi1> to vector<16x4xi1>
    %1169 = vector.broadcast %cst_517 : f32 to vector<16x4xf32>
    %1170 = arith.select %1168, %969, %1169 : vector<16x4xi1>, vector<16x4xf32>
    %cst_518 = arith.constant dense<0xFF800000> : vector<4xf32>
    %1171 = vector.multi_reduction <maximumf>, %1170, %cst_518 [0] : vector<16x4xf32> to vector<4xf32>
    %1172 = vector.shape_cast %1171 : vector<4xf32> to vector<1x4xf32>
    %1173 = arith.cmpi sgt, %1161, %1155 : i32
    %1174 = arith.andi %964, %1173 : i1
    %cst_519 = arith.constant 0.000000e+00 : f32
    %1175 = vector.broadcast %cst_519 : f32 to vector<1x4xf32>
    %1176 = arith.select %1174, %1172, %1175 : vector<1x4xf32>
    %c0_520 = arith.constant 0 : index
    %c4_521 = arith.constant 4 : index
    %c6_522 = arith.constant 6 : index
    %c0_523 = arith.constant 0 : index
    %1177 = vector.load %arg5[%c0_520, %c4_521, %c6_522, %c0_523] : memref<1x7x7x4xf32, #tpu.memory_space<vmem>>, vector<1x1x1x4xf32>
    %1178 = vector.shape_cast %1177 : vector<1x1x1x4xf32> to vector<1x4xf32>
    %1179 = vector.shape_cast %1176 : vector<1x4xf32> to vector<1x1x1x4xf32>
    tpu.vector_store %arg5[%c0_520, %c4_521, %c6_522, %c0_523], %1179 {strides = array<i32>} : memref<1x7x7x4xf32, #tpu.memory_space<vmem>>, vector<1x1x1x4xf32>,
    %cst_524 = arith.constant 5.000000e+00 : f32
    %1180 = arith.mulf %cst_524, %36 : f32
    %1181 = math.floor %1180 : f32
    %1182 = arith.fptosi %1181 : f32 to i32
    %1183 = arith.addi %1182, %20 : i32
    %c0_i32_525 = arith.constant 0 : i32
    %c16_i32_526 = arith.constant 16 : i32
    %1184 = arith.maxsi %c0_i32_525, %1183 : i32
    %1185 = arith.minsi %c16_i32_526, %1184 : i32
    %cst_527 = arith.constant 6.000000e+00 : f32
    %1186 = arith.mulf %cst_527, %36 : f32
    %1187 = math.ceil %1186 : f32
    %1188 = arith.fptosi %1187 : f32 to i32
    %1189 = arith.addi %1188, %20 : i32
    %c0_i32_528 = arith.constant 0 : i32
    %c16_i32_529 = arith.constant 16 : i32
    %1190 = arith.maxsi %c0_i32_528, %1189 : i32
    %1191 = arith.minsi %c16_i32_529, %1190 : i32
    %1192 = arith.cmpi sgt, %1191, %1185 : i32
    %cst_530 = arith.constant 0xFF800000 : f32
    %1193 = vector.broadcast %cst_530 : f32 to vector<16x4xf32>
    %c0_531 = arith.constant 0 : index
    %c0_532 = arith.constant 0 : index
    %1194 = vector.load %arg6[%c0_531, %c0_532] : memref<16x4xf32, #tpu.memory_space<vmem>>, vector<16x4xf32>
    tpu.vector_store %arg6[%c0_531, %c0_532], %1193 {strides = array<i32>} : memref<16x4xf32, #tpu.memory_space<vmem>>, vector<16x4xf32>,
    %c0_i32_533 = arith.constant 0 : i32
    %1195 = arith.subi %1191, %1185 : i32
    %1196 = arith.addi %1185, %1195 : i32
    %c1_i32_534 = arith.constant 1 : i32
    scf.for %arg7 = %1185 to %1196 step %c1_i32_534  : i32 {
      %c0_732 = arith.constant 0 : index
      %c0_733 = arith.constant 0 : index
      %1636 = vector.load %arg6[%c0_732, %c0_733] : memref<16x4xf32, #tpu.memory_space<vmem>>, vector<16x4xf32>
      %c0_734 = arith.constant 0 : index
      %1637 = arith.index_cast %arg7 : i32 to index
      %c0_735 = arith.constant 0 : index
      %c0_736 = arith.constant 0 : index
      %1638 = vector.load %arg4[%c0_734, %1637, %c0_735, %c0_736] : memref<1x16x16x4xf32, #tpu.memory_space<vmem>>, vector<1x1x16x4xf32>
      %1639 = vector.shape_cast %1638 : vector<1x1x16x4xf32> to vector<16x4xf32>
      %1640 = arith.maximumf %1636, %1639 : vector<16x4xf32>
      %c0_737 = arith.constant 0 : index
      %c0_738 = arith.constant 0 : index
      %1641 = vector.load %arg6[%c0_737, %c0_738] : memref<16x4xf32, #tpu.memory_space<vmem>>, vector<16x4xf32>
      tpu.vector_store %arg6[%c0_737, %c0_738], %1640 {strides = array<i32>} : memref<16x4xf32, #tpu.memory_space<vmem>>, vector<16x4xf32>,
    }
    %c0_535 = arith.constant 0 : index
    %c0_536 = arith.constant 0 : index
    %1197 = vector.load %arg6[%c0_535, %c0_536] : memref<16x4xf32, #tpu.memory_space<vmem>>, vector<16x4xf32>
    %cst_537 = arith.constant 0.000000e+00 : f32
    %1198 = arith.mulf %cst_537, %38 : f32
    %1199 = math.floor %1198 : f32
    %1200 = arith.fptosi %1199 : f32 to i32
    %1201 = arith.addi %1200, %16 : i32
    %c0_i32_538 = arith.constant 0 : i32
    %c16_i32_539 = arith.constant 16 : i32
    %1202 = arith.maxsi %c0_i32_538, %1201 : i32
    %1203 = arith.minsi %c16_i32_539, %1202 : i32
    %cst_540 = arith.constant 1.000000e+00 : f32
    %1204 = arith.mulf %cst_540, %38 : f32
    %1205 = math.ceil %1204 : f32
    %1206 = arith.fptosi %1205 : f32 to i32
    %1207 = arith.addi %1206, %16 : i32
    %c0_i32_541 = arith.constant 0 : i32
    %c16_i32_542 = arith.constant 16 : i32
    %1208 = arith.maxsi %c0_i32_541, %1207 : i32
    %1209 = arith.minsi %c16_i32_542, %1208 : i32
    %1210 = vector.broadcast %1203 : i32 to vector<16x1xi32>
    %1211 = arith.cmpi sge, %39, %1210 : vector<16x1xi32>
    %1212 = vector.broadcast %1209 : i32 to vector<16x1xi32>
    %1213 = arith.cmpi slt, %39, %1212 : vector<16x1xi32>
    %1214 = arith.andi %1211, %1213 : vector<16x1xi1>
    %cst_543 = arith.constant 0xFF800000 : f32
    %1215 = vector.shape_cast %1214 : vector<16x1xi1> to vector<16x1xi1>
    %1216 = vector.broadcast %1215 : vector<16x1xi1> to vector<16x4xi1>
    %1217 = vector.broadcast %cst_543 : f32 to vector<16x4xf32>
    %1218 = arith.select %1216, %1197, %1217 : vector<16x4xi1>, vector<16x4xf32>
    %cst_544 = arith.constant dense<0xFF800000> : vector<4xf32>
    %1219 = vector.multi_reduction <maximumf>, %1218, %cst_544 [0] : vector<16x4xf32> to vector<4xf32>
    %1220 = vector.shape_cast %1219 : vector<4xf32> to vector<1x4xf32>
    %1221 = arith.cmpi sgt, %1209, %1203 : i32
    %1222 = arith.andi %1192, %1221 : i1
    %cst_545 = arith.constant 0.000000e+00 : f32
    %1223 = vector.broadcast %cst_545 : f32 to vector<1x4xf32>
    %1224 = arith.select %1222, %1220, %1223 : vector<1x4xf32>
    %c0_546 = arith.constant 0 : index
    %c5_547 = arith.constant 5 : index
    %c0_548 = arith.constant 0 : index
    %c0_549 = arith.constant 0 : index
    %1225 = vector.load %arg5[%c0_546, %c5_547, %c0_548, %c0_549] : memref<1x7x7x4xf32, #tpu.memory_space<vmem>>, vector<1x1x1x4xf32>
    %1226 = vector.shape_cast %1225 : vector<1x1x1x4xf32> to vector<1x4xf32>
    %1227 = vector.shape_cast %1224 : vector<1x4xf32> to vector<1x1x1x4xf32>
    tpu.vector_store %arg5[%c0_546, %c5_547, %c0_548, %c0_549], %1227 {strides = array<i32>} : memref<1x7x7x4xf32, #tpu.memory_space<vmem>>, vector<1x1x1x4xf32>,
    %cst_550 = arith.constant 1.000000e+00 : f32
    %1228 = arith.mulf %cst_550, %38 : f32
    %1229 = math.floor %1228 : f32
    %1230 = arith.fptosi %1229 : f32 to i32
    %1231 = arith.addi %1230, %16 : i32
    %c0_i32_551 = arith.constant 0 : i32
    %c16_i32_552 = arith.constant 16 : i32
    %1232 = arith.maxsi %c0_i32_551, %1231 : i32
    %1233 = arith.minsi %c16_i32_552, %1232 : i32
    %cst_553 = arith.constant 2.000000e+00 : f32
    %1234 = arith.mulf %cst_553, %38 : f32
    %1235 = math.ceil %1234 : f32
    %1236 = arith.fptosi %1235 : f32 to i32
    %1237 = arith.addi %1236, %16 : i32
    %c0_i32_554 = arith.constant 0 : i32
    %c16_i32_555 = arith.constant 16 : i32
    %1238 = arith.maxsi %c0_i32_554, %1237 : i32
    %1239 = arith.minsi %c16_i32_555, %1238 : i32
    %1240 = vector.broadcast %1233 : i32 to vector<16x1xi32>
    %1241 = arith.cmpi sge, %39, %1240 : vector<16x1xi32>
    %1242 = vector.broadcast %1239 : i32 to vector<16x1xi32>
    %1243 = arith.cmpi slt, %39, %1242 : vector<16x1xi32>
    %1244 = arith.andi %1241, %1243 : vector<16x1xi1>
    %cst_556 = arith.constant 0xFF800000 : f32
    %1245 = vector.shape_cast %1244 : vector<16x1xi1> to vector<16x1xi1>
    %1246 = vector.broadcast %1245 : vector<16x1xi1> to vector<16x4xi1>
    %1247 = vector.broadcast %cst_556 : f32 to vector<16x4xf32>
    %1248 = arith.select %1246, %1197, %1247 : vector<16x4xi1>, vector<16x4xf32>
    %cst_557 = arith.constant dense<0xFF800000> : vector<4xf32>
    %1249 = vector.multi_reduction <maximumf>, %1248, %cst_557 [0] : vector<16x4xf32> to vector<4xf32>
    %1250 = vector.shape_cast %1249 : vector<4xf32> to vector<1x4xf32>
    %1251 = arith.cmpi sgt, %1239, %1233 : i32
    %1252 = arith.andi %1192, %1251 : i1
    %cst_558 = arith.constant 0.000000e+00 : f32
    %1253 = vector.broadcast %cst_558 : f32 to vector<1x4xf32>
    %1254 = arith.select %1252, %1250, %1253 : vector<1x4xf32>
    %c0_559 = arith.constant 0 : index
    %c5_560 = arith.constant 5 : index
    %c1_561 = arith.constant 1 : index
    %c0_562 = arith.constant 0 : index
    %1255 = vector.load %arg5[%c0_559, %c5_560, %c1_561, %c0_562] : memref<1x7x7x4xf32, #tpu.memory_space<vmem>>, vector<1x1x1x4xf32>
    %1256 = vector.shape_cast %1255 : vector<1x1x1x4xf32> to vector<1x4xf32>
    %1257 = vector.shape_cast %1254 : vector<1x4xf32> to vector<1x1x1x4xf32>
    tpu.vector_store %arg5[%c0_559, %c5_560, %c1_561, %c0_562], %1257 {strides = array<i32>} : memref<1x7x7x4xf32, #tpu.memory_space<vmem>>, vector<1x1x1x4xf32>,
    %cst_563 = arith.constant 2.000000e+00 : f32
    %1258 = arith.mulf %cst_563, %38 : f32
    %1259 = math.floor %1258 : f32
    %1260 = arith.fptosi %1259 : f32 to i32
    %1261 = arith.addi %1260, %16 : i32
    %c0_i32_564 = arith.constant 0 : i32
    %c16_i32_565 = arith.constant 16 : i32
    %1262 = arith.maxsi %c0_i32_564, %1261 : i32
    %1263 = arith.minsi %c16_i32_565, %1262 : i32
    %cst_566 = arith.constant 3.000000e+00 : f32
    %1264 = arith.mulf %cst_566, %38 : f32
    %1265 = math.ceil %1264 : f32
    %1266 = arith.fptosi %1265 : f32 to i32
    %1267 = arith.addi %1266, %16 : i32
    %c0_i32_567 = arith.constant 0 : i32
    %c16_i32_568 = arith.constant 16 : i32
    %1268 = arith.maxsi %c0_i32_567, %1267 : i32
    %1269 = arith.minsi %c16_i32_568, %1268 : i32
    %1270 = vector.broadcast %1263 : i32 to vector<16x1xi32>
    %1271 = arith.cmpi sge, %39, %1270 : vector<16x1xi32>
    %1272 = vector.broadcast %1269 : i32 to vector<16x1xi32>
    %1273 = arith.cmpi slt, %39, %1272 : vector<16x1xi32>
    %1274 = arith.andi %1271, %1273 : vector<16x1xi1>
    %cst_569 = arith.constant 0xFF800000 : f32
    %1275 = vector.shape_cast %1274 : vector<16x1xi1> to vector<16x1xi1>
    %1276 = vector.broadcast %1275 : vector<16x1xi1> to vector<16x4xi1>
    %1277 = vector.broadcast %cst_569 : f32 to vector<16x4xf32>
    %1278 = arith.select %1276, %1197, %1277 : vector<16x4xi1>, vector<16x4xf32>
    %cst_570 = arith.constant dense<0xFF800000> : vector<4xf32>
    %1279 = vector.multi_reduction <maximumf>, %1278, %cst_570 [0] : vector<16x4xf32> to vector<4xf32>
    %1280 = vector.shape_cast %1279 : vector<4xf32> to vector<1x4xf32>
    %1281 = arith.cmpi sgt, %1269, %1263 : i32
    %1282 = arith.andi %1192, %1281 : i1
    %cst_571 = arith.constant 0.000000e+00 : f32
    %1283 = vector.broadcast %cst_571 : f32 to vector<1x4xf32>
    %1284 = arith.select %1282, %1280, %1283 : vector<1x4xf32>
    %c0_572 = arith.constant 0 : index
    %c5_573 = arith.constant 5 : index
    %c2_574 = arith.constant 2 : index
    %c0_575 = arith.constant 0 : index
    %1285 = vector.load %arg5[%c0_572, %c5_573, %c2_574, %c0_575] : memref<1x7x7x4xf32, #tpu.memory_space<vmem>>, vector<1x1x1x4xf32>
    %1286 = vector.shape_cast %1285 : vector<1x1x1x4xf32> to vector<1x4xf32>
    %1287 = vector.shape_cast %1284 : vector<1x4xf32> to vector<1x1x1x4xf32>
    tpu.vector_store %arg5[%c0_572, %c5_573, %c2_574, %c0_575], %1287 {strides = array<i32>} : memref<1x7x7x4xf32, #tpu.memory_space<vmem>>, vector<1x1x1x4xf32>,
    %cst_576 = arith.constant 3.000000e+00 : f32
    %1288 = arith.mulf %cst_576, %38 : f32
    %1289 = math.floor %1288 : f32
    %1290 = arith.fptosi %1289 : f32 to i32
    %1291 = arith.addi %1290, %16 : i32
    %c0_i32_577 = arith.constant 0 : i32
    %c16_i32_578 = arith.constant 16 : i32
    %1292 = arith.maxsi %c0_i32_577, %1291 : i32
    %1293 = arith.minsi %c16_i32_578, %1292 : i32
    %cst_579 = arith.constant 4.000000e+00 : f32
    %1294 = arith.mulf %cst_579, %38 : f32
    %1295 = math.ceil %1294 : f32
    %1296 = arith.fptosi %1295 : f32 to i32
    %1297 = arith.addi %1296, %16 : i32
    %c0_i32_580 = arith.constant 0 : i32
    %c16_i32_581 = arith.constant 16 : i32
    %1298 = arith.maxsi %c0_i32_580, %1297 : i32
    %1299 = arith.minsi %c16_i32_581, %1298 : i32
    %1300 = vector.broadcast %1293 : i32 to vector<16x1xi32>
    %1301 = arith.cmpi sge, %39, %1300 : vector<16x1xi32>
    %1302 = vector.broadcast %1299 : i32 to vector<16x1xi32>
    %1303 = arith.cmpi slt, %39, %1302 : vector<16x1xi32>
    %1304 = arith.andi %1301, %1303 : vector<16x1xi1>
    %cst_582 = arith.constant 0xFF800000 : f32
    %1305 = vector.shape_cast %1304 : vector<16x1xi1> to vector<16x1xi1>
    %1306 = vector.broadcast %1305 : vector<16x1xi1> to vector<16x4xi1>
    %1307 = vector.broadcast %cst_582 : f32 to vector<16x4xf32>
    %1308 = arith.select %1306, %1197, %1307 : vector<16x4xi1>, vector<16x4xf32>
    %cst_583 = arith.constant dense<0xFF800000> : vector<4xf32>
    %1309 = vector.multi_reduction <maximumf>, %1308, %cst_583 [0] : vector<16x4xf32> to vector<4xf32>
    %1310 = vector.shape_cast %1309 : vector<4xf32> to vector<1x4xf32>
    %1311 = arith.cmpi sgt, %1299, %1293 : i32
    %1312 = arith.andi %1192, %1311 : i1
    %cst_584 = arith.constant 0.000000e+00 : f32
    %1313 = vector.broadcast %cst_584 : f32 to vector<1x4xf32>
    %1314 = arith.select %1312, %1310, %1313 : vector<1x4xf32>
    %c0_585 = arith.constant 0 : index
    %c5_586 = arith.constant 5 : index
    %c3_587 = arith.constant 3 : index
    %c0_588 = arith.constant 0 : index
    %1315 = vector.load %arg5[%c0_585, %c5_586, %c3_587, %c0_588] : memref<1x7x7x4xf32, #tpu.memory_space<vmem>>, vector<1x1x1x4xf32>
    %1316 = vector.shape_cast %1315 : vector<1x1x1x4xf32> to vector<1x4xf32>
    %1317 = vector.shape_cast %1314 : vector<1x4xf32> to vector<1x1x1x4xf32>
    tpu.vector_store %arg5[%c0_585, %c5_586, %c3_587, %c0_588], %1317 {strides = array<i32>} : memref<1x7x7x4xf32, #tpu.memory_space<vmem>>, vector<1x1x1x4xf32>,
    %cst_589 = arith.constant 4.000000e+00 : f32
    %1318 = arith.mulf %cst_589, %38 : f32
    %1319 = math.floor %1318 : f32
    %1320 = arith.fptosi %1319 : f32 to i32
    %1321 = arith.addi %1320, %16 : i32
    %c0_i32_590 = arith.constant 0 : i32
    %c16_i32_591 = arith.constant 16 : i32
    %1322 = arith.maxsi %c0_i32_590, %1321 : i32
    %1323 = arith.minsi %c16_i32_591, %1322 : i32
    %cst_592 = arith.constant 5.000000e+00 : f32
    %1324 = arith.mulf %cst_592, %38 : f32
    %1325 = math.ceil %1324 : f32
    %1326 = arith.fptosi %1325 : f32 to i32
    %1327 = arith.addi %1326, %16 : i32
    %c0_i32_593 = arith.constant 0 : i32
    %c16_i32_594 = arith.constant 16 : i32
    %1328 = arith.maxsi %c0_i32_593, %1327 : i32
    %1329 = arith.minsi %c16_i32_594, %1328 : i32
    %1330 = vector.broadcast %1323 : i32 to vector<16x1xi32>
    %1331 = arith.cmpi sge, %39, %1330 : vector<16x1xi32>
    %1332 = vector.broadcast %1329 : i32 to vector<16x1xi32>
    %1333 = arith.cmpi slt, %39, %1332 : vector<16x1xi32>
    %1334 = arith.andi %1331, %1333 : vector<16x1xi1>
    %cst_595 = arith.constant 0xFF800000 : f32
    %1335 = vector.shape_cast %1334 : vector<16x1xi1> to vector<16x1xi1>
    %1336 = vector.broadcast %1335 : vector<16x1xi1> to vector<16x4xi1>
    %1337 = vector.broadcast %cst_595 : f32 to vector<16x4xf32>
    %1338 = arith.select %1336, %1197, %1337 : vector<16x4xi1>, vector<16x4xf32>
    %cst_596 = arith.constant dense<0xFF800000> : vector<4xf32>
    %1339 = vector.multi_reduction <maximumf>, %1338, %cst_596 [0] : vector<16x4xf32> to vector<4xf32>
    %1340 = vector.shape_cast %1339 : vector<4xf32> to vector<1x4xf32>
    %1341 = arith.cmpi sgt, %1329, %1323 : i32
    %1342 = arith.andi %1192, %1341 : i1
    %cst_597 = arith.constant 0.000000e+00 : f32
    %1343 = vector.broadcast %cst_597 : f32 to vector<1x4xf32>
    %1344 = arith.select %1342, %1340, %1343 : vector<1x4xf32>
    %c0_598 = arith.constant 0 : index
    %c5_599 = arith.constant 5 : index
    %c4_600 = arith.constant 4 : index
    %c0_601 = arith.constant 0 : index
    %1345 = vector.load %arg5[%c0_598, %c5_599, %c4_600, %c0_601] : memref<1x7x7x4xf32, #tpu.memory_space<vmem>>, vector<1x1x1x4xf32>
    %1346 = vector.shape_cast %1345 : vector<1x1x1x4xf32> to vector<1x4xf32>
    %1347 = vector.shape_cast %1344 : vector<1x4xf32> to vector<1x1x1x4xf32>
    tpu.vector_store %arg5[%c0_598, %c5_599, %c4_600, %c0_601], %1347 {strides = array<i32>} : memref<1x7x7x4xf32, #tpu.memory_space<vmem>>, vector<1x1x1x4xf32>,
    %cst_602 = arith.constant 5.000000e+00 : f32
    %1348 = arith.mulf %cst_602, %38 : f32
    %1349 = math.floor %1348 : f32
    %1350 = arith.fptosi %1349 : f32 to i32
    %1351 = arith.addi %1350, %16 : i32
    %c0_i32_603 = arith.constant 0 : i32
    %c16_i32_604 = arith.constant 16 : i32
    %1352 = arith.maxsi %c0_i32_603, %1351 : i32
    %1353 = arith.minsi %c16_i32_604, %1352 : i32
    %cst_605 = arith.constant 6.000000e+00 : f32
    %1354 = arith.mulf %cst_605, %38 : f32
    %1355 = math.ceil %1354 : f32
    %1356 = arith.fptosi %1355 : f32 to i32
    %1357 = arith.addi %1356, %16 : i32
    %c0_i32_606 = arith.constant 0 : i32
    %c16_i32_607 = arith.constant 16 : i32
    %1358 = arith.maxsi %c0_i32_606, %1357 : i32
    %1359 = arith.minsi %c16_i32_607, %1358 : i32
    %1360 = vector.broadcast %1353 : i32 to vector<16x1xi32>
    %1361 = arith.cmpi sge, %39, %1360 : vector<16x1xi32>
    %1362 = vector.broadcast %1359 : i32 to vector<16x1xi32>
    %1363 = arith.cmpi slt, %39, %1362 : vector<16x1xi32>
    %1364 = arith.andi %1361, %1363 : vector<16x1xi1>
    %cst_608 = arith.constant 0xFF800000 : f32
    %1365 = vector.shape_cast %1364 : vector<16x1xi1> to vector<16x1xi1>
    %1366 = vector.broadcast %1365 : vector<16x1xi1> to vector<16x4xi1>
    %1367 = vector.broadcast %cst_608 : f32 to vector<16x4xf32>
    %1368 = arith.select %1366, %1197, %1367 : vector<16x4xi1>, vector<16x4xf32>
    %cst_609 = arith.constant dense<0xFF800000> : vector<4xf32>
    %1369 = vector.multi_reduction <maximumf>, %1368, %cst_609 [0] : vector<16x4xf32> to vector<4xf32>
    %1370 = vector.shape_cast %1369 : vector<4xf32> to vector<1x4xf32>
    %1371 = arith.cmpi sgt, %1359, %1353 : i32
    %1372 = arith.andi %1192, %1371 : i1
    %cst_610 = arith.constant 0.000000e+00 : f32
    %1373 = vector.broadcast %cst_610 : f32 to vector<1x4xf32>
    %1374 = arith.select %1372, %1370, %1373 : vector<1x4xf32>
    %c0_611 = arith.constant 0 : index
    %c5_612 = arith.constant 5 : index
    %c5_613 = arith.constant 5 : index
    %c0_614 = arith.constant 0 : index
    %1375 = vector.load %arg5[%c0_611, %c5_612, %c5_613, %c0_614] : memref<1x7x7x4xf32, #tpu.memory_space<vmem>>, vector<1x1x1x4xf32>
    %1376 = vector.shape_cast %1375 : vector<1x1x1x4xf32> to vector<1x4xf32>
    %1377 = vector.shape_cast %1374 : vector<1x4xf32> to vector<1x1x1x4xf32>
    tpu.vector_store %arg5[%c0_611, %c5_612, %c5_613, %c0_614], %1377 {strides = array<i32>} : memref<1x7x7x4xf32, #tpu.memory_space<vmem>>, vector<1x1x1x4xf32>,
    %cst_615 = arith.constant 6.000000e+00 : f32
    %1378 = arith.mulf %cst_615, %38 : f32
    %1379 = math.floor %1378 : f32
    %1380 = arith.fptosi %1379 : f32 to i32
    %1381 = arith.addi %1380, %16 : i32
    %c0_i32_616 = arith.constant 0 : i32
    %c16_i32_617 = arith.constant 16 : i32
    %1382 = arith.maxsi %c0_i32_616, %1381 : i32
    %1383 = arith.minsi %c16_i32_617, %1382 : i32
    %cst_618 = arith.constant 7.000000e+00 : f32
    %1384 = arith.mulf %cst_618, %38 : f32
    %1385 = math.ceil %1384 : f32
    %1386 = arith.fptosi %1385 : f32 to i32
    %1387 = arith.addi %1386, %16 : i32
    %c0_i32_619 = arith.constant 0 : i32
    %c16_i32_620 = arith.constant 16 : i32
    %1388 = arith.maxsi %c0_i32_619, %1387 : i32
    %1389 = arith.minsi %c16_i32_620, %1388 : i32
    %1390 = vector.broadcast %1383 : i32 to vector<16x1xi32>
    %1391 = arith.cmpi sge, %39, %1390 : vector<16x1xi32>
    %1392 = vector.broadcast %1389 : i32 to vector<16x1xi32>
    %1393 = arith.cmpi slt, %39, %1392 : vector<16x1xi32>
    %1394 = arith.andi %1391, %1393 : vector<16x1xi1>
    %cst_621 = arith.constant 0xFF800000 : f32
    %1395 = vector.shape_cast %1394 : vector<16x1xi1> to vector<16x1xi1>
    %1396 = vector.broadcast %1395 : vector<16x1xi1> to vector<16x4xi1>
    %1397 = vector.broadcast %cst_621 : f32 to vector<16x4xf32>
    %1398 = arith.select %1396, %1197, %1397 : vector<16x4xi1>, vector<16x4xf32>
    %cst_622 = arith.constant dense<0xFF800000> : vector<4xf32>
    %1399 = vector.multi_reduction <maximumf>, %1398, %cst_622 [0] : vector<16x4xf32> to vector<4xf32>
    %1400 = vector.shape_cast %1399 : vector<4xf32> to vector<1x4xf32>
    %1401 = arith.cmpi sgt, %1389, %1383 : i32
    %1402 = arith.andi %1192, %1401 : i1
    %cst_623 = arith.constant 0.000000e+00 : f32
    %1403 = vector.broadcast %cst_623 : f32 to vector<1x4xf32>
    %1404 = arith.select %1402, %1400, %1403 : vector<1x4xf32>
    %c0_624 = arith.constant 0 : index
    %c5_625 = arith.constant 5 : index
    %c6_626 = arith.constant 6 : index
    %c0_627 = arith.constant 0 : index
    %1405 = vector.load %arg5[%c0_624, %c5_625, %c6_626, %c0_627] : memref<1x7x7x4xf32, #tpu.memory_space<vmem>>, vector<1x1x1x4xf32>
    %1406 = vector.shape_cast %1405 : vector<1x1x1x4xf32> to vector<1x4xf32>
    %1407 = vector.shape_cast %1404 : vector<1x4xf32> to vector<1x1x1x4xf32>
    tpu.vector_store %arg5[%c0_624, %c5_625, %c6_626, %c0_627], %1407 {strides = array<i32>} : memref<1x7x7x4xf32, #tpu.memory_space<vmem>>, vector<1x1x1x4xf32>,
    %cst_628 = arith.constant 6.000000e+00 : f32
    %1408 = arith.mulf %cst_628, %36 : f32
    %1409 = math.floor %1408 : f32
    %1410 = arith.fptosi %1409 : f32 to i32
    %1411 = arith.addi %1410, %20 : i32
    %c0_i32_629 = arith.constant 0 : i32
    %c16_i32_630 = arith.constant 16 : i32
    %1412 = arith.maxsi %c0_i32_629, %1411 : i32
    %1413 = arith.minsi %c16_i32_630, %1412 : i32
    %cst_631 = arith.constant 7.000000e+00 : f32
    %1414 = arith.mulf %cst_631, %36 : f32
    %1415 = math.ceil %1414 : f32
    %1416 = arith.fptosi %1415 : f32 to i32
    %1417 = arith.addi %1416, %20 : i32
    %c0_i32_632 = arith.constant 0 : i32
    %c16_i32_633 = arith.constant 16 : i32
    %1418 = arith.maxsi %c0_i32_632, %1417 : i32
    %1419 = arith.minsi %c16_i32_633, %1418 : i32
    %1420 = arith.cmpi sgt, %1419, %1413 : i32
    %cst_634 = arith.constant 0xFF800000 : f32
    %1421 = vector.broadcast %cst_634 : f32 to vector<16x4xf32>
    %c0_635 = arith.constant 0 : index
    %c0_636 = arith.constant 0 : index
    %1422 = vector.load %arg6[%c0_635, %c0_636] : memref<16x4xf32, #tpu.memory_space<vmem>>, vector<16x4xf32>
    tpu.vector_store %arg6[%c0_635, %c0_636], %1421 {strides = array<i32>} : memref<16x4xf32, #tpu.memory_space<vmem>>, vector<16x4xf32>,
    %c0_i32_637 = arith.constant 0 : i32
    %1423 = arith.subi %1419, %1413 : i32
    %1424 = arith.addi %1413, %1423 : i32
    %c1_i32_638 = arith.constant 1 : i32
    scf.for %arg7 = %1413 to %1424 step %c1_i32_638  : i32 {
      %c0_732 = arith.constant 0 : index
      %c0_733 = arith.constant 0 : index
      %1636 = vector.load %arg6[%c0_732, %c0_733] : memref<16x4xf32, #tpu.memory_space<vmem>>, vector<16x4xf32>
      %c0_734 = arith.constant 0 : index
      %1637 = arith.index_cast %arg7 : i32 to index
      %c0_735 = arith.constant 0 : index
      %c0_736 = arith.constant 0 : index
      %1638 = vector.load %arg4[%c0_734, %1637, %c0_735, %c0_736] : memref<1x16x16x4xf32, #tpu.memory_space<vmem>>, vector<1x1x16x4xf32>
      %1639 = vector.shape_cast %1638 : vector<1x1x16x4xf32> to vector<16x4xf32>
      %1640 = arith.maximumf %1636, %1639 : vector<16x4xf32>
      %c0_737 = arith.constant 0 : index
      %c0_738 = arith.constant 0 : index
      %1641 = vector.load %arg6[%c0_737, %c0_738] : memref<16x4xf32, #tpu.memory_space<vmem>>, vector<16x4xf32>
      tpu.vector_store %arg6[%c0_737, %c0_738], %1640 {strides = array<i32>} : memref<16x4xf32, #tpu.memory_space<vmem>>, vector<16x4xf32>,
    }
    %c0_639 = arith.constant 0 : index
    %c0_640 = arith.constant 0 : index
    %1425 = vector.load %arg6[%c0_639, %c0_640] : memref<16x4xf32, #tpu.memory_space<vmem>>, vector<16x4xf32>
    %cst_641 = arith.constant 0.000000e+00 : f32
    %1426 = arith.mulf %cst_641, %38 : f32
    %1427 = math.floor %1426 : f32
    %1428 = arith.fptosi %1427 : f32 to i32
    %1429 = arith.addi %1428, %16 : i32
    %c0_i32_642 = arith.constant 0 : i32
    %c16_i32_643 = arith.constant 16 : i32
    %1430 = arith.maxsi %c0_i32_642, %1429 : i32
    %1431 = arith.minsi %c16_i32_643, %1430 : i32
    %cst_644 = arith.constant 1.000000e+00 : f32
    %1432 = arith.mulf %cst_644, %38 : f32
    %1433 = math.ceil %1432 : f32
    %1434 = arith.fptosi %1433 : f32 to i32
    %1435 = arith.addi %1434, %16 : i32
    %c0_i32_645 = arith.constant 0 : i32
    %c16_i32_646 = arith.constant 16 : i32
    %1436 = arith.maxsi %c0_i32_645, %1435 : i32
    %1437 = arith.minsi %c16_i32_646, %1436 : i32
    %1438 = vector.broadcast %1431 : i32 to vector<16x1xi32>
    %1439 = arith.cmpi sge, %39, %1438 : vector<16x1xi32>
    %1440 = vector.broadcast %1437 : i32 to vector<16x1xi32>
    %1441 = arith.cmpi slt, %39, %1440 : vector<16x1xi32>
    %1442 = arith.andi %1439, %1441 : vector<16x1xi1>
    %cst_647 = arith.constant 0xFF800000 : f32
    %1443 = vector.shape_cast %1442 : vector<16x1xi1> to vector<16x1xi1>
    %1444 = vector.broadcast %1443 : vector<16x1xi1> to vector<16x4xi1>
    %1445 = vector.broadcast %cst_647 : f32 to vector<16x4xf32>
    %1446 = arith.select %1444, %1425, %1445 : vector<16x4xi1>, vector<16x4xf32>
    %cst_648 = arith.constant dense<0xFF800000> : vector<4xf32>
    %1447 = vector.multi_reduction <maximumf>, %1446, %cst_648 [0] : vector<16x4xf32> to vector<4xf32>
    %1448 = vector.shape_cast %1447 : vector<4xf32> to vector<1x4xf32>
    %1449 = arith.cmpi sgt, %1437, %1431 : i32
    %1450 = arith.andi %1420, %1449 : i1
    %cst_649 = arith.constant 0.000000e+00 : f32
    %1451 = vector.broadcast %cst_649 : f32 to vector<1x4xf32>
    %1452 = arith.select %1450, %1448, %1451 : vector<1x4xf32>
    %c0_650 = arith.constant 0 : index
    %c6_651 = arith.constant 6 : index
    %c0_652 = arith.constant 0 : index
    %c0_653 = arith.constant 0 : index
    %1453 = vector.load %arg5[%c0_650, %c6_651, %c0_652, %c0_653] : memref<1x7x7x4xf32, #tpu.memory_space<vmem>>, vector<1x1x1x4xf32>
    %1454 = vector.shape_cast %1453 : vector<1x1x1x4xf32> to vector<1x4xf32>
    %1455 = vector.shape_cast %1452 : vector<1x4xf32> to vector<1x1x1x4xf32>
    tpu.vector_store %arg5[%c0_650, %c6_651, %c0_652, %c0_653], %1455 {strides = array<i32>} : memref<1x7x7x4xf32, #tpu.memory_space<vmem>>, vector<1x1x1x4xf32>,
    %cst_654 = arith.constant 1.000000e+00 : f32
    %1456 = arith.mulf %cst_654, %38 : f32
    %1457 = math.floor %1456 : f32
    %1458 = arith.fptosi %1457 : f32 to i32
    %1459 = arith.addi %1458, %16 : i32
    %c0_i32_655 = arith.constant 0 : i32
    %c16_i32_656 = arith.constant 16 : i32
    %1460 = arith.maxsi %c0_i32_655, %1459 : i32
    %1461 = arith.minsi %c16_i32_656, %1460 : i32
    %cst_657 = arith.constant 2.000000e+00 : f32
    %1462 = arith.mulf %cst_657, %38 : f32
    %1463 = math.ceil %1462 : f32
    %1464 = arith.fptosi %1463 : f32 to i32
    %1465 = arith.addi %1464, %16 : i32
    %c0_i32_658 = arith.constant 0 : i32
    %c16_i32_659 = arith.constant 16 : i32
    %1466 = arith.maxsi %c0_i32_658, %1465 : i32
    %1467 = arith.minsi %c16_i32_659, %1466 : i32
    %1468 = vector.broadcast %1461 : i32 to vector<16x1xi32>
    %1469 = arith.cmpi sge, %39, %1468 : vector<16x1xi32>
    %1470 = vector.broadcast %1467 : i32 to vector<16x1xi32>
    %1471 = arith.cmpi slt, %39, %1470 : vector<16x1xi32>
    %1472 = arith.andi %1469, %1471 : vector<16x1xi1>
    %cst_660 = arith.constant 0xFF800000 : f32
    %1473 = vector.shape_cast %1472 : vector<16x1xi1> to vector<16x1xi1>
    %1474 = vector.broadcast %1473 : vector<16x1xi1> to vector<16x4xi1>
    %1475 = vector.broadcast %cst_660 : f32 to vector<16x4xf32>
    %1476 = arith.select %1474, %1425, %1475 : vector<16x4xi1>, vector<16x4xf32>
    %cst_661 = arith.constant dense<0xFF800000> : vector<4xf32>
    %1477 = vector.multi_reduction <maximumf>, %1476, %cst_661 [0] : vector<16x4xf32> to vector<4xf32>
    %1478 = vector.shape_cast %1477 : vector<4xf32> to vector<1x4xf32>
    %1479 = arith.cmpi sgt, %1467, %1461 : i32
    %1480 = arith.andi %1420, %1479 : i1
    %cst_662 = arith.constant 0.000000e+00 : f32
    %1481 = vector.broadcast %cst_662 : f32 to vector<1x4xf32>
    %1482 = arith.select %1480, %1478, %1481 : vector<1x4xf32>
    %c0_663 = arith.constant 0 : index
    %c6_664 = arith.constant 6 : index
    %c1_665 = arith.constant 1 : index
    %c0_666 = arith.constant 0 : index
    %1483 = vector.load %arg5[%c0_663, %c6_664, %c1_665, %c0_666] : memref<1x7x7x4xf32, #tpu.memory_space<vmem>>, vector<1x1x1x4xf32>
    %1484 = vector.shape_cast %1483 : vector<1x1x1x4xf32> to vector<1x4xf32>
    %1485 = vector.shape_cast %1482 : vector<1x4xf32> to vector<1x1x1x4xf32>
    tpu.vector_store %arg5[%c0_663, %c6_664, %c1_665, %c0_666], %1485 {strides = array<i32>} : memref<1x7x7x4xf32, #tpu.memory_space<vmem>>, vector<1x1x1x4xf32>,
    %cst_667 = arith.constant 2.000000e+00 : f32
    %1486 = arith.mulf %cst_667, %38 : f32
    %1487 = math.floor %1486 : f32
    %1488 = arith.fptosi %1487 : f32 to i32
    %1489 = arith.addi %1488, %16 : i32
    %c0_i32_668 = arith.constant 0 : i32
    %c16_i32_669 = arith.constant 16 : i32
    %1490 = arith.maxsi %c0_i32_668, %1489 : i32
    %1491 = arith.minsi %c16_i32_669, %1490 : i32
    %cst_670 = arith.constant 3.000000e+00 : f32
    %1492 = arith.mulf %cst_670, %38 : f32
    %1493 = math.ceil %1492 : f32
    %1494 = arith.fptosi %1493 : f32 to i32
    %1495 = arith.addi %1494, %16 : i32
    %c0_i32_671 = arith.constant 0 : i32
    %c16_i32_672 = arith.constant 16 : i32
    %1496 = arith.maxsi %c0_i32_671, %1495 : i32
    %1497 = arith.minsi %c16_i32_672, %1496 : i32
    %1498 = vector.broadcast %1491 : i32 to vector<16x1xi32>
    %1499 = arith.cmpi sge, %39, %1498 : vector<16x1xi32>
    %1500 = vector.broadcast %1497 : i32 to vector<16x1xi32>
    %1501 = arith.cmpi slt, %39, %1500 : vector<16x1xi32>
    %1502 = arith.andi %1499, %1501 : vector<16x1xi1>
    %cst_673 = arith.constant 0xFF800000 : f32
    %1503 = vector.shape_cast %1502 : vector<16x1xi1> to vector<16x1xi1>
    %1504 = vector.broadcast %1503 : vector<16x1xi1> to vector<16x4xi1>
    %1505 = vector.broadcast %cst_673 : f32 to vector<16x4xf32>
    %1506 = arith.select %1504, %1425, %1505 : vector<16x4xi1>, vector<16x4xf32>
    %cst_674 = arith.constant dense<0xFF800000> : vector<4xf32>
    %1507 = vector.multi_reduction <maximumf>, %1506, %cst_674 [0] : vector<16x4xf32> to vector<4xf32>
    %1508 = vector.shape_cast %1507 : vector<4xf32> to vector<1x4xf32>
    %1509 = arith.cmpi sgt, %1497, %1491 : i32
    %1510 = arith.andi %1420, %1509 : i1
    %cst_675 = arith.constant 0.000000e+00 : f32
    %1511 = vector.broadcast %cst_675 : f32 to vector<1x4xf32>
    %1512 = arith.select %1510, %1508, %1511 : vector<1x4xf32>
    %c0_676 = arith.constant 0 : index
    %c6_677 = arith.constant 6 : index
    %c2_678 = arith.constant 2 : index
    %c0_679 = arith.constant 0 : index
    %1513 = vector.load %arg5[%c0_676, %c6_677, %c2_678, %c0_679] : memref<1x7x7x4xf32, #tpu.memory_space<vmem>>, vector<1x1x1x4xf32>
    %1514 = vector.shape_cast %1513 : vector<1x1x1x4xf32> to vector<1x4xf32>
    %1515 = vector.shape_cast %1512 : vector<1x4xf32> to vector<1x1x1x4xf32>
    tpu.vector_store %arg5[%c0_676, %c6_677, %c2_678, %c0_679], %1515 {strides = array<i32>} : memref<1x7x7x4xf32, #tpu.memory_space<vmem>>, vector<1x1x1x4xf32>,
    %cst_680 = arith.constant 3.000000e+00 : f32
    %1516 = arith.mulf %cst_680, %38 : f32
    %1517 = math.floor %1516 : f32
    %1518 = arith.fptosi %1517 : f32 to i32
    %1519 = arith.addi %1518, %16 : i32
    %c0_i32_681 = arith.constant 0 : i32
    %c16_i32_682 = arith.constant 16 : i32
    %1520 = arith.maxsi %c0_i32_681, %1519 : i32
    %1521 = arith.minsi %c16_i32_682, %1520 : i32
    %cst_683 = arith.constant 4.000000e+00 : f32
    %1522 = arith.mulf %cst_683, %38 : f32
    %1523 = math.ceil %1522 : f32
    %1524 = arith.fptosi %1523 : f32 to i32
    %1525 = arith.addi %1524, %16 : i32
    %c0_i32_684 = arith.constant 0 : i32
    %c16_i32_685 = arith.constant 16 : i32
    %1526 = arith.maxsi %c0_i32_684, %1525 : i32
    %1527 = arith.minsi %c16_i32_685, %1526 : i32
    %1528 = vector.broadcast %1521 : i32 to vector<16x1xi32>
    %1529 = arith.cmpi sge, %39, %1528 : vector<16x1xi32>
    %1530 = vector.broadcast %1527 : i32 to vector<16x1xi32>
    %1531 = arith.cmpi slt, %39, %1530 : vector<16x1xi32>
    %1532 = arith.andi %1529, %1531 : vector<16x1xi1>
    %cst_686 = arith.constant 0xFF800000 : f32
    %1533 = vector.shape_cast %1532 : vector<16x1xi1> to vector<16x1xi1>
    %1534 = vector.broadcast %1533 : vector<16x1xi1> to vector<16x4xi1>
    %1535 = vector.broadcast %cst_686 : f32 to vector<16x4xf32>
    %1536 = arith.select %1534, %1425, %1535 : vector<16x4xi1>, vector<16x4xf32>
    %cst_687 = arith.constant dense<0xFF800000> : vector<4xf32>
    %1537 = vector.multi_reduction <maximumf>, %1536, %cst_687 [0] : vector<16x4xf32> to vector<4xf32>
    %1538 = vector.shape_cast %1537 : vector<4xf32> to vector<1x4xf32>
    %1539 = arith.cmpi sgt, %1527, %1521 : i32
    %1540 = arith.andi %1420, %1539 : i1
    %cst_688 = arith.constant 0.000000e+00 : f32
    %1541 = vector.broadcast %cst_688 : f32 to vector<1x4xf32>
    %1542 = arith.select %1540, %1538, %1541 : vector<1x4xf32>
    %c0_689 = arith.constant 0 : index
    %c6_690 = arith.constant 6 : index
    %c3_691 = arith.constant 3 : index
    %c0_692 = arith.constant 0 : index
    %1543 = vector.load %arg5[%c0_689, %c6_690, %c3_691, %c0_692] : memref<1x7x7x4xf32, #tpu.memory_space<vmem>>, vector<1x1x1x4xf32>
    %1544 = vector.shape_cast %1543 : vector<1x1x1x4xf32> to vector<1x4xf32>
    %1545 = vector.shape_cast %1542 : vector<1x4xf32> to vector<1x1x1x4xf32>
    tpu.vector_store %arg5[%c0_689, %c6_690, %c3_691, %c0_692], %1545 {strides = array<i32>} : memref<1x7x7x4xf32, #tpu.memory_space<vmem>>, vector<1x1x1x4xf32>,
    %cst_693 = arith.constant 4.000000e+00 : f32
    %1546 = arith.mulf %cst_693, %38 : f32
    %1547 = math.floor %1546 : f32
    %1548 = arith.fptosi %1547 : f32 to i32
    %1549 = arith.addi %1548, %16 : i32
    %c0_i32_694 = arith.constant 0 : i32
    %c16_i32_695 = arith.constant 16 : i32
    %1550 = arith.maxsi %c0_i32_694, %1549 : i32
    %1551 = arith.minsi %c16_i32_695, %1550 : i32
    %cst_696 = arith.constant 5.000000e+00 : f32
    %1552 = arith.mulf %cst_696, %38 : f32
    %1553 = math.ceil %1552 : f32
    %1554 = arith.fptosi %1553 : f32 to i32
    %1555 = arith.addi %1554, %16 : i32
    %c0_i32_697 = arith.constant 0 : i32
    %c16_i32_698 = arith.constant 16 : i32
    %1556 = arith.maxsi %c0_i32_697, %1555 : i32
    %1557 = arith.minsi %c16_i32_698, %1556 : i32
    %1558 = vector.broadcast %1551 : i32 to vector<16x1xi32>
    %1559 = arith.cmpi sge, %39, %1558 : vector<16x1xi32>
    %1560 = vector.broadcast %1557 : i32 to vector<16x1xi32>
    %1561 = arith.cmpi slt, %39, %1560 : vector<16x1xi32>
    %1562 = arith.andi %1559, %1561 : vector<16x1xi1>
    %cst_699 = arith.constant 0xFF800000 : f32
    %1563 = vector.shape_cast %1562 : vector<16x1xi1> to vector<16x1xi1>
    %1564 = vector.broadcast %1563 : vector<16x1xi1> to vector<16x4xi1>
    %1565 = vector.broadcast %cst_699 : f32 to vector<16x4xf32>
    %1566 = arith.select %1564, %1425, %1565 : vector<16x4xi1>, vector<16x4xf32>
    %cst_700 = arith.constant dense<0xFF800000> : vector<4xf32>
    %1567 = vector.multi_reduction <maximumf>, %1566, %cst_700 [0] : vector<16x4xf32> to vector<4xf32>
    %1568 = vector.shape_cast %1567 : vector<4xf32> to vector<1x4xf32>
    %1569 = arith.cmpi sgt, %1557, %1551 : i32
    %1570 = arith.andi %1420, %1569 : i1
    %cst_701 = arith.constant 0.000000e+00 : f32
    %1571 = vector.broadcast %cst_701 : f32 to vector<1x4xf32>
    %1572 = arith.select %1570, %1568, %1571 : vector<1x4xf32>
    %c0_702 = arith.constant 0 : index
    %c6_703 = arith.constant 6 : index
    %c4_704 = arith.constant 4 : index
    %c0_705 = arith.constant 0 : index
    %1573 = vector.load %arg5[%c0_702, %c6_703, %c4_704, %c0_705] : memref<1x7x7x4xf32, #tpu.memory_space<vmem>>, vector<1x1x1x4xf32>
    %1574 = vector.shape_cast %1573 : vector<1x1x1x4xf32> to vector<1x4xf32>
    %1575 = vector.shape_cast %1572 : vector<1x4xf32> to vector<1x1x1x4xf32>
    tpu.vector_store %arg5[%c0_702, %c6_703, %c4_704, %c0_705], %1575 {strides = array<i32>} : memref<1x7x7x4xf32, #tpu.memory_space<vmem>>, vector<1x1x1x4xf32>,
    %cst_706 = arith.constant 5.000000e+00 : f32
    %1576 = arith.mulf %cst_706, %38 : f32
    %1577 = math.floor %1576 : f32
    %1578 = arith.fptosi %1577 : f32 to i32
    %1579 = arith.addi %1578, %16 : i32
    %c0_i32_707 = arith.constant 0 : i32
    %c16_i32_708 = arith.constant 16 : i32
    %1580 = arith.maxsi %c0_i32_707, %1579 : i32
    %1581 = arith.minsi %c16_i32_708, %1580 : i32
    %cst_709 = arith.constant 6.000000e+00 : f32
    %1582 = arith.mulf %cst_709, %38 : f32
    %1583 = math.ceil %1582 : f32
    %1584 = arith.fptosi %1583 : f32 to i32
    %1585 = arith.addi %1584, %16 : i32
    %c0_i32_710 = arith.constant 0 : i32
    %c16_i32_711 = arith.constant 16 : i32
    %1586 = arith.maxsi %c0_i32_710, %1585 : i32
    %1587 = arith.minsi %c16_i32_711, %1586 : i32
    %1588 = vector.broadcast %1581 : i32 to vector<16x1xi32>
    %1589 = arith.cmpi sge, %39, %1588 : vector<16x1xi32>
    %1590 = vector.broadcast %1587 : i32 to vector<16x1xi32>
    %1591 = arith.cmpi slt, %39, %1590 : vector<16x1xi32>
    %1592 = arith.andi %1589, %1591 : vector<16x1xi1>
    %cst_712 = arith.constant 0xFF800000 : f32
    %1593 = vector.shape_cast %1592 : vector<16x1xi1> to vector<16x1xi1>
    %1594 = vector.broadcast %1593 : vector<16x1xi1> to vector<16x4xi1>
    %1595 = vector.broadcast %cst_712 : f32 to vector<16x4xf32>
    %1596 = arith.select %1594, %1425, %1595 : vector<16x4xi1>, vector<16x4xf32>
    %cst_713 = arith.constant dense<0xFF800000> : vector<4xf32>
    %1597 = vector.multi_reduction <maximumf>, %1596, %cst_713 [0] : vector<16x4xf32> to vector<4xf32>
    %1598 = vector.shape_cast %1597 : vector<4xf32> to vector<1x4xf32>
    %1599 = arith.cmpi sgt, %1587, %1581 : i32
    %1600 = arith.andi %1420, %1599 : i1
    %cst_714 = arith.constant 0.000000e+00 : f32
    %1601 = vector.broadcast %cst_714 : f32 to vector<1x4xf32>
    %1602 = arith.select %1600, %1598, %1601 : vector<1x4xf32>
    %c0_715 = arith.constant 0 : index
    %c6_716 = arith.constant 6 : index
    %c5_717 = arith.constant 5 : index
    %c0_718 = arith.constant 0 : index
    %1603 = vector.load %arg5[%c0_715, %c6_716, %c5_717, %c0_718] : memref<1x7x7x4xf32, #tpu.memory_space<vmem>>, vector<1x1x1x4xf32>
    %1604 = vector.shape_cast %1603 : vector<1x1x1x4xf32> to vector<1x4xf32>
    %1605 = vector.shape_cast %1602 : vector<1x4xf32> to vector<1x1x1x4xf32>
    tpu.vector_store %arg5[%c0_715, %c6_716, %c5_717, %c0_718], %1605 {strides = array<i32>} : memref<1x7x7x4xf32, #tpu.memory_space<vmem>>, vector<1x1x1x4xf32>,
    %cst_719 = arith.constant 6.000000e+00 : f32
    %1606 = arith.mulf %cst_719, %38 : f32
    %1607 = math.floor %1606 : f32
    %1608 = arith.fptosi %1607 : f32 to i32
    %1609 = arith.addi %1608, %16 : i32
    %c0_i32_720 = arith.constant 0 : i32
    %c16_i32_721 = arith.constant 16 : i32
    %1610 = arith.maxsi %c0_i32_720, %1609 : i32
    %1611 = arith.minsi %c16_i32_721, %1610 : i32
    %cst_722 = arith.constant 7.000000e+00 : f32
    %1612 = arith.mulf %cst_722, %38 : f32
    %1613 = math.ceil %1612 : f32
    %1614 = arith.fptosi %1613 : f32 to i32
    %1615 = arith.addi %1614, %16 : i32
    %c0_i32_723 = arith.constant 0 : i32
    %c16_i32_724 = arith.constant 16 : i32
    %1616 = arith.maxsi %c0_i32_723, %1615 : i32
    %1617 = arith.minsi %c16_i32_724, %1616 : i32
    %1618 = vector.broadcast %1611 : i32 to vector<16x1xi32>
    %1619 = arith.cmpi sge, %39, %1618 : vector<16x1xi32>
    %1620 = vector.broadcast %1617 : i32 to vector<16x1xi32>
    %1621 = arith.cmpi slt, %39, %1620 : vector<16x1xi32>
    %1622 = arith.andi %1619, %1621 : vector<16x1xi1>
    %cst_725 = arith.constant 0xFF800000 : f32
    %1623 = vector.shape_cast %1622 : vector<16x1xi1> to vector<16x1xi1>
    %1624 = vector.broadcast %1623 : vector<16x1xi1> to vector<16x4xi1>
    %1625 = vector.broadcast %cst_725 : f32 to vector<16x4xf32>
    %1626 = arith.select %1624, %1425, %1625 : vector<16x4xi1>, vector<16x4xf32>
    %cst_726 = arith.constant dense<0xFF800000> : vector<4xf32>
    %1627 = vector.multi_reduction <maximumf>, %1626, %cst_726 [0] : vector<16x4xf32> to vector<4xf32>
    %1628 = vector.shape_cast %1627 : vector<4xf32> to vector<1x4xf32>
    %1629 = arith.cmpi sgt, %1617, %1611 : i32
    %1630 = arith.andi %1420, %1629 : i1
    %cst_727 = arith.constant 0.000000e+00 : f32
    %1631 = vector.broadcast %cst_727 : f32 to vector<1x4xf32>
    %1632 = arith.select %1630, %1628, %1631 : vector<1x4xf32>
    %c0_728 = arith.constant 0 : index
    %c6_729 = arith.constant 6 : index
    %c6_730 = arith.constant 6 : index
    %c0_731 = arith.constant 0 : index
    %1633 = vector.load %arg5[%c0_728, %c6_729, %c6_730, %c0_731] : memref<1x7x7x4xf32, #tpu.memory_space<vmem>>, vector<1x1x1x4xf32>
    %1634 = vector.shape_cast %1633 : vector<1x1x1x4xf32> to vector<1x4xf32>
    %1635 = vector.shape_cast %1632 : vector<1x4xf32> to vector<1x1x1x4xf32>
    tpu.vector_store %arg5[%c0_728, %c6_729, %c6_730, %c0_731], %1635 {strides = array<i32>} : memref<1x7x7x4xf32, #tpu.memory_space<vmem>>, vector<1x1x1x4xf32>,
    return
  }
  func.func @transform_0(%arg0: i32, %arg1: i32, %arg2: memref<3xi32, #tpu.memory_space<smem>>) -> i32 {
    %c0_i32 = arith.constant 0 : i32
    %c0_i32_0 = arith.constant 0 : i32
    return %c0_i32 : i32
  }
  func.func @transform_1(%arg0: i32, %arg1: i32, %arg2: memref<3xi32, #tpu.memory_space<smem>>) -> (i32, i32, i32, i32) {
    %0 = arith.index_cast %arg1 : i32 to index
    %1 = memref.load %arg2[%0] : memref<3xi32, #tpu.memory_space<smem>>
    %c0_i32 = arith.constant 0 : i32
    %c0_i32_0 = arith.constant 0 : i32
    %c0_i32_1 = arith.constant 0 : i32
    return %1, %c0_i32, %c0_i32_0, %arg0 : i32, i32, i32, i32
  }
  func.func @transform_2(%arg0: i32, %arg1: i32, %arg2: memref<3xi32, #tpu.memory_space<smem>>) -> (i32, i32, i32, i32) {
    %c0_i32 = arith.constant 0 : i32
    %c0_i32_0 = arith.constant 0 : i32
    %c0_i32_1 = arith.constant 0 : i32
    return %arg1, %c0_i32, %c0_i32_0, %arg0 : i32, i32, i32, i32
  }
}

</mosaic_0001>

<llo_original>
// kernel: tpu_custom_call.1
$region0: #{tpu_custom_call.1}
  #allocation0 [shape = 'u32[]', space=smem, size = 0x4, offset = 0x4, fixed_abs, tag = 'smem constant byte address 0x4 - core index']
  #allocation1 [shape = 'u32[72,128]{1,0:T(1,128)}', space=vmem, size = 0x9000, scoped, tag = 'internal scratch']
  #allocation2 [shape = 'f32[16,4]{1,0:T(8,128)}', space=vmem, size = 0x2000, scoped, tag = 'scratch operand']
  #allocation3 [shape = 's32[1]{0}', space=sflag, size = 0x4, scoped, tag = 'scoped memory for tpu_custom_call.1']
  #allocation4 [shape = 'u8[512]{0}', space=smem, size = 0x200, scoped, tag = 'prefetched SMEM operand 0']
  %s0 = inlined_call_operand.vmem [shape: s32[3], index: 0, kind: input, shape index: {}]
  %s1 = inlined_call_operand.vmem [shape: f32[15], index: 1, kind: input, shape index: {}]
  %s2 = inlined_call_operand.vmem [shape: f32[2,16,16,4], index: 2, kind: input, shape index: {}]
  %s3 = inlined_call_operand.vmem [shape: f32[3,7,7,4], index: 3, kind: output, shape index: {}]
  %s4 = sld [smem:[#allocation0]]
  $region94: #{tpu_custom_call.1} parent=0
    _
  %s6 = ssub.s32 1, %s4
  %s7 = scalar_select 0, %s6, %s4
  %s9 = sshll.u32 %s0, 4
  %s10 = int_to_ptr.vmem [resolvable:$true] %s9
  %12 = dma.vmem_to_smem %s10, 16, [#allocation4], [#allocation3]
  %14 = dma.done [#allocation3], 16
  %15 = sfence
  $region1: #{tpu_custom_call.1} parent=0
    #allocation5 [shape = 'u8[512]{0}', space=smem, size = 0x200, scoped, tag = 'input window, operand 1, single buffered']
    #allocation6 [shape = 's32[2]{0}', space=sflag, size = 0x8, scoped, tag = 'scoped memory for tpu_custom_call.1']
    %16 = vsyncpa [#allocation6], 0
    loop: start=0, step=1, limit=5
    $region2: #{tpu_custom_call.1} parent=1 // loop_pre_header
      _
    $region3: #{tpu_custom_call.1} parent=1 // loop_header
      %s18 = sphi 0, %s22
      %p19 = scmp.ge.s32.totalorder %s18, 5
      %s25 = sphi 0, %s37
      %s26 = sphi 0, %s33
      %s27 = sphi 0, %s25
      %s28 = sphi 0, %s26
      %s29 = sphi 0, %s27
      %s30 = sphi 0, %s28
      %s38 = sphi 0, %s38
      %s40 = sphi 0, %s38
      %s41 = sphi 0, %s40
      %s55 = sphi 0, %s41
      %s65 = sphi 0, %s67
      %s68 = sphi 0, %s65
      %s69 = sphi 0, %s68
      %s85 = sphi 0, %s69
      %s93 = sphi 0, %s95
      %s96 = sphi 0, %s93
      %s97 = sphi 0, %s96
      %s113 = sphi 0, %s97
    $region4: #{tpu_custom_call.1} parent=1 // loop_header_branch
      %21 = sbr.rel (%p19) target = $region8
    $region5: #{tpu_custom_call.1} parent=1 // loop_body
      %s23 = ssub.s32 %s18, 1
      %s24 = ssub.s32 %s18, 2
      %s31 = sadd.s32 1, %s26
      %p32 = scmp.ge.s32.totalorder %s31, 3
      %s33 = scalar_select %p32, 0, %s31
      %s34 = sadd.s32 1, %s25
      %s35 = scalar_select %p32, %s34, %s25
      %p36 = scmp.ge.s32.totalorder %s35, 1
      %s37 = scalar_select %p36, 0, %s35
      %s39 = sadd.s32 %s38, 1
      %p42 = scmp.eq.s32.totalorder %s18, 2
      %p43 = scmp.ne.s32.totalorder %s38, %s40
      %p44 = scmp.eq.s32.totalorder %s18, 0
      %p45 = por %p43, %p44
      %p46 = scmp.ne.s32.totalorder %s38, %s40
      %p47 = scmp.eq.s32.totalorder %s23, 2
      %p48 = por %p46, %p47
      %p49 = scmp.ne.s32.totalorder %s40, %s41
      %p50 = scmp.eq.s32.totalorder %s23, 0
      %p51 = por %p49, %p50
      %p52 = scmp.ne.s32.totalorder %s40, %s41
      %p53 = scmp.eq.s32.totalorder %s24, 2
      %p54 = por %p52, %p53
      %p56 = scmp.ne.s32.totalorder %s41, %s55
      %p57 = scmp.eq.s32.totalorder %s24, 0
      %p58 = por %p56, %p57
      %s59 = sld [smem:[#allocation4 + %s26]]
      %s60 = sld [smem:[#allocation4 + %s33]]
      %s61 = ssub.s32 %s59, %s60
      %s62 = ssub.s32 %s25, %s37
      %s63 = sor.u32 %s61, %s62
      %p64 = scmp.eq.s32.totalorder %s63, 0
      %s66 = sadd.s32 %s65, 1
      %s67 = scalar_select %p64, %s65, %s66
      %p70 = pneg %p64
      %p71 = scmp.eq.s32.totalorder %s18, 2
      %p72 = por %p70, %p71
      %p73 = scmp.ne.s32.totalorder %s65, %s68
      %p74 = scmp.eq.s32.totalorder %s18, 0
      %p75 = por %p73, %p74
      %p76 = scmp.ne.s32.totalorder %s65, %s68
      %p77 = scmp.eq.s32.totalorder %s23, 2
      %p78 = por %p76, %p77
      %p79 = scmp.ne.s32.totalorder %s68, %s69
      %p80 = scmp.eq.s32.totalorder %s23, 0
      %p81 = por %p79, %p80
      %p82 = scmp.ne.s32.totalorder %s68, %s69
      %p83 = scmp.eq.s32.totalorder %s24, 2
      %p84 = por %p82, %p83
      %p86 = scmp.ne.s32.totalorder %s69, %s85
      %p87 = scmp.eq.s32.totalorder %s24, 0
      %p88 = por %p86, %p87
      %s89 = ssub.s32 %s26, %s33
      %s90 = ssub.s32 %s25, %s37
      %s91 = sor.u32 %s89, %s90
      %p92 = scmp.eq.s32.totalorder %s91, 0
      %s94 = sadd.s32 %s93, 1
      %s95 = scalar_select %p92, %s93, %s94
      %p98 = pneg %p92
      %p99 = scmp.eq.s32.totalorder %s18, 2
      %p100 = por %p98, %p99
      %p101 = scmp.ne.s32.totalorder %s93, %s96
      %p102 = scmp.eq.s32.totalorder %s18, 0
      %p103 = por %p101, %p102
      %p104 = scmp.ne.s32.totalorder %s93, %s96
      %p105 = scmp.eq.s32.totalorder %s23, 2
      %p106 = por %p104, %p105
      %p107 = scmp.ne.s32.totalorder %s96, %s97
      %p108 = scmp.eq.s32.totalorder %s23, 0
      %p109 = por %p107, %p108
      %p110 = scmp.ne.s32.totalorder %s96, %s97
      %p111 = scmp.eq.s32.totalorder %s24, 2
      %p112 = por %p110, %p111
      %p114 = scmp.ne.s32.totalorder %s97, %s113
      %p115 = scmp.eq.s32.totalorder %s24, 0
      %p116 = por %p114, %p115
      %p117 = scmp.le.s32.totalorder 1, %s18
      %p118 = scmp.lt.s32.totalorder %s18, 4
      %p119 = pnand %p117, %p118
      %p120 = pneg %p119
      // Predicated region
      $region9: #{tpu_custom_call.1} parent=5 // pred_check
        _
      $region10: #{tpu_custom_call.1} parent=5 // pred_check_branch
        %122 = sbr.rel (%p119) target = $region12
      $region11: #{tpu_custom_call.1} parent=5 // pred_region
        %s123 = ssub.s32 %s18, 1
        // Predicated region
        $region13: #{tpu_custom_call.1} parent=11 // pred_check
          %p124 = pneg %p51
        $region14: #{tpu_custom_call.1} parent=11 // pred_check_branch
          %126 = sbr.rel (%p124) target = $region16
        $region15: #{tpu_custom_call.1} parent=11 // pred_region
          %128 = vsyncadd [#allocation6], 0
          %s130 = sshll.u32 %s1, 4
          %s131 = int_to_ptr.vmem [resolvable:$true] %s130
          %133 = dma.vmem_to_smem %s131, 16, [#allocation5], [#allocation6]
        $region16: #{tpu_custom_call.1} parent=11 // pred_fallthru
          _
      $region12: #{tpu_custom_call.1} parent=5 // pred_fallthru
        _
      %p134 = scmp.lt.s32.totalorder %s18, 3
      // Predicated region
      $region17: #{tpu_custom_call.1} parent=5 // pred_check
        %p135 = pneg %p134
      $region18: #{tpu_custom_call.1} parent=5 // pred_check_branch
        %137 = sbr.rel (%p135) target = $region20
      $region19: #{tpu_custom_call.1} parent=5 // pred_region
        // Predicated region
        $region21: #{tpu_custom_call.1} parent=19 // pred_check
          %p138 = pneg %p75
        $region22: #{tpu_custom_call.1} parent=19 // pred_check_branch
          %140 = sbr.rel (%p138) target = $region24
        $region23: #{tpu_custom_call.1} parent=19 // pred_region
          %s141 = sld [smem:[#allocation4 + %s26]]
          %p142 = scmp.lt.s32.totalorder %s141, 1
          %s143 = scalar_select %p142, %s141, 1
          %p144 = scmp.lt.s32.totalorder %s25, 0
          %s145 = scalar_select %p144, %s25, 0
          %s146 = smul.addr %s143, 32
          %s147 = sadd.s32 %s145, %s146
          %s148 = smul.addr %s147, 8
          %s149 = scalar_lea.vmem %s2, %s148
          %s150 = sld [smem:[#allocation4 + %s26]]
        $region24: #{tpu_custom_call.1} parent=19 // pred_fallthru
          _
      $region20: #{tpu_custom_call.1} parent=5 // pred_fallthru
        _
      %p151 = scmp.le.s32.totalorder 1, %s18
      %p152 = scmp.lt.s32.totalorder %s18, 4
      %p153 = pnand %p151, %p152
      %p154 = pneg %p153
      // Predicated region
      $region25: #{tpu_custom_call.1} parent=5 // pred_check
        _
      $region26: #{tpu_custom_call.1} parent=5 // pred_check_branch
        %156 = sbr.rel (%p153) target = $region28
      $region27: #{tpu_custom_call.1} parent=5 // pred_region
        %s157 = ssub.s32 %s18, 1
        // Predicated region
        $region29: #{tpu_custom_call.1} parent=27 // pred_check
          %p158 = pneg %p51
        $region30: #{tpu_custom_call.1} parent=27 // pred_check_branch
          %160 = sbr.rel (%p158) target = $region32
        $region31: #{tpu_custom_call.1} parent=27 // pred_region
          %162 = dma.done [#allocation6], 16
        $region32: #{tpu_custom_call.1} parent=27 // pred_fallthru
          _
        %163 = sfence
        %p164 = pneg %p51
        %p165 = pneg %p48
        %s166 = sld [smem:[#allocation4 + %s28]]
        %p167 = scmp.lt.s32.totalorder %s166, 1
        %s168 = scalar_select %p167, %s166, 1
        %p169 = scmp.lt.s32.totalorder %s27, 0
        %s170 = scalar_select %p169, %s27, 0
        %s171 = smul.addr %s168, 32
        %s172 = sadd.s32 %s170, %s171
        %s173 = smul.addr %s172, 8
        %s174 = scalar_lea.vmem %s2, %s173
        %p175 = pneg %p81
        %p176 = pneg %p78
        %p177 = pneg %p109
        %p178 = pneg %p106
        %p179 = scmp.lt.s32.totalorder %s28, 2
        %s180 = scalar_select %p179, %s28, 2
        %p181 = scmp.lt.s32.totalorder %s27, 0
        %s182 = scalar_select %p181, %s27, 0
        %s183 = smul.addr %s180, 7
        %s184 = sadd.s32 %s182, %s183
        %s185 = smul.addr %s184, 8
        %s186 = scalar_lea.vmem %s3, %s185
        %s187 = sld [smem:[#allocation4 + %s28]]
        %p188 = scmp.lt.s32.totalorder %s187, 1
        %s189 = scalar_select %p188, %s187, 1
        %p190 = scmp.lt.s32.totalorder %s27, 0
        %s191 = scalar_select %p190, %s27, 0
        %s192 = smul.addr %s189, 32
        %s193 = sadd.s32 %s191, %s192
        %s194 = smul.addr %s193, 8
        %s195 = scalar_lea.vmem %s2, %s194
        %s196 = sld [smem:[#allocation4 + %s28]]
        %p197 = scmp.lt.s32.totalorder %s28, 2
        %s198 = scalar_select %p197, %s28, 2
        %p199 = scmp.lt.s32.totalorder %s27, 0
        %s200 = scalar_select %p199, %s27, 0
        %s201 = smul.addr %s198, 7
        %s202 = sadd.s32 %s200, %s201
        %s203 = smul.addr %s202, 8
        %s204 = scalar_lea.vmem %s3, %s203
        %s205 = smul.u32 %s28, 5
        %s206 = sadd.s32 %s205, 1
        %s207 = sld [smem:[#allocation5 + %s206]]
        %s208 = sadd.s32 %s205, 2
        %s209 = sld [smem:[#allocation5 + %s208]]
        %s210 = sadd.s32 %s205, 3
        %s211 = sld [smem:[#allocation5 + %s210]]
        %s212 = sadd.s32 %s205, 4
        %s213 = sld [smem:[#allocation5 + %s212]]
        %s214 = smul.f32 %s207, 0.5
        %s215 = sadd.f32 %s214, 0.5
        %s216 = sfloor.f32 %s215
        %s217 = scvt.f32.s32.to.zero.pseudo %s216
        %s218 = smul.f32 %s209, 0.5
        %s219 = sadd.f32 %s218, 0.5
        %s220 = sfloor.f32 %s219
        %s221 = scvt.f32.s32.to.zero.pseudo %s220
        %s222 = smul.f32 %s211, 0.5
        %s223 = sadd.f32 %s222, 0.5
        %s224 = sfloor.f32 %s223
        %s225 = scvt.f32.s32.to.zero.pseudo %s224
        %s226 = smul.f32 %s213, 0.5
        %s227 = sadd.f32 %s226, 0.5
        %s228 = sfloor.f32 %s227
        %s229 = scvt.f32.s32.to.zero.pseudo %s228
        %s230 = ssub.s32 %s225, %s217
        %s231 = sadd.s32 %s230, 1
        %p232 = scmp.gt.s32.totalorder %s231, 1
        %s233 = scalar_select %p232, %s231, 1
        %s234 = ssub.s32 %s229, %s221
        %s235 = sadd.s32 %s234, 1
        %p236 = scmp.gt.s32.totalorder %s235, 1
        %s237 = scalar_select %p236, %s235, 1
        %s238 = scvt.s32.f32 %s237
        %v239 = vrcp.pop 7.0
        %v240 = vmul.f32 7.0, %v239
        %v241 = vsub.f32 1.0, %v240
        %v242 = vmul.f32 %v239, %v241
        %v243 = vadd.f32 %v239, %v242
        %vm244 = vweird.f32 %v239
        %v245 = vsel %vm244, %v239, %v243
        %s246 = vtos %v245
        %s247 = smul.f32 %s238, %s246
        %s248 = scvt.s32.f32 %s233
        %v249 = vrcp.pop 7.0
        %v250 = vmul.f32 7.0, %v249
        %v251 = vsub.f32 1.0, %v250
        %v252 = vmul.f32 %v249, %v251
        %v253 = vadd.f32 %v249, %v252
        %vm254 = vweird.f32 %v249
        %v255 = vsel %vm254, %v249, %v253
        %s256 = vtos %v255
        %s257 = smul.f32 %s248, %s256
        %v258 = vlaneseq
        %v259 = vshrl.u32 %v258, 7
        %v260 = vadd.s32 %v259, 8
        %s261 = smul.f32 %s247, 0.0
        %s262 = sfloor.f32 %s261
        %s263 = scvt.f32.s32.to.zero.pseudo %s262
        %s264 = sadd.s32 %s263, %s221
        %p265 = scmp.gt.s32.totalorder %s264, 0
        %s266 = scalar_select %p265, %s264, 0
        %p267 = scmp.lt.s32.totalorder %s266, 16
        %s268 = scalar_select %p267, %s266, 16
        %s269 = sceil.f32 %s247
        %s270 = scvt.f32.s32.to.zero.pseudo %s269
        %s271 = sadd.s32 %s270, %s221
        %p272 = scmp.gt.s32.totalorder %s271, 0
        %s273 = scalar_select %p272, %s271, 0
        %p274 = scmp.lt.s32.totalorder %s273, 16
        %s275 = scalar_select %p274, %s273, 16
        %p276 = scmp.gt.s32.totalorder %s275, %s268
        %vm277 = vcmask 31744
        %278 = vst.msk [vmem:[#allocation2] sm:$0xff] %vm277, -inf
        %279 = vst.msk [vmem:[#allocation2 + $0x8] sm:$0xff] %vm277, -inf
        // While loop
        $region33: #{tpu_custom_call.1} parent=27 // loop_pre_header
          _
        $region34: #{tpu_custom_call.1} parent=27 // loop_header
          %s281 = sphi %s268, %s283
          %p282 = scmp.ge.s32.totalorder %s281, %s275
        $region35: #{tpu_custom_call.1} parent=27 // loop_header_branch
          %285 = sbr.rel (%p282) target = $region39
        $region36: #{tpu_custom_call.1} parent=27 // loop_body
          %v286 = vld [vmem:[#allocation2] sm:$0xff]
          %v287 = vld [vmem:[#allocation2 + $0x8] sm:$0xff]
          %s288 = smul.u32 %s281, 16
          %s289 = scalar_lea.vmem %s195, %s288
          %v290 = vld [vmem:[%s289] sm:$0xff]
          %v291 = vld [vmem:[%s289 + $0x8] sm:$0xff]
          %v292 = vmax.f32 %v286, %v290
          %v293 = vmax.f32 %v287, %v291
          %294 = vst.msk [vmem:[#allocation2] sm:$0xff] %vm277, %v292
          %295 = vst.msk [vmem:[#allocation2 + $0x8] sm:$0xff] %vm277, %v293
        $region37: #{tpu_custom_call.1} parent=27 // loop_footer
          %s283 = sadd.s32 %s281, 1
        $region38: #{tpu_custom_call.1} parent=27 // loop_footer_branch
          %280 = sbr.rel target = $region34
        $region39: #{tpu_custom_call.1} parent=27 // loop_exit
          _
        %v296 = vld [vmem:[#allocation2] sm:$0xff]
        %v297 = vld [vmem:[#allocation2 + $0x8] sm:$0xff]
        %s298 = smul.f32 %s257, 0.0
        %s299 = sfloor.f32 %s298
        %s300 = scvt.f32.s32.to.zero.pseudo %s299
        %s301 = sadd.s32 %s300, %s217
        %p302 = scmp.gt.s32.totalorder %s301, 0
        %s303 = scalar_select %p302, %s301, 0
        %p304 = scmp.lt.s32.totalorder %s303, 16
        %s305 = scalar_select %p304, %s303, 16
        %s306 = sceil.f32 %s257
        %s307 = scvt.f32.s32.to.zero.pseudo %s306
        %s308 = sadd.s32 %s307, %s217
        %p309 = scmp.gt.s32.totalorder %s308, 0
        %s310 = scalar_select %p309, %s308, 0
        %p311 = scmp.lt.s32.totalorder %s310, 16
        %s312 = scalar_select %p311, %s310, 16
        %v313 = vstv %s305
        %vm314 = vcmp.ge.s32.totalorder %v259, %v313
        %vm315 = vcmp.ge.s32.totalorder %v260, %v313
        %v316 = vstv %s312
        %vm317 = vcmp.lt.s32.totalorder %v259, %v316
        %vm318 = vcmp.lt.s32.totalorder %v260, %v316
        %vm319 = vmand %vm314, %vm317
        %vm320 = vmand %vm315, %vm318
        %v321 = vsel %vm319, 1, 0
        %v322 = vsel %vm320, 1, 0
        %vm323 = vcmp.eq.s32.totalorder %v321, 1
        %vm324 = vcmp.eq.s32.totalorder %v322, 1
        %v325 = vsel %vm323, %v296, -inf
        %v326 = vsel %vm324, %v297, -inf
        %v327 = vsel %vm277, %v325, -inf
        %v328 = vsel %vm277, %v326, -inf
        %v329 = vmax.f32 %v327, %v328
        %v330 = vrot.slane %v329, 4
        %v331 = vmax.f32 %v329, %v330
        %v332 = vrot.slane %v331, 2
        %v333 = vmax.f32 %v331, %v332
        %v334 = vrot.slane %v333, 1
        %v335 = vmax.f32 %v333, %v334
        %p336 = scmp.gt.s32.totalorder %s312, %s305
        %p337 = pnand %p276, %p336
        %p338 = pneg %p337
        %s339 = scalar_select %p338, 1, 0
        %v340 = vstv %s339
        %vm341 = vcmp.eq.s32.totalorder %v340, 1
        %v342 = vsel %vm341, %v335, 0.0
        %vm343 = vcmask 24576
        %344 = vst.msk [vmem:[%s204] sm:$0x1] %vm343, %v342
        %s345 = sfloor.f32 %s257
        %s346 = scvt.f32.s32.to.zero.pseudo %s345
        %s347 = sadd.s32 %s346, %s217
        %p348 = scmp.gt.s32.totalorder %s347, 0
        %s349 = scalar_select %p348, %s347, 0
        %p350 = scmp.lt.s32.totalorder %s349, 16
        %s351 = scalar_select %p350, %s349, 16
        %s352 = smul.f32 %s257, 2.0
        %s353 = sceil.f32 %s352
        %s354 = scvt.f32.s32.to.zero.pseudo %s353
        %s355 = sadd.s32 %s354, %s217
        %p356 = scmp.gt.s32.totalorder %s355, 0
        %s357 = scalar_select %p356, %s355, 0
        %p358 = scmp.lt.s32.totalorder %s357, 16
        %s359 = scalar_select %p358, %s357, 16
        %v360 = vstv %s351
        %vm361 = vcmp.ge.s32.totalorder %v259, %v360
        %vm362 = vcmp.ge.s32.totalorder %v260, %v360
        %v363 = vstv %s359
        %vm364 = vcmp.lt.s32.totalorder %v259, %v363
        %vm365 = vcmp.lt.s32.totalorder %v260, %v363
        %vm366 = vmand %vm361, %vm364
        %vm367 = vmand %vm362, %vm365
        %v368 = vsel %vm366, 1, 0
        %v369 = vsel %vm367, 1, 0
        %vm370 = vcmp.eq.s32.totalorder %v368, 1
        %vm371 = vcmp.eq.s32.totalorder %v369, 1
        %v372 = vsel %vm370, %v296, -inf
        %v373 = vsel %vm371, %v297, -inf
        %v374 = vsel %vm277, %v372, -inf
        %v375 = vsel %vm277, %v373, -inf
        %v376 = vmax.f32 %v374, %v375
        %v377 = vrot.slane %v376, 4
        %v378 = vmax.f32 %v376, %v377
        %v379 = vrot.slane %v378, 2
        %v380 = vmax.f32 %v378, %v379
        %v381 = vrot.slane %v380, 1
        %v382 = vmax.f32 %v380, %v381
        %p383 = scmp.gt.s32.totalorder %s359, %s351
        %p384 = pnand %p276, %p383
        %p385 = pneg %p384
        %s386 = scalar_select %p385, 1, 0
        %v387 = vstv %s386
        %vm388 = vcmp.eq.s32.totalorder %v387, 1
        %v389 = vsel %vm388, %v382, 0.0
        %390 = vst.msk [vmem:[%s204 + $0x1] sm:$0x1] %vm343, %v389
        %s391 = sfloor.f32 %s352
        %s392 = scvt.f32.s32.to.zero.pseudo %s391
        %s393 = sadd.s32 %s392, %s217
        %p394 = scmp.gt.s32.totalorder %s393, 0
        %s395 = scalar_select %p394, %s393, 0
        %p396 = scmp.lt.s32.totalorder %s395, 16
        %s397 = scalar_select %p396, %s395, 16
        %s398 = smul.f32 %s257, 3.0
        %s399 = sceil.f32 %s398
        %s400 = scvt.f32.s32.to.zero.pseudo %s399
        %s401 = sadd.s32 %s400, %s217
        %p402 = scmp.gt.s32.totalorder %s401, 0
        %s403 = scalar_select %p402, %s401, 0
        %p404 = scmp.lt.s32.totalorder %s403, 16
        %s405 = scalar_select %p404, %s403, 16
        %v406 = vstv %s397
        %vm407 = vcmp.ge.s32.totalorder %v259, %v406
        %vm408 = vcmp.ge.s32.totalorder %v260, %v406
        %v409 = vstv %s405
        %vm410 = vcmp.lt.s32.totalorder %v259, %v409
        %vm411 = vcmp.lt.s32.totalorder %v260, %v409
        %vm412 = vmand %vm407, %vm410
        %vm413 = vmand %vm408, %vm411
        %v414 = vsel %vm412, 1, 0
        %v415 = vsel %vm413, 1, 0
        %vm416 = vcmp.eq.s32.totalorder %v414, 1
        %vm417 = vcmp.eq.s32.totalorder %v415, 1
        %v418 = vsel %vm416, %v296, -inf
        %v419 = vsel %vm417, %v297, -inf
        %v420 = vsel %vm277, %v418, -inf
        %v421 = vsel %vm277, %v419, -inf
        %v422 = vmax.f32 %v420, %v421
        %v423 = vrot.slane %v422, 4
        %v424 = vmax.f32 %v422, %v423
        %v425 = vrot.slane %v424, 2
        %v426 = vmax.f32 %v424, %v425
        %v427 = vrot.slane %v426, 1
        %v428 = vmax.f32 %v426, %v427
        %p429 = scmp.gt.s32.totalorder %s405, %s397
        %p430 = pnand %p276, %p429
        %p431 = pneg %p430
        %s432 = scalar_select %p431, 1, 0
        %v433 = vstv %s432
        %vm434 = vcmp.eq.s32.totalorder %v433, 1
        %v435 = vsel %vm434, %v428, 0.0
        %436 = vst.msk [vmem:[%s204 + $0x2] sm:$0x1] %vm343, %v435
        %s437 = sfloor.f32 %s398
        %s438 = scvt.f32.s32.to.zero.pseudo %s437
        %s439 = sadd.s32 %s438, %s217
        %p440 = scmp.gt.s32.totalorder %s439, 0
        %s441 = scalar_select %p440, %s439, 0
        %p442 = scmp.lt.s32.totalorder %s441, 16
        %s443 = scalar_select %p442, %s441, 16
        %s444 = smul.f32 %s257, 4.0
        %s445 = sceil.f32 %s444
        %s446 = scvt.f32.s32.to.zero.pseudo %s445
        %s447 = sadd.s32 %s446, %s217
        %p448 = scmp.gt.s32.totalorder %s447, 0
        %s449 = scalar_select %p448, %s447, 0
        %p450 = scmp.lt.s32.totalorder %s449, 16
        %s451 = scalar_select %p450, %s449, 16
        %v452 = vstv %s443
        %vm453 = vcmp.ge.s32.totalorder %v259, %v452
        %vm454 = vcmp.ge.s32.totalorder %v260, %v452
        %v455 = vstv %s451
        %vm456 = vcmp.lt.s32.totalorder %v259, %v455
        %vm457 = vcmp.lt.s32.totalorder %v260, %v455
        %vm458 = vmand %vm453, %vm456
        %vm459 = vmand %vm454, %vm457
        %v460 = vsel %vm458, 1, 0
        %v461 = vsel %vm459, 1, 0
        %vm462 = vcmp.eq.s32.totalorder %v460, 1
        %vm463 = vcmp.eq.s32.totalorder %v461, 1
        %v464 = vsel %vm462, %v296, -inf
        %v465 = vsel %vm463, %v297, -inf
        %v466 = vsel %vm277, %v464, -inf
        %v467 = vsel %vm277, %v465, -inf
        %v468 = vmax.f32 %v466, %v467
        %v469 = vrot.slane %v468, 4
        %v470 = vmax.f32 %v468, %v469
        %v471 = vrot.slane %v470, 2
        %v472 = vmax.f32 %v470, %v471
        %v473 = vrot.slane %v472, 1
        %v474 = vmax.f32 %v472, %v473
        %p475 = scmp.gt.s32.totalorder %s451, %s443
        %p476 = pnand %p276, %p475
        %p477 = pneg %p476
        %s478 = scalar_select %p477, 1, 0
        %v479 = vstv %s478
        %vm480 = vcmp.eq.s32.totalorder %v479, 1
        %v481 = vsel %vm480, %v474, 0.0
        %482 = vst.msk [vmem:[%s204 + $0x3] sm:$0x1] %vm343, %v481
        %s483 = sfloor.f32 %s444
        %s484 = scvt.f32.s32.to.zero.pseudo %s483
        %s485 = sadd.s32 %s484, %s217
        %p486 = scmp.gt.s32.totalorder %s485, 0
        %s487 = scalar_select %p486, %s485, 0
        %p488 = scmp.lt.s32.totalorder %s487, 16
        %s489 = scalar_select %p488, %s487, 16
        %s490 = smul.f32 %s257, 5.0
        %s491 = sceil.f32 %s490
        %s492 = scvt.f32.s32.to.zero.pseudo %s491
        %s493 = sadd.s32 %s492, %s217
        %p494 = scmp.gt.s32.totalorder %s493, 0
        %s495 = scalar_select %p494, %s493, 0
        %p496 = scmp.lt.s32.totalorder %s495, 16
        %s497 = scalar_select %p496, %s495, 16
        %v498 = vstv %s489
        %vm499 = vcmp.ge.s32.totalorder %v259, %v498
        %vm500 = vcmp.ge.s32.totalorder %v260, %v498
        %v501 = vstv %s497
        %vm502 = vcmp.lt.s32.totalorder %v259, %v501
        %vm503 = vcmp.lt.s32.totalorder %v260, %v501
        %vm504 = vmand %vm499, %vm502
        %vm505 = vmand %vm500, %vm503
        %v506 = vsel %vm504, 1, 0
        %v507 = vsel %vm505, 1, 0
        %vm508 = vcmp.eq.s32.totalorder %v506, 1
        %vm509 = vcmp.eq.s32.totalorder %v507, 1
        %v510 = vsel %vm508, %v296, -inf
        %v511 = vsel %vm509, %v297, -inf
        %v512 = vsel %vm277, %v510, -inf
        %v513 = vsel %vm277, %v511, -inf
        %v514 = vmax.f32 %v512, %v513
        %v515 = vrot.slane %v514, 4
        %v516 = vmax.f32 %v514, %v515
        %v517 = vrot.slane %v516, 2
        %v518 = vmax.f32 %v516, %v517
        %v519 = vrot.slane %v518, 1
        %v520 = vmax.f32 %v518, %v519
        %p521 = scmp.gt.s32.totalorder %s497, %s489
        %p522 = pnand %p276, %p521
        %p523 = pneg %p522
        %s524 = scalar_select %p523, 1, 0
        %v525 = vstv %s524
        %vm526 = vcmp.eq.s32.totalorder %v525, 1
        %v527 = vsel %vm526, %v520, 0.0
        %528 = vst.msk [vmem:[%s204 + $0x4] sm:$0x1] %vm343, %v527
        %s529 = sfloor.f32 %s490
        %s530 = scvt.f32.s32.to.zero.pseudo %s529
        %s531 = sadd.s32 %s530, %s217
        %p532 = scmp.gt.s32.totalorder %s531, 0
        %s533 = scalar_select %p532, %s531, 0
        %p534 = scmp.lt.s32.totalorder %s533, 16
        %s535 = scalar_select %p534, %s533, 16
        %s536 = smul.f32 %s257, 6.0
        %s537 = sceil.f32 %s536
        %s538 = scvt.f32.s32.to.zero.pseudo %s537
        %s539 = sadd.s32 %s538, %s217
        %p540 = scmp.gt.s32.totalorder %s539, 0
        %s541 = scalar_select %p540, %s539, 0
        %p542 = scmp.lt.s32.totalorder %s541, 16
        %s543 = scalar_select %p542, %s541, 16
        %v544 = vstv %s535
        %vm545 = vcmp.ge.s32.totalorder %v259, %v544
        %vm546 = vcmp.ge.s32.totalorder %v260, %v544
        %v547 = vstv %s543
        %vm548 = vcmp.lt.s32.totalorder %v259, %v547
        %vm549 = vcmp.lt.s32.totalorder %v260, %v547
        %vm550 = vmand %vm545, %vm548
        %vm551 = vmand %vm546, %vm549
        %v552 = vsel %vm550, 1, 0
        %v553 = vsel %vm551, 1, 0
        %vm554 = vcmp.eq.s32.totalorder %v552, 1
        %vm555 = vcmp.eq.s32.totalorder %v553, 1
        %v556 = vsel %vm554, %v296, -inf
        %v557 = vsel %vm555, %v297, -inf
        %v558 = vsel %vm277, %v556, -inf
        %v559 = vsel %vm277, %v557, -inf
        %v560 = vmax.f32 %v558, %v559
        %v561 = vrot.slane %v560, 4
        %v562 = vmax.f32 %v560, %v561
        %v563 = vrot.slane %v562, 2
        %v564 = vmax.f32 %v562, %v563
        %v565 = vrot.slane %v564, 1
        %v566 = vmax.f32 %v564, %v565
        %p567 = scmp.gt.s32.totalorder %s543, %s535
        %p568 = pnand %p276, %p567
        %p569 = pneg %p568
        %s570 = scalar_select %p569, 1, 0
        %v571 = vstv %s570
        %vm572 = vcmp.eq.s32.totalorder %v571, 1
        %v573 = vsel %vm572, %v566, 0.0
        %574 = vst.msk [vmem:[%s204 + $0x5] sm:$0x1] %vm343, %v573
        %s575 = sfloor.f32 %s536
        %s576 = scvt.f32.s32.to.zero.pseudo %s575
        %s577 = sadd.s32 %s576, %s217
        %p578 = scmp.gt.s32.totalorder %s577, 0
        %s579 = scalar_select %p578, %s577, 0
        %p580 = scmp.lt.s32.totalorder %s579, 16
        %s581 = scalar_select %p580, %s579, 16
        %s582 = smul.f32 %s257, 7.0
        %s583 = sceil.f32 %s582
        %s584 = scvt.f32.s32.to.zero.pseudo %s583
        %s585 = sadd.s32 %s584, %s217
        %p586 = scmp.gt.s32.totalorder %s585, 0
        %s587 = scalar_select %p586, %s585, 0
        %p588 = scmp.lt.s32.totalorder %s587, 16
        %s589 = scalar_select %p588, %s587, 16
        %v590 = vstv %s581
        %vm591 = vcmp.ge.s32.totalorder %v259, %v590
        %vm592 = vcmp.ge.s32.totalorder %v260, %v590
        %v593 = vstv %s589
        %vm594 = vcmp.lt.s32.totalorder %v259, %v593
        %vm595 = vcmp.lt.s32.totalorder %v260, %v593
        %vm596 = vmand %vm591, %vm594
        %vm597 = vmand %vm592, %vm595
        %v598 = vsel %vm596, 1, 0
        %v599 = vsel %vm597, 1, 0
        %vm600 = vcmp.eq.s32.totalorder %v598, 1
        %vm601 = vcmp.eq.s32.totalorder %v599, 1
        %v602 = vsel %vm600, %v296, -inf
        %v603 = vsel %vm601, %v297, -inf
        %v604 = vsel %vm277, %v602, -inf
        %v605 = vsel %vm277, %v603, -inf
        %v606 = vmax.f32 %v604, %v605
        %v607 = vrot.slane %v606, 4
        %v608 = vmax.f32 %v606, %v607
        %v609 = vrot.slane %v608, 2
        %v610 = vmax.f32 %v608, %v609
        %v611 = vrot.slane %v610, 1
        %v612 = vmax.f32 %v610, %v611
        %p613 = scmp.gt.s32.totalorder %s589, %s581
        %p614 = pnand %p276, %p613
        %p615 = pneg %p614
        %s616 = scalar_select %p615, 1, 0
        %v617 = vstv %s616
        %vm618 = vcmp.eq.s32.totalorder %v617, 1
        %v619 = vsel %vm618, %v612, 0.0
        %620 = vst.msk [vmem:[%s204 + $0x6] sm:$0x1] %vm343, %v619
        %s621 = sfloor.f32 %s247
        %s622 = scvt.f32.s32.to.zero.pseudo %s621
        %s623 = sadd.s32 %s622, %s221
        %p624 = scmp.gt.s32.totalorder %s623, 0
        %s625 = scalar_select %p624, %s623, 0
        %p626 = scmp.lt.s32.totalorder %s625, 16
        %s627 = scalar_select %p626, %s625, 16
        %s628 = smul.f32 %s247, 2.0
        %s629 = sceil.f32 %s628
        %s630 = scvt.f32.s32.to.zero.pseudo %s629
        %s631 = sadd.s32 %s630, %s221
        %p632 = scmp.gt.s32.totalorder %s631, 0
        %s633 = scalar_select %p632, %s631, 0
        %p634 = scmp.lt.s32.totalorder %s633, 16
        %s635 = scalar_select %p634, %s633, 16
        %p636 = scmp.gt.s32.totalorder %s635, %s627
        %637 = vst.msk [vmem:[#allocation2] sm:$0xff] %vm277, -inf
        %638 = vst.msk [vmem:[#allocation2 + $0x8] sm:$0xff] %vm277, -inf
        // While loop
        $region40: #{tpu_custom_call.1} parent=27 // loop_pre_header
          _
        $region41: #{tpu_custom_call.1} parent=27 // loop_header
          %s640 = sphi %s627, %s642
          %p641 = scmp.ge.s32.totalorder %s640, %s635
        $region42: #{tpu_custom_call.1} parent=27 // loop_header_branch
          %644 = sbr.rel (%p641) target = $region46
        $region43: #{tpu_custom_call.1} parent=27 // loop_body
          %v645 = vld [vmem:[#allocation2] sm:$0xff]
          %v646 = vld [vmem:[#allocation2 + $0x8] sm:$0xff]
          %s647 = smul.u32 %s640, 16
          %s648 = scalar_lea.vmem %s195, %s647
          %v649 = vld [vmem:[%s648] sm:$0xff]
          %v650 = vld [vmem:[%s648 + $0x8] sm:$0xff]
          %v651 = vmax.f32 %v645, %v649
          %v652 = vmax.f32 %v646, %v650
          %653 = vst.msk [vmem:[#allocation2] sm:$0xff] %vm277, %v651
          %654 = vst.msk [vmem:[#allocation2 + $0x8] sm:$0xff] %vm277, %v652
        $region44: #{tpu_custom_call.1} parent=27 // loop_footer
          %s642 = sadd.s32 %s640, 1
        $region45: #{tpu_custom_call.1} parent=27 // loop_footer_branch
          %639 = sbr.rel target = $region41
        $region46: #{tpu_custom_call.1} parent=27 // loop_exit
          _
        %v655 = vld [vmem:[#allocation2] sm:$0xff]
        %v656 = vld [vmem:[#allocation2 + $0x8] sm:$0xff]
        %v657 = vsel %vm323, %v655, -inf
        %v658 = vsel %vm324, %v656, -inf
        %v659 = vsel %vm277, %v657, -inf
        %v660 = vsel %vm277, %v658, -inf
        %v661 = vmax.f32 %v659, %v660
        %v662 = vrot.slane %v661, 4
        %v663 = vmax.f32 %v661, %v662
        %v664 = vrot.slane %v663, 2
        %v665 = vmax.f32 %v663, %v664
        %v666 = vrot.slane %v665, 1
        %v667 = vmax.f32 %v665, %v666
        %p668 = pnand %p636, %p336
        %p669 = pneg %p668
        %s670 = scalar_select %p669, 1, 0
        %v671 = vstv %s670
        %vm672 = vcmp.eq.s32.totalorder %v671, 1
        %v673 = vsel %vm672, %v667, 0.0
        %s674 = scalar_lea.vmem %s204, 8
        %675 = vst.msk [vmem:[%s674] sm:$0x1] %vm343, %v673
        %v676 = vsel %vm370, %v655, -inf
        %v677 = vsel %vm371, %v656, -inf
        %v678 = vsel %vm277, %v676, -inf
        %v679 = vsel %vm277, %v677, -inf
        %v680 = vmax.f32 %v678, %v679
        %v681 = vrot.slane %v680, 4
        %v682 = vmax.f32 %v680, %v681
        %v683 = vrot.slane %v682, 2
        %v684 = vmax.f32 %v682, %v683
        %v685 = vrot.slane %v684, 1
        %v686 = vmax.f32 %v684, %v685
        %p687 = pnand %p636, %p383
        %p688 = pneg %p687
        %s689 = scalar_select %p688, 1, 0
        %v690 = vstv %s689
        %vm691 = vcmp.eq.s32.totalorder %v690, 1
        %v692 = vsel %vm691, %v686, 0.0
        %693 = vst.msk [vmem:[%s674 + $0x1] sm:$0x1] %vm343, %v692
        %v694 = vsel %vm416, %v655, -inf
        %v695 = vsel %vm417, %v656, -inf
        %v696 = vsel %vm277, %v694, -inf
        %v697 = vsel %vm277, %v695, -inf
        %v698 = vmax.f32 %v696, %v697
        %v699 = vrot.slane %v698, 4
        %v700 = vmax.f32 %v698, %v699
        %v701 = vrot.slane %v700, 2
        %v702 = vmax.f32 %v700, %v701
        %v703 = vrot.slane %v702, 1
        %v704 = vmax.f32 %v702, %v703
        %p705 = pnand %p636, %p429
        %p706 = pneg %p705
        %s707 = scalar_select %p706, 1, 0
        %v708 = vstv %s707
        %vm709 = vcmp.eq.s32.totalorder %v708, 1
        %v710 = vsel %vm709, %v704, 0.0
        %711 = vst.msk [vmem:[%s674 + $0x2] sm:$0x1] %vm343, %v710
        %v712 = vsel %vm462, %v655, -inf
        %v713 = vsel %vm463, %v656, -inf
        %v714 = vsel %vm277, %v712, -inf
        %v715 = vsel %vm277, %v713, -inf
        %v716 = vmax.f32 %v714, %v715
        %v717 = vrot.slane %v716, 4
        %v718 = vmax.f32 %v716, %v717
        %v719 = vrot.slane %v718, 2
        %v720 = vmax.f32 %v718, %v719
        %v721 = vrot.slane %v720, 1
        %v722 = vmax.f32 %v720, %v721
        %p723 = pnand %p636, %p475
        %p724 = pneg %p723
        %s725 = scalar_select %p724, 1, 0
        %v726 = vstv %s725
        %vm727 = vcmp.eq.s32.totalorder %v726, 1
        %v728 = vsel %vm727, %v722, 0.0
        %729 = vst.msk [vmem:[%s674 + $0x3] sm:$0x1] %vm343, %v728
        %v730 = vsel %vm508, %v655, -inf
        %v731 = vsel %vm509, %v656, -inf
        %v732 = vsel %vm277, %v730, -inf
        %v733 = vsel %vm277, %v731, -inf
        %v734 = vmax.f32 %v732, %v733
        %v735 = vrot.slane %v734, 4
        %v736 = vmax.f32 %v734, %v735
        %v737 = vrot.slane %v736, 2
        %v738 = vmax.f32 %v736, %v737
        %v739 = vrot.slane %v738, 1
        %v740 = vmax.f32 %v738, %v739
        %p741 = pnand %p636, %p521
        %p742 = pneg %p741
        %s743 = scalar_select %p742, 1, 0
        %v744 = vstv %s743
        %vm745 = vcmp.eq.s32.totalorder %v744, 1
        %v746 = vsel %vm745, %v740, 0.0
        %747 = vst.msk [vmem:[%s674 + $0x4] sm:$0x1] %vm343, %v746
        %v748 = vsel %vm554, %v655, -inf
        %v749 = vsel %vm555, %v656, -inf
        %v750 = vsel %vm277, %v748, -inf
        %v751 = vsel %vm277, %v749, -inf
        %v752 = vmax.f32 %v750, %v751
        %v753 = vrot.slane %v752, 4
        %v754 = vmax.f32 %v752, %v753
        %v755 = vrot.slane %v754, 2
        %v756 = vmax.f32 %v754, %v755
        %v757 = vrot.slane %v756, 1
        %v758 = vmax.f32 %v756, %v757
        %p759 = pnand %p636, %p567
        %p760 = pneg %p759
        %s761 = scalar_select %p760, 1, 0
        %v762 = vstv %s761
        %vm763 = vcmp.eq.s32.totalorder %v762, 1
        %v764 = vsel %vm763, %v758, 0.0
        %765 = vst.msk [vmem:[%s674 + $0x5] sm:$0x1] %vm343, %v764
        %v766 = vsel %vm600, %v655, -inf
        %v767 = vsel %vm601, %v656, -inf
        %v768 = vsel %vm277, %v766, -inf
        %v769 = vsel %vm277, %v767, -inf
        %v770 = vmax.f32 %v768, %v769
        %v771 = vrot.slane %v770, 4
        %v772 = vmax.f32 %v770, %v771
        %v773 = vrot.slane %v772, 2
        %v774 = vmax.f32 %v772, %v773
        %v775 = vrot.slane %v774, 1
        %v776 = vmax.f32 %v774, %v775
        %p777 = pnand %p636, %p613
        %p778 = pneg %p777
        %s779 = scalar_select %p778, 1, 0
        %v780 = vstv %s779
        %vm781 = vcmp.eq.s32.totalorder %v780, 1
        %v782 = vsel %vm781, %v776, 0.0
        %783 = vst.msk [vmem:[%s674 + $0x6] sm:$0x1] %vm343, %v782
        %s784 = sfloor.f32 %s628
        %s785 = scvt.f32.s32.to.zero.pseudo %s784
        %s786 = sadd.s32 %s785, %s221
        %p787 = scmp.gt.s32.totalorder %s786, 0
        %s788 = scalar_select %p787, %s786, 0
        %p789 = scmp.lt.s32.totalorder %s788, 16
        %s790 = scalar_select %p789, %s788, 16
        %s791 = smul.f32 %s247, 3.0
        %s792 = sceil.f32 %s791
        %s793 = scvt.f32.s32.to.zero.pseudo %s792
        %s794 = sadd.s32 %s793, %s221
        %p795 = scmp.gt.s32.totalorder %s794, 0
        %s796 = scalar_select %p795, %s794, 0
        %p797 = scmp.lt.s32.totalorder %s796, 16
        %s798 = scalar_select %p797, %s796, 16
        %p799 = scmp.gt.s32.totalorder %s798, %s790
        %800 = vst.msk [vmem:[#allocation2] sm:$0xff] %vm277, -inf
        %801 = vst.msk [vmem:[#allocation2 + $0x8] sm:$0xff] %vm277, -inf
        // While loop
        $region47: #{tpu_custom_call.1} parent=27 // loop_pre_header
          _
        $region48: #{tpu_custom_call.1} parent=27 // loop_header
          %s803 = sphi %s790, %s805
          %p804 = scmp.ge.s32.totalorder %s803, %s798
        $region49: #{tpu_custom_call.1} parent=27 // loop_header_branch
          %807 = sbr.rel (%p804) target = $region53
        $region50: #{tpu_custom_call.1} parent=27 // loop_body
          %v808 = vld [vmem:[#allocation2] sm:$0xff]
          %v809 = vld [vmem:[#allocation2 + $0x8] sm:$0xff]
          %s810 = smul.u32 %s803, 16
          %s811 = scalar_lea.vmem %s195, %s810
          %v812 = vld [vmem:[%s811] sm:$0xff]
          %v813 = vld [vmem:[%s811 + $0x8] sm:$0xff]
          %v814 = vmax.f32 %v808, %v812
          %v815 = vmax.f32 %v809, %v813
          %816 = vst.msk [vmem:[#allocation2] sm:$0xff] %vm277, %v814
          %817 = vst.msk [vmem:[#allocation2 + $0x8] sm:$0xff] %vm277, %v815
        $region51: #{tpu_custom_call.1} parent=27 // loop_footer
          %s805 = sadd.s32 %s803, 1
        $region52: #{tpu_custom_call.1} parent=27 // loop_footer_branch
          %802 = sbr.rel target = $region48
        $region53: #{tpu_custom_call.1} parent=27 // loop_exit
          _
        %v818 = vld [vmem:[#allocation2] sm:$0xff]
        %v819 = vld [vmem:[#allocation2 + $0x8] sm:$0xff]
        %v820 = vsel %vm323, %v818, -inf
        %v821 = vsel %vm324, %v819, -inf
        %v822 = vsel %vm277, %v820, -inf
        %v823 = vsel %vm277, %v821, -inf
        %v824 = vmax.f32 %v822, %v823
        %v825 = vrot.slane %v824, 4
        %v826 = vmax.f32 %v824, %v825
        %v827 = vrot.slane %v826, 2
        %v828 = vmax.f32 %v826, %v827
        %v829 = vrot.slane %v828, 1
        %v830 = vmax.f32 %v828, %v829
        %p831 = pnand %p799, %p336
        %p832 = pneg %p831
        %s833 = scalar_select %p832, 1, 0
        %v834 = vstv %s833
        %vm835 = vcmp.eq.s32.totalorder %v834, 1
        %v836 = vsel %vm835, %v830, 0.0
        %s837 = scalar_lea.vmem %s204, 16
        %838 = vst.msk [vmem:[%s837] sm:$0x1] %vm343, %v836
        %v839 = vsel %vm370, %v818, -inf
        %v840 = vsel %vm371, %v819, -inf
        %v841 = vsel %vm277, %v839, -inf
        %v842 = vsel %vm277, %v840, -inf
        %v843 = vmax.f32 %v841, %v842
        %v844 = vrot.slane %v843, 4
        %v845 = vmax.f32 %v843, %v844
        %v846 = vrot.slane %v845, 2
        %v847 = vmax.f32 %v845, %v846
        %v848 = vrot.slane %v847, 1
        %v849 = vmax.f32 %v847, %v848
        %p850 = pnand %p799, %p383
        %p851 = pneg %p850
        %s852 = scalar_select %p851, 1, 0
        %v853 = vstv %s852
        %vm854 = vcmp.eq.s32.totalorder %v853, 1
        %v855 = vsel %vm854, %v849, 0.0
        %856 = vst.msk [vmem:[%s837 + $0x1] sm:$0x1] %vm343, %v855
        %v857 = vsel %vm416, %v818, -inf
        %v858 = vsel %vm417, %v819, -inf
        %v859 = vsel %vm277, %v857, -inf
        %v860 = vsel %vm277, %v858, -inf
        %v861 = vmax.f32 %v859, %v860
        %v862 = vrot.slane %v861, 4
        %v863 = vmax.f32 %v861, %v862
        %v864 = vrot.slane %v863, 2
        %v865 = vmax.f32 %v863, %v864
        %v866 = vrot.slane %v865, 1
        %v867 = vmax.f32 %v865, %v866
        %p868 = pnand %p799, %p429
        %p869 = pneg %p868
        %s870 = scalar_select %p869, 1, 0
        %v871 = vstv %s870
        %vm872 = vcmp.eq.s32.totalorder %v871, 1
        %v873 = vsel %vm872, %v867, 0.0
        %874 = vst.msk [vmem:[%s837 + $0x2] sm:$0x1] %vm343, %v873
        %v875 = vsel %vm462, %v818, -inf
        %v876 = vsel %vm463, %v819, -inf
        %v877 = vsel %vm277, %v875, -inf
        %v878 = vsel %vm277, %v876, -inf
        %v879 = vmax.f32 %v877, %v878
        %v880 = vrot.slane %v879, 4
        %v881 = vmax.f32 %v879, %v880
        %v882 = vrot.slane %v881, 2
        %v883 = vmax.f32 %v881, %v882
        %v884 = vrot.slane %v883, 1
        %v885 = vmax.f32 %v883, %v884
        %p886 = pnand %p799, %p475
        %p887 = pneg %p886
        %s888 = scalar_select %p887, 1, 0
        %v889 = vstv %s888
        %vm890 = vcmp.eq.s32.totalorder %v889, 1
        %v891 = vsel %vm890, %v885, 0.0
        %892 = vst.msk [vmem:[%s837 + $0x3] sm:$0x1] %vm343, %v891
        %v893 = vsel %vm508, %v818, -inf
        %v894 = vsel %vm509, %v819, -inf
        %v895 = vsel %vm277, %v893, -inf
        %v896 = vsel %vm277, %v894, -inf
        %v897 = vmax.f32 %v895, %v896
        %v898 = vrot.slane %v897, 4
        %v899 = vmax.f32 %v897, %v898
        %v900 = vrot.slane %v899, 2
        %v901 = vmax.f32 %v899, %v900
        %v902 = vrot.slane %v901, 1
        %v903 = vmax.f32 %v901, %v902
        %p904 = pnand %p799, %p521
        %p905 = pneg %p904
        %s906 = scalar_select %p905, 1, 0
        %v907 = vstv %s906
        %vm908 = vcmp.eq.s32.totalorder %v907, 1
        %v909 = vsel %vm908, %v903, 0.0
        %910 = vst.msk [vmem:[%s837 + $0x4] sm:$0x1] %vm343, %v909
        %v911 = vsel %vm554, %v818, -inf
        %v912 = vsel %vm555, %v819, -inf
        %v913 = vsel %vm277, %v911, -inf
        %v914 = vsel %vm277, %v912, -inf
        %v915 = vmax.f32 %v913, %v914
        %v916 = vrot.slane %v915, 4
        %v917 = vmax.f32 %v915, %v916
        %v918 = vrot.slane %v917, 2
        %v919 = vmax.f32 %v917, %v918
        %v920 = vrot.slane %v919, 1
        %v921 = vmax.f32 %v919, %v920
        %p922 = pnand %p799, %p567
        %p923 = pneg %p922
        %s924 = scalar_select %p923, 1, 0
        %v925 = vstv %s924
        %vm926 = vcmp.eq.s32.totalorder %v925, 1
        %v927 = vsel %vm926, %v921, 0.0
        %928 = vst.msk [vmem:[%s837 + $0x5] sm:$0x1] %vm343, %v927
        %v929 = vsel %vm600, %v818, -inf
        %v930 = vsel %vm601, %v819, -inf
        %v931 = vsel %vm277, %v929, -inf
        %v932 = vsel %vm277, %v930, -inf
        %v933 = vmax.f32 %v931, %v932
        %v934 = vrot.slane %v933, 4
        %v935 = vmax.f32 %v933, %v934
        %v936 = vrot.slane %v935, 2
        %v937 = vmax.f32 %v935, %v936
        %v938 = vrot.slane %v937, 1
        %v939 = vmax.f32 %v937, %v938
        %p940 = pnand %p799, %p613
        %p941 = pneg %p940
        %s942 = scalar_select %p941, 1, 0
        %v943 = vstv %s942
        %vm944 = vcmp.eq.s32.totalorder %v943, 1
        %v945 = vsel %vm944, %v939, 0.0
        %946 = vst.msk [vmem:[%s837 + $0x6] sm:$0x1] %vm343, %v945
        %s947 = sfloor.f32 %s791
        %s948 = scvt.f32.s32.to.zero.pseudo %s947
        %s949 = sadd.s32 %s948, %s221
        %p950 = scmp.gt.s32.totalorder %s949, 0
        %s951 = scalar_select %p950, %s949, 0
        %p952 = scmp.lt.s32.totalorder %s951, 16
        %s953 = scalar_select %p952, %s951, 16
        %s954 = smul.f32 %s247, 4.0
        %s955 = sceil.f32 %s954
        %s956 = scvt.f32.s32.to.zero.pseudo %s955
        %s957 = sadd.s32 %s956, %s221
        %p958 = scmp.gt.s32.totalorder %s957, 0
        %s959 = scalar_select %p958, %s957, 0
        %p960 = scmp.lt.s32.totalorder %s959, 16
        %s961 = scalar_select %p960, %s959, 16
        %p962 = scmp.gt.s32.totalorder %s961, %s953
        %963 = vst.msk [vmem:[#allocation2] sm:$0xff] %vm277, -inf
        %964 = vst.msk [vmem:[#allocation2 + $0x8] sm:$0xff] %vm277, -inf
        // While loop
        $region54: #{tpu_custom_call.1} parent=27 // loop_pre_header
          _
        $region55: #{tpu_custom_call.1} parent=27 // loop_header
          %s966 = sphi %s953, %s968
          %p967 = scmp.ge.s32.totalorder %s966, %s961
        $region56: #{tpu_custom_call.1} parent=27 // loop_header_branch
          %970 = sbr.rel (%p967) target = $region60
        $region57: #{tpu_custom_call.1} parent=27 // loop_body
          %v971 = vld [vmem:[#allocation2] sm:$0xff]
          %v972 = vld [vmem:[#allocation2 + $0x8] sm:$0xff]
          %s973 = smul.u32 %s966, 16
          %s974 = scalar_lea.vmem %s195, %s973
          %v975 = vld [vmem:[%s974] sm:$0xff]
          %v976 = vld [vmem:[%s974 + $0x8] sm:$0xff]
          %v977 = vmax.f32 %v971, %v975
          %v978 = vmax.f32 %v972, %v976
          %979 = vst.msk [vmem:[#allocation2] sm:$0xff] %vm277, %v977
          %980 = vst.msk [vmem:[#allocation2 + $0x8] sm:$0xff] %vm277, %v978
        $region58: #{tpu_custom_call.1} parent=27 // loop_footer
          %s968 = sadd.s32 %s966, 1
        $region59: #{tpu_custom_call.1} parent=27 // loop_footer_branch
          %965 = sbr.rel target = $region55
        $region60: #{tpu_custom_call.1} parent=27 // loop_exit
          _
        %v981 = vld [vmem:[#allocation2] sm:$0xff]
        %v982 = vld [vmem:[#allocation2 + $0x8] sm:$0xff]
        %v983 = vsel %vm323, %v981, -inf
        %v984 = vsel %vm324, %v982, -inf
        %v985 = vsel %vm277, %v983, -inf
        %v986 = vsel %vm277, %v984, -inf
        %v987 = vmax.f32 %v985, %v986
        %v988 = vrot.slane %v987, 4
        %v989 = vmax.f32 %v987, %v988
        %v990 = vrot.slane %v989, 2
        %v991 = vmax.f32 %v989, %v990
        %v992 = vrot.slane %v991, 1
        %v993 = vmax.f32 %v991, %v992
        %p994 = pnand %p962, %p336
        %p995 = pneg %p994
        %s996 = scalar_select %p995, 1, 0
        %v997 = vstv %s996
        %vm998 = vcmp.eq.s32.totalorder %v997, 1
        %v999 = vsel %vm998, %v993, 0.0
        %s1000 = scalar_lea.vmem %s204, 24
        %1001 = vst.msk [vmem:[%s1000] sm:$0x1] %vm343, %v999
        %v1002 = vsel %vm370, %v981, -inf
        %v1003 = vsel %vm371, %v982, -inf
        %v1004 = vsel %vm277, %v1002, -inf
        %v1005 = vsel %vm277, %v1003, -inf
        %v1006 = vmax.f32 %v1004, %v1005
        %v1007 = vrot.slane %v1006, 4
        %v1008 = vmax.f32 %v1006, %v1007
        %v1009 = vrot.slane %v1008, 2
        %v1010 = vmax.f32 %v1008, %v1009
        %v1011 = vrot.slane %v1010, 1
        %v1012 = vmax.f32 %v1010, %v1011
        %p1013 = pnand %p962, %p383
        %p1014 = pneg %p1013
        %s1015 = scalar_select %p1014, 1, 0
        %v1016 = vstv %s1015
        %vm1017 = vcmp.eq.s32.totalorder %v1016, 1
        %v1018 = vsel %vm1017, %v1012, 0.0
        %1019 = vst.msk [vmem:[%s1000 + $0x1] sm:$0x1] %vm343, %v1018
        %v1020 = vsel %vm416, %v981, -inf
        %v1021 = vsel %vm417, %v982, -inf
        %v1022 = vsel %vm277, %v1020, -inf
        %v1023 = vsel %vm277, %v1021, -inf
        %v1024 = vmax.f32 %v1022, %v1023
        %v1025 = vrot.slane %v1024, 4
        %v1026 = vmax.f32 %v1024, %v1025
        %v1027 = vrot.slane %v1026, 2
        %v1028 = vmax.f32 %v1026, %v1027
        %v1029 = vrot.slane %v1028, 1
        %v1030 = vmax.f32 %v1028, %v1029
        %p1031 = pnand %p962, %p429
        %p1032 = pneg %p1031
        %s1033 = scalar_select %p1032, 1, 0
        %v1034 = vstv %s1033
        %vm1035 = vcmp.eq.s32.totalorder %v1034, 1
        %v1036 = vsel %vm1035, %v1030, 0.0
        %1037 = vst.msk [vmem:[%s1000 + $0x2] sm:$0x1] %vm343, %v1036
        %v1038 = vsel %vm462, %v981, -inf
        %v1039 = vsel %vm463, %v982, -inf
        %v1040 = vsel %vm277, %v1038, -inf
        %v1041 = vsel %vm277, %v1039, -inf
        %v1042 = vmax.f32 %v1040, %v1041
        %v1043 = vrot.slane %v1042, 4
        %v1044 = vmax.f32 %v1042, %v1043
        %v1045 = vrot.slane %v1044, 2
        %v1046 = vmax.f32 %v1044, %v1045
        %v1047 = vrot.slane %v1046, 1
        %v1048 = vmax.f32 %v1046, %v1047
        %p1049 = pnand %p962, %p475
        %p1050 = pneg %p1049
        %s1051 = scalar_select %p1050, 1, 0
        %v1052 = vstv %s1051
        %vm1053 = vcmp.eq.s32.totalorder %v1052, 1
        %v1054 = vsel %vm1053, %v1048, 0.0
        %1055 = vst.msk [vmem:[%s1000 + $0x3] sm:$0x1] %vm343, %v1054
        %v1056 = vsel %vm508, %v981, -inf
        %v1057 = vsel %vm509, %v982, -inf
        %v1058 = vsel %vm277, %v1056, -inf
        %v1059 = vsel %vm277, %v1057, -inf
        %v1060 = vmax.f32 %v1058, %v1059
        %v1061 = vrot.slane %v1060, 4
        %v1062 = vmax.f32 %v1060, %v1061
        %v1063 = vrot.slane %v1062, 2
        %v1064 = vmax.f32 %v1062, %v1063
        %v1065 = vrot.slane %v1064, 1
        %v1066 = vmax.f32 %v1064, %v1065
        %p1067 = pnand %p962, %p521
        %p1068 = pneg %p1067
        %s1069 = scalar_select %p1068, 1, 0
        %v1070 = vstv %s1069
        %vm1071 = vcmp.eq.s32.totalorder %v1070, 1
        %v1072 = vsel %vm1071, %v1066, 0.0
        %1073 = vst.msk [vmem:[%s1000 + $0x4] sm:$0x1] %vm343, %v1072
        %v1074 = vsel %vm554, %v981, -inf
        %v1075 = vsel %vm555, %v982, -inf
        %v1076 = vsel %vm277, %v1074, -inf
        %v1077 = vsel %vm277, %v1075, -inf
        %v1078 = vmax.f32 %v1076, %v1077
        %v1079 = vrot.slane %v1078, 4
        %v1080 = vmax.f32 %v1078, %v1079
        %v1081 = vrot.slane %v1080, 2
        %v1082 = vmax.f32 %v1080, %v1081
        %v1083 = vrot.slane %v1082, 1
        %v1084 = vmax.f32 %v1082, %v1083
        %p1085 = pnand %p962, %p567
        %p1086 = pneg %p1085
        %s1087 = scalar_select %p1086, 1, 0
        %v1088 = vstv %s1087
        %vm1089 = vcmp.eq.s32.totalorder %v1088, 1
        %v1090 = vsel %vm1089, %v1084, 0.0
        %1091 = vst.msk [vmem:[%s1000 + $0x5] sm:$0x1] %vm343, %v1090
        %v1092 = vsel %vm600, %v981, -inf
        %v1093 = vsel %vm601, %v982, -inf
        %v1094 = vsel %vm277, %v1092, -inf
        %v1095 = vsel %vm277, %v1093, -inf
        %v1096 = vmax.f32 %v1094, %v1095
        %v1097 = vrot.slane %v1096, 4
        %v1098 = vmax.f32 %v1096, %v1097
        %v1099 = vrot.slane %v1098, 2
        %v1100 = vmax.f32 %v1098, %v1099
        %v1101 = vrot.slane %v1100, 1
        %v1102 = vmax.f32 %v1100, %v1101
        %p1103 = pnand %p962, %p613
        %p1104 = pneg %p1103
        %s1105 = scalar_select %p1104, 1, 0
        %v1106 = vstv %s1105
        %vm1107 = vcmp.eq.s32.totalorder %v1106, 1
        %v1108 = vsel %vm1107, %v1102, 0.0
        %1109 = vst.msk [vmem:[%s1000 + $0x6] sm:$0x1] %vm343, %v1108
        %s1110 = sfloor.f32 %s954
        %s1111 = scvt.f32.s32.to.zero.pseudo %s1110
        %s1112 = sadd.s32 %s1111, %s221
        %p1113 = scmp.gt.s32.totalorder %s1112, 0
        %s1114 = scalar_select %p1113, %s1112, 0
        %p1115 = scmp.lt.s32.totalorder %s1114, 16
        %s1116 = scalar_select %p1115, %s1114, 16
        %s1117 = smul.f32 %s247, 5.0
        %s1118 = sceil.f32 %s1117
        %s1119 = scvt.f32.s32.to.zero.pseudo %s1118
        %s1120 = sadd.s32 %s1119, %s221
        %p1121 = scmp.gt.s32.totalorder %s1120, 0
        %s1122 = scalar_select %p1121, %s1120, 0
        %p1123 = scmp.lt.s32.totalorder %s1122, 16
        %s1124 = scalar_select %p1123, %s1122, 16
        %p1125 = scmp.gt.s32.totalorder %s1124, %s1116
        %1126 = vst.msk [vmem:[#allocation2] sm:$0xff] %vm277, -inf
        %1127 = vst.msk [vmem:[#allocation2 + $0x8] sm:$0xff] %vm277, -inf
        // While loop
        $region61: #{tpu_custom_call.1} parent=27 // loop_pre_header
          _
        $region62: #{tpu_custom_call.1} parent=27 // loop_header
          %s1129 = sphi %s1116, %s1131
          %p1130 = scmp.ge.s32.totalorder %s1129, %s1124
        $region63: #{tpu_custom_call.1} parent=27 // loop_header_branch
          %1133 = sbr.rel (%p1130) target = $region67
        $region64: #{tpu_custom_call.1} parent=27 // loop_body
          %v1134 = vld [vmem:[#allocation2] sm:$0xff]
          %v1135 = vld [vmem:[#allocation2 + $0x8] sm:$0xff]
          %s1136 = smul.u32 %s1129, 16
          %s1137 = scalar_lea.vmem %s195, %s1136
          %v1138 = vld [vmem:[%s1137] sm:$0xff]
          %v1139 = vld [vmem:[%s1137 + $0x8] sm:$0xff]
          %v1140 = vmax.f32 %v1134, %v1138
          %v1141 = vmax.f32 %v1135, %v1139
          %1142 = vst.msk [vmem:[#allocation2] sm:$0xff] %vm277, %v1140
          %1143 = vst.msk [vmem:[#allocation2 + $0x8] sm:$0xff] %vm277, %v1141
        $region65: #{tpu_custom_call.1} parent=27 // loop_footer
          %s1131 = sadd.s32 %s1129, 1
        $region66: #{tpu_custom_call.1} parent=27 // loop_footer_branch
          %1128 = sbr.rel target = $region62
        $region67: #{tpu_custom_call.1} parent=27 // loop_exit
          _
        %v1144 = vld [vmem:[#allocation2] sm:$0xff]
        %v1145 = vld [vmem:[#allocation2 + $0x8] sm:$0xff]
        %v1146 = vsel %vm323, %v1144, -inf
        %v1147 = vsel %vm324, %v1145, -inf
        %v1148 = vsel %vm277, %v1146, -inf
        %v1149 = vsel %vm277, %v1147, -inf
        %v1150 = vmax.f32 %v1148, %v1149
        %v1151 = vrot.slane %v1150, 4
        %v1152 = vmax.f32 %v1150, %v1151
        %v1153 = vrot.slane %v1152, 2
        %v1154 = vmax.f32 %v1152, %v1153
        %v1155 = vrot.slane %v1154, 1
        %v1156 = vmax.f32 %v1154, %v1155
        %p1157 = pnand %p1125, %p336
        %p1158 = pneg %p1157
        %s1159 = scalar_select %p1158, 1, 0
        %v1160 = vstv %s1159
        %vm1161 = vcmp.eq.s32.totalorder %v1160, 1
        %v1162 = vsel %vm1161, %v1156, 0.0
        %s1163 = scalar_lea.vmem %s204, 32
        %1164 = vst.msk [vmem:[%s1163] sm:$0x1] %vm343, %v1162
        %v1165 = vsel %vm370, %v1144, -inf
        %v1166 = vsel %vm371, %v1145, -inf
        %v1167 = vsel %vm277, %v1165, -inf
        %v1168 = vsel %vm277, %v1166, -inf
        %v1169 = vmax.f32 %v1167, %v1168
        %v1170 = vrot.slane %v1169, 4
        %v1171 = vmax.f32 %v1169, %v1170
        %v1172 = vrot.slane %v1171, 2
        %v1173 = vmax.f32 %v1171, %v1172
        %v1174 = vrot.slane %v1173, 1
        %v1175 = vmax.f32 %v1173, %v1174
        %p1176 = pnand %p1125, %p383
        %p1177 = pneg %p1176
        %s1178 = scalar_select %p1177, 1, 0
        %v1179 = vstv %s1178
        %vm1180 = vcmp.eq.s32.totalorder %v1179, 1
        %v1181 = vsel %vm1180, %v1175, 0.0
        %1182 = vst.msk [vmem:[%s1163 + $0x1] sm:$0x1] %vm343, %v1181
        %v1183 = vsel %vm416, %v1144, -inf
        %v1184 = vsel %vm417, %v1145, -inf
        %v1185 = vsel %vm277, %v1183, -inf
        %v1186 = vsel %vm277, %v1184, -inf
        %v1187 = vmax.f32 %v1185, %v1186
        %v1188 = vrot.slane %v1187, 4
        %v1189 = vmax.f32 %v1187, %v1188
        %v1190 = vrot.slane %v1189, 2
        %v1191 = vmax.f32 %v1189, %v1190
        %v1192 = vrot.slane %v1191, 1
        %v1193 = vmax.f32 %v1191, %v1192
        %p1194 = pnand %p1125, %p429
        %p1195 = pneg %p1194
        %s1196 = scalar_select %p1195, 1, 0
        %v1197 = vstv %s1196
        %vm1198 = vcmp.eq.s32.totalorder %v1197, 1
        %v1199 = vsel %vm1198, %v1193, 0.0
        %1200 = vst.msk [vmem:[%s1163 + $0x2] sm:$0x1] %vm343, %v1199
        %v1201 = vsel %vm462, %v1144, -inf
        %v1202 = vsel %vm463, %v1145, -inf
        %v1203 = vsel %vm277, %v1201, -inf
        %v1204 = vsel %vm277, %v1202, -inf
        %v1205 = vmax.f32 %v1203, %v1204
        %v1206 = vrot.slane %v1205, 4
        %v1207 = vmax.f32 %v1205, %v1206
        %v1208 = vrot.slane %v1207, 2
        %v1209 = vmax.f32 %v1207, %v1208
        %v1210 = vrot.slane %v1209, 1
        %v1211 = vmax.f32 %v1209, %v1210
        %p1212 = pnand %p1125, %p475
        %p1213 = pneg %p1212
        %s1214 = scalar_select %p1213, 1, 0
        %v1215 = vstv %s1214
        %vm1216 = vcmp.eq.s32.totalorder %v1215, 1
        %v1217 = vsel %vm1216, %v1211, 0.0
        %1218 = vst.msk [vmem:[%s1163 + $0x3] sm:$0x1] %vm343, %v1217
        %v1219 = vsel %vm508, %v1144, -inf
        %v1220 = vsel %vm509, %v1145, -inf
        %v1221 = vsel %vm277, %v1219, -inf
        %v1222 = vsel %vm277, %v1220, -inf
        %v1223 = vmax.f32 %v1221, %v1222
        %v1224 = vrot.slane %v1223, 4
        %v1225 = vmax.f32 %v1223, %v1224
        %v1226 = vrot.slane %v1225, 2
        %v1227 = vmax.f32 %v1225, %v1226
        %v1228 = vrot.slane %v1227, 1
        %v1229 = vmax.f32 %v1227, %v1228
        %p1230 = pnand %p1125, %p521
        %p1231 = pneg %p1230
        %s1232 = scalar_select %p1231, 1, 0
        %v1233 = vstv %s1232
        %vm1234 = vcmp.eq.s32.totalorder %v1233, 1
        %v1235 = vsel %vm1234, %v1229, 0.0
        %1236 = vst.msk [vmem:[%s1163 + $0x4] sm:$0x1] %vm343, %v1235
        %v1237 = vsel %vm554, %v1144, -inf
        %v1238 = vsel %vm555, %v1145, -inf
        %v1239 = vsel %vm277, %v1237, -inf
        %v1240 = vsel %vm277, %v1238, -inf
        %v1241 = vmax.f32 %v1239, %v1240
        %v1242 = vrot.slane %v1241, 4
        %v1243 = vmax.f32 %v1241, %v1242
        %v1244 = vrot.slane %v1243, 2
        %v1245 = vmax.f32 %v1243, %v1244
        %v1246 = vrot.slane %v1245, 1
        %v1247 = vmax.f32 %v1245, %v1246
        %p1248 = pnand %p1125, %p567
        %p1249 = pneg %p1248
        %s1250 = scalar_select %p1249, 1, 0
        %v1251 = vstv %s1250
        %vm1252 = vcmp.eq.s32.totalorder %v1251, 1
        %v1253 = vsel %vm1252, %v1247, 0.0
        %1254 = vst.msk [vmem:[%s1163 + $0x5] sm:$0x1] %vm343, %v1253
        %v1255 = vsel %vm600, %v1144, -inf
        %v1256 = vsel %vm601, %v1145, -inf
        %v1257 = vsel %vm277, %v1255, -inf
        %v1258 = vsel %vm277, %v1256, -inf
        %v1259 = vmax.f32 %v1257, %v1258
        %v1260 = vrot.slane %v1259, 4
        %v1261 = vmax.f32 %v1259, %v1260
        %v1262 = vrot.slane %v1261, 2
        %v1263 = vmax.f32 %v1261, %v1262
        %v1264 = vrot.slane %v1263, 1
        %v1265 = vmax.f32 %v1263, %v1264
        %p1266 = pnand %p1125, %p613
        %p1267 = pneg %p1266
        %s1268 = scalar_select %p1267, 1, 0
        %v1269 = vstv %s1268
        %vm1270 = vcmp.eq.s32.totalorder %v1269, 1
        %v1271 = vsel %vm1270, %v1265, 0.0
        %1272 = vst.msk [vmem:[%s1163 + $0x6] sm:$0x1] %vm343, %v1271
        %s1273 = sfloor.f32 %s1117
        %s1274 = scvt.f32.s32.to.zero.pseudo %s1273
        %s1275 = sadd.s32 %s1274, %s221
        %p1276 = scmp.gt.s32.totalorder %s1275, 0
        %s1277 = scalar_select %p1276, %s1275, 0
        %p1278 = scmp.lt.s32.totalorder %s1277, 16
        %s1279 = scalar_select %p1278, %s1277, 16
        %s1280 = smul.f32 %s247, 6.0
        %s1281 = sceil.f32 %s1280
        %s1282 = scvt.f32.s32.to.zero.pseudo %s1281
        %s1283 = sadd.s32 %s1282, %s221
        %p1284 = scmp.gt.s32.totalorder %s1283, 0
        %s1285 = scalar_select %p1284, %s1283, 0
        %p1286 = scmp.lt.s32.totalorder %s1285, 16
        %s1287 = scalar_select %p1286, %s1285, 16
        %p1288 = scmp.gt.s32.totalorder %s1287, %s1279
        %1289 = vst.msk [vmem:[#allocation2] sm:$0xff] %vm277, -inf
        %1290 = vst.msk [vmem:[#allocation2 + $0x8] sm:$0xff] %vm277, -inf
        // While loop
        $region68: #{tpu_custom_call.1} parent=27 // loop_pre_header
          _
        $region69: #{tpu_custom_call.1} parent=27 // loop_header
          %s1292 = sphi %s1279, %s1294
          %p1293 = scmp.ge.s32.totalorder %s1292, %s1287
        $region70: #{tpu_custom_call.1} parent=27 // loop_header_branch
          %1296 = sbr.rel (%p1293) target = $region74
        $region71: #{tpu_custom_call.1} parent=27 // loop_body
          %v1297 = vld [vmem:[#allocation2] sm:$0xff]
          %v1298 = vld [vmem:[#allocation2 + $0x8] sm:$0xff]
          %s1299 = smul.u32 %s1292, 16
          %s1300 = scalar_lea.vmem %s195, %s1299
          %v1301 = vld [vmem:[%s1300] sm:$0xff]
          %v1302 = vld [vmem:[%s1300 + $0x8] sm:$0xff]
          %v1303 = vmax.f32 %v1297, %v1301
          %v1304 = vmax.f32 %v1298, %v1302
          %1305 = vst.msk [vmem:[#allocation2] sm:$0xff] %vm277, %v1303
          %1306 = vst.msk [vmem:[#allocation2 + $0x8] sm:$0xff] %vm277, %v1304
        $region72: #{tpu_custom_call.1} parent=27 // loop_footer
          %s1294 = sadd.s32 %s1292, 1
        $region73: #{tpu_custom_call.1} parent=27 // loop_footer_branch
          %1291 = sbr.rel target = $region69
        $region74: #{tpu_custom_call.1} parent=27 // loop_exit
          _
        %v1307 = vld [vmem:[#allocation2] sm:$0xff]
        %v1308 = vld [vmem:[#allocation2 + $0x8] sm:$0xff]
        %v1309 = vsel %vm323, %v1307, -inf
        %v1310 = vsel %vm324, %v1308, -inf
        %v1311 = vsel %vm277, %v1309, -inf
        %v1312 = vsel %vm277, %v1310, -inf
        %v1313 = vmax.f32 %v1311, %v1312
        %v1314 = vrot.slane %v1313, 4
        %v1315 = vmax.f32 %v1313, %v1314
        %v1316 = vrot.slane %v1315, 2
        %v1317 = vmax.f32 %v1315, %v1316
        %v1318 = vrot.slane %v1317, 1
        %v1319 = vmax.f32 %v1317, %v1318
        %p1320 = pnand %p1288, %p336
        %p1321 = pneg %p1320
        %s1322 = scalar_select %p1321, 1, 0
        %v1323 = vstv %s1322
        %vm1324 = vcmp.eq.s32.totalorder %v1323, 1
        %v1325 = vsel %vm1324, %v1319, 0.0
        %s1326 = scalar_lea.vmem %s204, 40
        %1327 = vst.msk [vmem:[%s1326] sm:$0x1] %vm343, %v1325
        %v1328 = vsel %vm370, %v1307, -inf
        %v1329 = vsel %vm371, %v1308, -inf
        %v1330 = vsel %vm277, %v1328, -inf
        %v1331 = vsel %vm277, %v1329, -inf
        %v1332 = vmax.f32 %v1330, %v1331
        %v1333 = vrot.slane %v1332, 4
        %v1334 = vmax.f32 %v1332, %v1333
        %v1335 = vrot.slane %v1334, 2
        %v1336 = vmax.f32 %v1334, %v1335
        %v1337 = vrot.slane %v1336, 1
        %v1338 = vmax.f32 %v1336, %v1337
        %p1339 = pnand %p1288, %p383
        %p1340 = pneg %p1339
        %s1341 = scalar_select %p1340, 1, 0
        %v1342 = vstv %s1341
        %vm1343 = vcmp.eq.s32.totalorder %v1342, 1
        %v1344 = vsel %vm1343, %v1338, 0.0
        %1345 = vst.msk [vmem:[%s1326 + $0x1] sm:$0x1] %vm343, %v1344
        %v1346 = vsel %vm416, %v1307, -inf
        %v1347 = vsel %vm417, %v1308, -inf
        %v1348 = vsel %vm277, %v1346, -inf
        %v1349 = vsel %vm277, %v1347, -inf
        %v1350 = vmax.f32 %v1348, %v1349
        %v1351 = vrot.slane %v1350, 4
        %v1352 = vmax.f32 %v1350, %v1351
        %v1353 = vrot.slane %v1352, 2
        %v1354 = vmax.f32 %v1352, %v1353
        %v1355 = vrot.slane %v1354, 1
        %v1356 = vmax.f32 %v1354, %v1355
        %p1357 = pnand %p1288, %p429
        %p1358 = pneg %p1357
        %s1359 = scalar_select %p1358, 1, 0
        %v1360 = vstv %s1359
        %vm1361 = vcmp.eq.s32.totalorder %v1360, 1
        %v1362 = vsel %vm1361, %v1356, 0.0
        %1363 = vst.msk [vmem:[%s1326 + $0x2] sm:$0x1] %vm343, %v1362
        %v1364 = vsel %vm462, %v1307, -inf
        %v1365 = vsel %vm463, %v1308, -inf
        %v1366 = vsel %vm277, %v1364, -inf
        %v1367 = vsel %vm277, %v1365, -inf
        %v1368 = vmax.f32 %v1366, %v1367
        %v1369 = vrot.slane %v1368, 4
        %v1370 = vmax.f32 %v1368, %v1369
        %v1371 = vrot.slane %v1370, 2
        %v1372 = vmax.f32 %v1370, %v1371
        %v1373 = vrot.slane %v1372, 1
        %v1374 = vmax.f32 %v1372, %v1373
        %p1375 = pnand %p1288, %p475
        %p1376 = pneg %p1375
        %s1377 = scalar_select %p1376, 1, 0
        %v1378 = vstv %s1377
        %vm1379 = vcmp.eq.s32.totalorder %v1378, 1
        %v1380 = vsel %vm1379, %v1374, 0.0
        %1381 = vst.msk [vmem:[%s1326 + $0x3] sm:$0x1] %vm343, %v1380
        %v1382 = vsel %vm508, %v1307, -inf
        %v1383 = vsel %vm509, %v1308, -inf
        %v1384 = vsel %vm277, %v1382, -inf
        %v1385 = vsel %vm277, %v1383, -inf
        %v1386 = vmax.f32 %v1384, %v1385
        %v1387 = vrot.slane %v1386, 4
        %v1388 = vmax.f32 %v1386, %v1387
        %v1389 = vrot.slane %v1388, 2
        %v1390 = vmax.f32 %v1388, %v1389
        %v1391 = vrot.slane %v1390, 1
        %v1392 = vmax.f32 %v1390, %v1391
        %p1393 = pnand %p1288, %p521
        %p1394 = pneg %p1393
        %s1395 = scalar_select %p1394, 1, 0
        %v1396 = vstv %s1395
        %vm1397 = vcmp.eq.s32.totalorder %v1396, 1
        %v1398 = vsel %vm1397, %v1392, 0.0
        %1399 = vst.msk [vmem:[%s1326 + $0x4] sm:$0x1] %vm343, %v1398
        %v1400 = vsel %vm554, %v1307, -inf
        %v1401 = vsel %vm555, %v1308, -inf
        %v1402 = vsel %vm277, %v1400, -inf
        %v1403 = vsel %vm277, %v1401, -inf
        %v1404 = vmax.f32 %v1402, %v1403
        %v1405 = vrot.slane %v1404, 4
        %v1406 = vmax.f32 %v1404, %v1405
        %v1407 = vrot.slane %v1406, 2
        %v1408 = vmax.f32 %v1406, %v1407
        %v1409 = vrot.slane %v1408, 1
        %v1410 = vmax.f32 %v1408, %v1409
        %p1411 = pnand %p1288, %p567
        %p1412 = pneg %p1411
        %s1413 = scalar_select %p1412, 1, 0
        %v1414 = vstv %s1413
        %vm1415 = vcmp.eq.s32.totalorder %v1414, 1
        %v1416 = vsel %vm1415, %v1410, 0.0
        %1417 = vst.msk [vmem:[%s1326 + $0x5] sm:$0x1] %vm343, %v1416
        %v1418 = vsel %vm600, %v1307, -inf
        %v1419 = vsel %vm601, %v1308, -inf
        %v1420 = vsel %vm277, %v1418, -inf
        %v1421 = vsel %vm277, %v1419, -inf
        %v1422 = vmax.f32 %v1420, %v1421
        %v1423 = vrot.slane %v1422, 4
        %v1424 = vmax.f32 %v1422, %v1423
        %v1425 = vrot.slane %v1424, 2
        %v1426 = vmax.f32 %v1424, %v1425
        %v1427 = vrot.slane %v1426, 1
        %v1428 = vmax.f32 %v1426, %v1427
        %p1429 = pnand %p1288, %p613
        %p1430 = pneg %p1429
        %s1431 = scalar_select %p1430, 1, 0
        %v1432 = vstv %s1431
        %vm1433 = vcmp.eq.s32.totalorder %v1432, 1
        %v1434 = vsel %vm1433, %v1428, 0.0
        %1435 = vst.msk [vmem:[%s1326 + $0x6] sm:$0x1] %vm343, %v1434
        %s1436 = sfloor.f32 %s1280
        %s1437 = scvt.f32.s32.to.zero.pseudo %s1436
        %s1438 = sadd.s32 %s1437, %s221
        %p1439 = scmp.gt.s32.totalorder %s1438, 0
        %s1440 = scalar_select %p1439, %s1438, 0
        %p1441 = scmp.lt.s32.totalorder %s1440, 16
        %s1442 = scalar_select %p1441, %s1440, 16
        %s1443 = smul.f32 %s247, 7.0
        %s1444 = sceil.f32 %s1443
        %s1445 = scvt.f32.s32.to.zero.pseudo %s1444
        %s1446 = sadd.s32 %s1445, %s221
        %p1447 = scmp.gt.s32.totalorder %s1446, 0
        %s1448 = scalar_select %p1447, %s1446, 0
        %p1449 = scmp.lt.s32.totalorder %s1448, 16
        %s1450 = scalar_select %p1449, %s1448, 16
        %p1451 = scmp.gt.s32.totalorder %s1450, %s1442
        %1452 = vst.msk [vmem:[#allocation2] sm:$0xff] %vm277, -inf
        %1453 = vst.msk [vmem:[#allocation2 + $0x8] sm:$0xff] %vm277, -inf
        // While loop
        $region75: #{tpu_custom_call.1} parent=27 // loop_pre_header
          _
        $region76: #{tpu_custom_call.1} parent=27 // loop_header
          %s1455 = sphi %s1442, %s1457
          %p1456 = scmp.ge.s32.totalorder %s1455, %s1450
        $region77: #{tpu_custom_call.1} parent=27 // loop_header_branch
          %1459 = sbr.rel (%p1456) target = $region81
        $region78: #{tpu_custom_call.1} parent=27 // loop_body
          %v1460 = vld [vmem:[#allocation2] sm:$0xff]
          %v1461 = vld [vmem:[#allocation2 + $0x8] sm:$0xff]
          %s1462 = smul.u32 %s1455, 16
          %s1463 = scalar_lea.vmem %s195, %s1462
          %v1464 = vld [vmem:[%s1463] sm:$0xff]
          %v1465 = vld [vmem:[%s1463 + $0x8] sm:$0xff]
          %v1466 = vmax.f32 %v1460, %v1464
          %v1467 = vmax.f32 %v1461, %v1465
          %1468 = vst.msk [vmem:[#allocation2] sm:$0xff] %vm277, %v1466
          %1469 = vst.msk [vmem:[#allocation2 + $0x8] sm:$0xff] %vm277, %v1467
        $region79: #{tpu_custom_call.1} parent=27 // loop_footer
          %s1457 = sadd.s32 %s1455, 1
        $region80: #{tpu_custom_call.1} parent=27 // loop_footer_branch
          %1454 = sbr.rel target = $region76
        $region81: #{tpu_custom_call.1} parent=27 // loop_exit
          _
        %v1470 = vld [vmem:[#allocation2] sm:$0xff]
        %v1471 = vld [vmem:[#allocation2 + $0x8] sm:$0xff]
        %v1472 = vsel %vm323, %v1470, -inf
        %v1473 = vsel %vm324, %v1471, -inf
        %v1474 = vsel %vm277, %v1472, -inf
        %v1475 = vsel %vm277, %v1473, -inf
        %v1476 = vmax.f32 %v1474, %v1475
        %v1477 = vrot.slane %v1476, 4
        %v1478 = vmax.f32 %v1476, %v1477
        %v1479 = vrot.slane %v1478, 2
        %v1480 = vmax.f32 %v1478, %v1479
        %v1481 = vrot.slane %v1480, 1
        %v1482 = vmax.f32 %v1480, %v1481
        %p1483 = pnand %p1451, %p336
        %p1484 = pneg %p1483
        %s1485 = scalar_select %p1484, 1, 0
        %v1486 = vstv %s1485
        %vm1487 = vcmp.eq.s32.totalorder %v1486, 1
        %v1488 = vsel %vm1487, %v1482, 0.0
        %s1489 = scalar_lea.vmem %s204, 48
        %1490 = vst.msk [vmem:[%s1489] sm:$0x1] %vm343, %v1488
        %v1491 = vsel %vm370, %v1470, -inf
        %v1492 = vsel %vm371, %v1471, -inf
        %v1493 = vsel %vm277, %v1491, -inf
        %v1494 = vsel %vm277, %v1492, -inf
        %v1495 = vmax.f32 %v1493, %v1494
        %v1496 = vrot.slane %v1495, 4
        %v1497 = vmax.f32 %v1495, %v1496
        %v1498 = vrot.slane %v1497, 2
        %v1499 = vmax.f32 %v1497, %v1498
        %v1500 = vrot.slane %v1499, 1
        %v1501 = vmax.f32 %v1499, %v1500
        %p1502 = pnand %p1451, %p383
        %p1503 = pneg %p1502
        %s1504 = scalar_select %p1503, 1, 0
        %v1505 = vstv %s1504
        %vm1506 = vcmp.eq.s32.totalorder %v1505, 1
        %v1507 = vsel %vm1506, %v1501, 0.0
        %1508 = vst.msk [vmem:[%s1489 + $0x1] sm:$0x1] %vm343, %v1507
        %v1509 = vsel %vm416, %v1470, -inf
        %v1510 = vsel %vm417, %v1471, -inf
        %v1511 = vsel %vm277, %v1509, -inf
        %v1512 = vsel %vm277, %v1510, -inf
        %v1513 = vmax.f32 %v1511, %v1512
        %v1514 = vrot.slane %v1513, 4
        %v1515 = vmax.f32 %v1513, %v1514
        %v1516 = vrot.slane %v1515, 2
        %v1517 = vmax.f32 %v1515, %v1516
        %v1518 = vrot.slane %v1517, 1
        %v1519 = vmax.f32 %v1517, %v1518
        %p1520 = pnand %p1451, %p429
        %p1521 = pneg %p1520
        %s1522 = scalar_select %p1521, 1, 0
        %v1523 = vstv %s1522
        %vm1524 = vcmp.eq.s32.totalorder %v1523, 1
        %v1525 = vsel %vm1524, %v1519, 0.0
        %1526 = vst.msk [vmem:[%s1489 + $0x2] sm:$0x1] %vm343, %v1525
        %v1527 = vsel %vm462, %v1470, -inf
        %v1528 = vsel %vm463, %v1471, -inf
        %v1529 = vsel %vm277, %v1527, -inf
        %v1530 = vsel %vm277, %v1528, -inf
        %v1531 = vmax.f32 %v1529, %v1530
        %v1532 = vrot.slane %v1531, 4
        %v1533 = vmax.f32 %v1531, %v1532
        %v1534 = vrot.slane %v1533, 2
        %v1535 = vmax.f32 %v1533, %v1534
        %v1536 = vrot.slane %v1535, 1
        %v1537 = vmax.f32 %v1535, %v1536
        %p1538 = pnand %p1451, %p475
        %p1539 = pneg %p1538
        %s1540 = scalar_select %p1539, 1, 0
        %v1541 = vstv %s1540
        %vm1542 = vcmp.eq.s32.totalorder %v1541, 1
        %v1543 = vsel %vm1542, %v1537, 0.0
        %1544 = vst.msk [vmem:[%s1489 + $0x3] sm:$0x1] %vm343, %v1543
        %v1545 = vsel %vm508, %v1470, -inf
        %v1546 = vsel %vm509, %v1471, -inf
        %v1547 = vsel %vm277, %v1545, -inf
        %v1548 = vsel %vm277, %v1546, -inf
        %v1549 = vmax.f32 %v1547, %v1548
        %v1550 = vrot.slane %v1549, 4
        %v1551 = vmax.f32 %v1549, %v1550
        %v1552 = vrot.slane %v1551, 2
        %v1553 = vmax.f32 %v1551, %v1552
        %v1554 = vrot.slane %v1553, 1
        %v1555 = vmax.f32 %v1553, %v1554
        %p1556 = pnand %p1451, %p521
        %p1557 = pneg %p1556
        %s1558 = scalar_select %p1557, 1, 0
        %v1559 = vstv %s1558
        %vm1560 = vcmp.eq.s32.totalorder %v1559, 1
        %v1561 = vsel %vm1560, %v1555, 0.0
        %1562 = vst.msk [vmem:[%s1489 + $0x4] sm:$0x1] %vm343, %v1561
        %v1563 = vsel %vm554, %v1470, -inf
        %v1564 = vsel %vm555, %v1471, -inf
        %v1565 = vsel %vm277, %v1563, -inf
        %v1566 = vsel %vm277, %v1564, -inf
        %v1567 = vmax.f32 %v1565, %v1566
        %v1568 = vrot.slane %v1567, 4
        %v1569 = vmax.f32 %v1567, %v1568
        %v1570 = vrot.slane %v1569, 2
        %v1571 = vmax.f32 %v1569, %v1570
        %v1572 = vrot.slane %v1571, 1
        %v1573 = vmax.f32 %v1571, %v1572
        %p1574 = pnand %p1451, %p567
        %p1575 = pneg %p1574
        %s1576 = scalar_select %p1575, 1, 0
        %v1577 = vstv %s1576
        %vm1578 = vcmp.eq.s32.totalorder %v1577, 1
        %v1579 = vsel %vm1578, %v1573, 0.0
        %1580 = vst.msk [vmem:[%s1489 + $0x5] sm:$0x1] %vm343, %v1579
        %v1581 = vsel %vm600, %v1470, -inf
        %v1582 = vsel %vm601, %v1471, -inf
        %v1583 = vsel %vm277, %v1581, -inf
        %v1584 = vsel %vm277, %v1582, -inf
        %v1585 = vmax.f32 %v1583, %v1584
        %v1586 = vrot.slane %v1585, 4
        %v1587 = vmax.f32 %v1585, %v1586
        %v1588 = vrot.slane %v1587, 2
        %v1589 = vmax.f32 %v1587, %v1588
        %v1590 = vrot.slane %v1589, 1
        %v1591 = vmax.f32 %v1589, %v1590
        %p1592 = pnand %p1451, %p613
        %p1593 = pneg %p1592
        %s1594 = scalar_select %p1593, 1, 0
        %v1595 = vstv %s1594
        %vm1596 = vcmp.eq.s32.totalorder %v1595, 1
        %v1597 = vsel %vm1596, %v1591, 0.0
        %1598 = vst.msk [vmem:[%s1489 + $0x6] sm:$0x1] %vm343, %v1597
        %p1599 = scmp.lt.s32.totalorder %s28, 2
        %s1600 = scalar_select %p1599, %s28, 2
        %p1601 = scmp.lt.s32.totalorder %s27, 0
        %s1602 = scalar_select %p1601, %s27, 0
        %s1603 = smul.addr %s1600, 7
        %s1604 = sadd.s32 %s1602, %s1603
        %s1605 = smul.addr %s1604, 8
        %s1606 = scalar_lea.vmem %s3, %s1605
        // Predicated region
        $region82: #{tpu_custom_call.1} parent=27 // pred_check
          %p1607 = pneg %p106
        $region83: #{tpu_custom_call.1} parent=27 // pred_check_branch
          %1609 = sbr.rel (%p1607) target = $region85
        $region84: #{tpu_custom_call.1} parent=27 // pred_region
          _
        $region85: #{tpu_custom_call.1} parent=27 // pred_fallthru
          _
      $region28: #{tpu_custom_call.1} parent=5 // pred_fallthru
        _
      %p1610 = scmp.le.s32.totalorder 2, %s18
      // Predicated region
      $region86: #{tpu_custom_call.1} parent=5 // pred_check
        %p1611 = pneg %p1610
      $region87: #{tpu_custom_call.1} parent=5 // pred_check_branch
        %1613 = sbr.rel (%p1611) target = $region89
      $region88: #{tpu_custom_call.1} parent=5 // pred_region
        %s1614 = ssub.s32 %s18, 2
        // Predicated region
        $region90: #{tpu_custom_call.1} parent=88 // pred_check
          %p1615 = pneg %p112
        $region91: #{tpu_custom_call.1} parent=88 // pred_check_branch
          %1617 = sbr.rel (%p1615) target = $region93
        $region92: #{tpu_custom_call.1} parent=88 // pred_region
          %p1618 = scmp.lt.s32.totalorder %s30, 2
          %s1619 = scalar_select %p1618, %s30, 2
          %p1620 = scmp.lt.s32.totalorder %s29, 0
          %s1621 = scalar_select %p1620, %s29, 0
          %s1622 = smul.addr %s1619, 7
          %s1623 = sadd.s32 %s1621, %s1622
          %s1624 = smul.addr %s1623, 8
          %s1625 = scalar_lea.vmem %s3, %s1624
        $region93: #{tpu_custom_call.1} parent=88 // pred_fallthru
          _
      $region89: #{tpu_custom_call.1} parent=5 // pred_fallthru
        _
    $region6: #{tpu_custom_call.1} parent=1 // loop_footer
      %s22 = sadd.s32 1, %s18
    $region7: #{tpu_custom_call.1} parent=1 // loop_footer_branch
      %17 = sbr.rel target = $region3
    $region8: #{tpu_custom_call.1} parent=1 // loop_exit
      _
    %1626 = vsyncpa [#allocation6], 1
    %s1627 = scalar_lea.sflag [#allocation6], 1
    %1628 = vsyncpa %s1627, 1

</llo_original>
